<compile_context>
chip_gen: v5e
topology: v5e:2x2
jax: 0.10.0
libtpu: 0.0.40
codegen_flags: <defaults>
</compile_context>

<pallas_src>
import jax
import jax.numpy as jnp
from jax.experimental import pallas as pl
from jax.experimental.pallas import tpu as pltpu

NDF = 18
NUM_CLASSES = 2
LRELU_SLOPE = 0.01
BN_EPS = 1e-5
KSIZE, STRIDE, PAD = 4, 2, 2

_VMEM_SPEC = pl.BlockSpec(memory_space=pltpu.MemorySpace.VMEM)


# ---------------------------------------------------------------------------
# Fused Pallas kernel: whole network, one launch
# ---------------------------------------------------------------------------
def _upps_fused_kernel(x_ref,
                       r1_ref, t1_ref, p1_ref, p1t_ref, g1_ref, b1_ref,
                       r2_ref, t2_ref, p2_ref, p2t_ref, g2_ref, b2_ref,
                       r3_ref, t3_ref, wfc_ref, bfc_ref,
                       o_ref):
    f32 = jnp.float32
    n_batch = x_ref.shape[0]
    n_taps = r1_ref.shape[0]          # 4 kernel rows
    n_ow3 = t3_ref.shape[1]           # conv3 output width (column blocks)

    def conv(x, r_list, t_list):
        # sum_i (R_i @ X) @ T_i  ->  (OH, OW*Cout), channel-minor lanes.
        acc = None
        for r, t in zip(r_list, t_list):
            rows = jnp.dot(r, x, preferred_element_type=f32)
            part = jnp.dot(rows, t, preferred_element_type=f32)
            acc = part if acc is None else acc + part
        return acc

    def bn_lrelu(ys, pool, pool_t, gamma, beta):
        # One-pass training-mode BatchNorm over the true N*OH*OW count + leaky_relu.
        c = pool.shape[1]
        inv = 1.0 / float(len(ys) * ys[0].shape[0] * (ys[0].shape[1] // c))
        s = None
        sq = None
        for y in ys:
            cs = jnp.dot(jnp.sum(y, axis=0, keepdims=True), pool,
                         preferred_element_type=f32)
            cq = jnp.dot(jnp.sum(y * y, axis=0, keepdims=True), pool,
                         preferred_element_type=f32)
            s = cs if s is None else s + cs
            sq = cq if sq is None else sq + cq
        mean = s * inv
        var = sq * inv - mean * mean                       # biased var (PyTorch train BN)
        scale = gamma * jax.lax.rsqrt(var + BN_EPS)        # (1, C)
        shift = beta - mean * scale
        scale_f = jnp.dot(scale, pool_t, preferred_element_type=f32)   # (1, OW*C)
        shift_f = jnp.dot(shift, pool_t, preferred_element_type=f32)
        outs = []
        for y in ys:
            z = y * scale_f + shift_f
            outs.append(jnp.where(z > 0, z, LRELU_SLOPE * z))
        return outs

    # Load all (tiny) folded weights into values once.
    r1 = [r1_ref[i] for i in range(n_taps)]
    t1 = [t1_ref[i] for i in range(n_taps)]
    r2 = [r2_ref[i] for i in range(n_taps)]
    t2 = [t2_ref[i] for i in range(n_taps)]
    r3 = [r3_ref[i] for i in range(n_taps)]
    t3 = [[t3_ref[i, w] for w in range(n_ow3)] for i in range(n_taps)]
    p1, p1t, g1, b1 = p1_ref[...], p1t_ref[...], g1_ref[...], b1_ref[...]
    p2, p2t, g2, b2 = p2_ref[...], p2t_ref[...], g2_ref[...], b2_ref[...]
    wfc, bfc = wfc_ref[...], bfc_ref[...]

    # conv1 -> BN1 -> lrelu   (activations stay on-chip as values)
    a1 = bn_lrelu([conv(x_ref[n], r1, t1) for n in range(n_batch)], p1, p1t, g1, b1)
    # conv2 -> BN2 -> lrelu
    a2 = bn_lrelu([conv(a, r2, t2) for a in a1], p2, p2t, g2, b2)

    # conv3 -> global maxpool -> fc, written to a lane-dense (8, 128) output slab.
    o_ref[...] = jnp.zeros(o_ref.shape, o_ref.dtype)
    for n in range(n_batch):
        rows = [jnp.dot(r, a2[n], preferred_element_type=f32) for r in r3]
        mx = None
        for w in range(n_ow3):                             # conv3 output-column blocks
            blk = None
            for i in range(n_taps):
                part = jnp.dot(rows[i], t3[i][w], preferred_element_type=f32)  # (OH3, ndf)
                blk = part if blk is None else blk + part
            mx = blk if mx is None else jnp.maximum(mx, blk)   # max over ow
        pooled = jnp.max(mx, axis=0, keepdims=True)            # max over oh -> (1, ndf)
        o_ref[pl.ds(n, 1), :] = jnp.dot(pooled, wfc,
                                        preferred_element_type=f32) + bfc


# ---------------------------------------------------------------------------
# One-time weight preparation (hoisted out of the forward pass)
# ---------------------------------------------------------------------------
def _conv_out(size):
    return (size + 2 * PAD - KSIZE) // STRIDE + 1


def prepare_upps_params(params, spatial):
    """Fold each conv's stride/padding into per-kernel-row selection (R) and
    Toeplitz (T) matrices, build the BN lane-broadcast matrices and the
    128-lane-padded FC weights. Call once; reuse for every forward call."""
    f32 = jnp.float32
    h1 = spatial
    h2 = _conv_out(h1)
    h3 = _conv_out(h2)
    h4 = _conv_out(h3)

    def row_select(h_in, h_out):
        y = jnp.arange(h_in)[None, :]
        oh = jnp.arange(h_out)[:, None]
        return jnp.stack([(y == STRIDE * oh + i - PAD).astype(f32)
                          for i in range(KSIZE)])                       # (4, h_out, h_in)

    def toeplitz(w, w_in, w_out):
        # w: (Cout, Cin, kh, kw) -> (kh, w_in*Cin, w_out*Cout); slice i handles kernel row i.
        x = jnp.arange(w_in)[:, None]
        ow = jnp.arange(w_out)[None, :]
        mats = []
        for i in range(KSIZE):
            t = None
            for j in range(KSIZE):
                sel = (x == STRIDE * ow + j - PAD).astype(f32)          # (w_in, w_out)
                term = jnp.kron(sel, w[:, :, i, j].T.astype(f32))       # (w_in*Cin, w_out*Cout)
                t = term if t is None else t + term
            mats.append(t)
        return jnp.stack(mats)

    def pool_mats(w_out, c):
        p = jnp.kron(jnp.ones((w_out, 1), f32), jnp.eye(c, dtype=f32))  # (w_out*c, c)
        return p, p.T

    c1, c2, c3 = params["w1"].shape[0], params["w2"].shape[0], params["w3"].shape[0]

    t3_full = toeplitz(params["w3"], h3, h4)                            # (4, h3*c2, h4*c3)
    t3 = t3_full.reshape(KSIZE, h3 * c2, h4, c3).transpose(0, 2, 1, 3)  # (4, h4, h3*c2, c3)

    p1, p1t = pool_mats(h2, c1)
    p2, p2t = pool_mats(h3, c2)

    n_out = params["w_fc"].shape[0]
    wfc = jnp.zeros((c3, 128), f32).at[:, :n_out].set(params["w_fc"].T.astype(f32))
    bfc = jnp.zeros((1, 128), f32).at[0, :n_out].set(params["b_fc"].astype(f32))

    return dict(
        r1=row_select(h1, h2), t1=toeplitz(params["w1"], h1, h2),
        p1=p1, p1t=p1t, g1=params["g1"].astype(f32), b1=params["b1"].astype(f32),
        r2=row_select(h2, h3), t2=toeplitz(params["w2"], h2, h3),
        p2=p2, p2t=p2t, g2=params["g2"].astype(f32), b2=params["b2"].astype(f32),
        r3=row_select(h3, h4), t3=t3,
        wfc=wfc, bfc=bfc,
    )


# ---------------------------------------------------------------------------
# Forward pass: one fused kernel launch
# ---------------------------------------------------------------------------
@jax.jit
def upps_net_forward(x_nchw, prep):
    n, c, h, w = x_nchw.shape
    # NCHW -> (N, H, W*C), channel-minor lanes (matches the Toeplitz layout).
    x = jnp.transpose(x_nchw, (0, 2, 3, 1)).astype(jnp.float32).reshape(n, h, w * c)

    n_pad = max(8, -(-n // 8) * 8)               # sublane-aligned output rows
    out_pad = pl.pallas_call(
        _upps_fused_kernel,
        out_shape=jax.ShapeDtypeStruct((n_pad, 128), jnp.float32),   # lane-dense slab
        in_specs=[_VMEM_SPEC] * 17,
        out_specs=_VMEM_SPEC,
    )(x,
      prep["r1"], prep["t1"], prep["p1"], prep["p1t"], prep["g1"], prep["b1"],
      prep["r2"], prep["t2"], prep["p2"], prep["p2t"], prep["g2"], prep["b2"],
      prep["r3"], prep["t3"], prep["wfc"], prep["bfc"])
    return out_pad[:n, :NUM_CLASSES]


# ---------------------------------------------------------------------------
# Main
# ---------------------------------------------------------------------------
if __name__ == "__main__":
    input_nc = 4
    batch, spatial = 2, 16

    key = jax.random.PRNGKey(0)
    k_x, k1, k2, k3, k4, k5 = jax.random.split(key, 6)

    x = jax.random.normal(k_x, (batch, input_nc, spatial, spatial), dtype=jnp.float32)

    params = {
        # conv weights: (Cout, Cin, 4, 4), bias=False (matches nn.Conv2d(..., bias=False))
        "w1": 0.1 * jax.random.normal(k1, (NDF, input_nc, 4, 4), dtype=jnp.float32),
        "w2": 0.1 * jax.random.normal(k2, (NDF * 2, NDF, 4, 4), dtype=jnp.float32),
        "w3": 0.1 * jax.random.normal(k3, (NDF, NDF * 2, 4, 4), dtype=jnp.float32),
        # BatchNorm affine params (PyTorch default init: weight=1, bias=0), shaped (1, C)
        "g1": jnp.ones((1, NDF), dtype=jnp.float32),
        "b1": jnp.zeros((1, NDF), dtype=jnp.float32),
        "g2": jnp.ones((1, NDF * 2), dtype=jnp.float32),
        "b2": jnp.zeros((1, NDF * 2), dtype=jnp.float32),
        # fc1: Linear(ndf, 2)
        "w_fc": 0.1 * jax.random.normal(k4, (NUM_CLASSES, NDF), dtype=jnp.float32),
        "b_fc": 0.1 * jax.random.normal(k5, (NUM_CLASSES,), dtype=jnp.float32),
    }

    prep = prepare_upps_params(params, spatial)          # one-time weight prep
    out = upps_net_forward(x, prep)
    out = jax.block_until_ready(out)
    assert out.shape == (batch, NUM_CLASSES) and out.dtype == jnp.float32
    print("KERNEL_OK")
</pallas_src>

<mosaic_0001>
module attributes {stable_mosaic.version = 11 : i64} {
  func.func @_upps_fused_kernel(%arg0: memref<2x16x64xf32, #tpu.memory_space<vmem>>, %arg1: memref<4x9x16xf32, #tpu.memory_space<vmem>>, %arg2: memref<4x64x162xf32, #tpu.memory_space<vmem>>, %arg3: memref<162x18xf32, #tpu.memory_space<vmem>>, %arg4: memref<18x162xf32, #tpu.memory_space<vmem>>, %arg5: memref<1x18xf32, #tpu.memory_space<vmem>>, %arg6: memref<1x18xf32, #tpu.memory_space<vmem>>, %arg7: memref<4x5x9xf32, #tpu.memory_space<vmem>>, %arg8: memref<4x162x180xf32, #tpu.memory_space<vmem>>, %arg9: memref<180x36xf32, #tpu.memory_space<vmem>>, %arg10: memref<36x180xf32, #tpu.memory_space<vmem>>, %arg11: memref<1x36xf32, #tpu.memory_space<vmem>>, %arg12: memref<1x36xf32, #tpu.memory_space<vmem>>, %arg13: memref<4x3x5xf32, #tpu.memory_space<vmem>>, %arg14: memref<4x3x180x18xf32, #tpu.memory_space<vmem>>, %arg15: memref<18x128xf32, #tpu.memory_space<vmem>>, %arg16: memref<1x128xf32, #tpu.memory_space<vmem>>, %arg17: memref<8x128xf32, #tpu.memory_space<vmem>>) attributes {dimension_semantics = [], scalar_prefetch = 0 : i64, scratch_operands = 0 : i64, tpu.core_type = #tpu.core_type<tc>} {
    %c0 = arith.constant 0 : index
    %c0_0 = arith.constant 0 : index
    %c0_1 = arith.constant 0 : index
    %0 = vector.load %arg1[%c0, %c0_0, %c0_1] : memref<4x9x16xf32, #tpu.memory_space<vmem>>, vector<1x9x16xf32>
    %1 = vector.shape_cast %0 : vector<1x9x16xf32> to vector<9x16xf32>
    %c1 = arith.constant 1 : index
    %c0_2 = arith.constant 0 : index
    %c0_3 = arith.constant 0 : index
    %2 = vector.load %arg1[%c1, %c0_2, %c0_3] : memref<4x9x16xf32, #tpu.memory_space<vmem>>, vector<1x9x16xf32>
    %3 = vector.shape_cast %2 : vector<1x9x16xf32> to vector<9x16xf32>
    %c2 = arith.constant 2 : index
    %c0_4 = arith.constant 0 : index
    %c0_5 = arith.constant 0 : index
    %4 = vector.load %arg1[%c2, %c0_4, %c0_5] : memref<4x9x16xf32, #tpu.memory_space<vmem>>, vector<1x9x16xf32>
    %5 = vector.shape_cast %4 : vector<1x9x16xf32> to vector<9x16xf32>
    %c3 = arith.constant 3 : index
    %c0_6 = arith.constant 0 : index
    %c0_7 = arith.constant 0 : index
    %6 = vector.load %arg1[%c3, %c0_6, %c0_7] : memref<4x9x16xf32, #tpu.memory_space<vmem>>, vector<1x9x16xf32>
    %7 = vector.shape_cast %6 : vector<1x9x16xf32> to vector<9x16xf32>
    %c0_8 = arith.constant 0 : index
    %c0_9 = arith.constant 0 : index
    %c0_10 = arith.constant 0 : index
    %8 = vector.load %arg2[%c0_8, %c0_9, %c0_10] : memref<4x64x162xf32, #tpu.memory_space<vmem>>, vector<1x64x162xf32>
    %9 = vector.shape_cast %8 : vector<1x64x162xf32> to vector<64x162xf32>
    %c1_11 = arith.constant 1 : index
    %c0_12 = arith.constant 0 : index
    %c0_13 = arith.constant 0 : index
    %10 = vector.load %arg2[%c1_11, %c0_12, %c0_13] : memref<4x64x162xf32, #tpu.memory_space<vmem>>, vector<1x64x162xf32>
    %11 = vector.shape_cast %10 : vector<1x64x162xf32> to vector<64x162xf32>
    %c2_14 = arith.constant 2 : index
    %c0_15 = arith.constant 0 : index
    %c0_16 = arith.constant 0 : index
    %12 = vector.load %arg2[%c2_14, %c0_15, %c0_16] : memref<4x64x162xf32, #tpu.memory_space<vmem>>, vector<1x64x162xf32>
    %13 = vector.shape_cast %12 : vector<1x64x162xf32> to vector<64x162xf32>
    %c3_17 = arith.constant 3 : index
    %c0_18 = arith.constant 0 : index
    %c0_19 = arith.constant 0 : index
    %14 = vector.load %arg2[%c3_17, %c0_18, %c0_19] : memref<4x64x162xf32, #tpu.memory_space<vmem>>, vector<1x64x162xf32>
    %15 = vector.shape_cast %14 : vector<1x64x162xf32> to vector<64x162xf32>
    %c0_20 = arith.constant 0 : index
    %c0_21 = arith.constant 0 : index
    %c0_22 = arith.constant 0 : index
    %16 = vector.load %arg7[%c0_20, %c0_21, %c0_22] : memref<4x5x9xf32, #tpu.memory_space<vmem>>, vector<1x5x9xf32>
    %17 = vector.shape_cast %16 : vector<1x5x9xf32> to vector<5x9xf32>
    %c1_23 = arith.constant 1 : index
    %c0_24 = arith.constant 0 : index
    %c0_25 = arith.constant 0 : index
    %18 = vector.load %arg7[%c1_23, %c0_24, %c0_25] : memref<4x5x9xf32, #tpu.memory_space<vmem>>, vector<1x5x9xf32>
    %19 = vector.shape_cast %18 : vector<1x5x9xf32> to vector<5x9xf32>
    %c2_26 = arith.constant 2 : index
    %c0_27 = arith.constant 0 : index
    %c0_28 = arith.constant 0 : index
    %20 = vector.load %arg7[%c2_26, %c0_27, %c0_28] : memref<4x5x9xf32, #tpu.memory_space<vmem>>, vector<1x5x9xf32>
    %21 = vector.shape_cast %20 : vector<1x5x9xf32> to vector<5x9xf32>
    %c3_29 = arith.constant 3 : index
    %c0_30 = arith.constant 0 : index
    %c0_31 = arith.constant 0 : index
    %22 = vector.load %arg7[%c3_29, %c0_30, %c0_31] : memref<4x5x9xf32, #tpu.memory_space<vmem>>, vector<1x5x9xf32>
    %23 = vector.shape_cast %22 : vector<1x5x9xf32> to vector<5x9xf32>
    %c0_32 = arith.constant 0 : index
    %c0_33 = arith.constant 0 : index
    %c0_34 = arith.constant 0 : index
    %24 = vector.load %arg8[%c0_32, %c0_33, %c0_34] : memref<4x162x180xf32, #tpu.memory_space<vmem>>, vector<1x162x180xf32>
    %25 = vector.shape_cast %24 : vector<1x162x180xf32> to vector<162x180xf32>
    %c1_35 = arith.constant 1 : index
    %c0_36 = arith.constant 0 : index
    %c0_37 = arith.constant 0 : index
    %26 = vector.load %arg8[%c1_35, %c0_36, %c0_37] : memref<4x162x180xf32, #tpu.memory_space<vmem>>, vector<1x162x180xf32>
    %27 = vector.shape_cast %26 : vector<1x162x180xf32> to vector<162x180xf32>
    %c2_38 = arith.constant 2 : index
    %c0_39 = arith.constant 0 : index
    %c0_40 = arith.constant 0 : index
    %28 = vector.load %arg8[%c2_38, %c0_39, %c0_40] : memref<4x162x180xf32, #tpu.memory_space<vmem>>, vector<1x162x180xf32>
    %29 = vector.shape_cast %28 : vector<1x162x180xf32> to vector<162x180xf32>
    %c3_41 = arith.constant 3 : index
    %c0_42 = arith.constant 0 : index
    %c0_43 = arith.constant 0 : index
    %30 = vector.load %arg8[%c3_41, %c0_42, %c0_43] : memref<4x162x180xf32, #tpu.memory_space<vmem>>, vector<1x162x180xf32>
    %31 = vector.shape_cast %30 : vector<1x162x180xf32> to vector<162x180xf32>
    %c0_44 = arith.constant 0 : index
    %c0_45 = arith.constant 0 : index
    %c0_46 = arith.constant 0 : index
    %32 = vector.load %arg13[%c0_44, %c0_45, %c0_46] : memref<4x3x5xf32, #tpu.memory_space<vmem>>, vector<1x3x5xf32>
    %33 = vector.shape_cast %32 : vector<1x3x5xf32> to vector<3x5xf32>
    %c1_47 = arith.constant 1 : index
    %c0_48 = arith.constant 0 : index
    %c0_49 = arith.constant 0 : index
    %34 = vector.load %arg13[%c1_47, %c0_48, %c0_49] : memref<4x3x5xf32, #tpu.memory_space<vmem>>, vector<1x3x5xf32>
    %35 = vector.shape_cast %34 : vector<1x3x5xf32> to vector<3x5xf32>
    %c2_50 = arith.constant 2 : index
    %c0_51 = arith.constant 0 : index
    %c0_52 = arith.constant 0 : index
    %36 = vector.load %arg13[%c2_50, %c0_51, %c0_52] : memref<4x3x5xf32, #tpu.memory_space<vmem>>, vector<1x3x5xf32>
    %37 = vector.shape_cast %36 : vector<1x3x5xf32> to vector<3x5xf32>
    %c3_53 = arith.constant 3 : index
    %c0_54 = arith.constant 0 : index
    %c0_55 = arith.constant 0 : index
    %38 = vector.load %arg13[%c3_53, %c0_54, %c0_55] : memref<4x3x5xf32, #tpu.memory_space<vmem>>, vector<1x3x5xf32>
    %39 = vector.shape_cast %38 : vector<1x3x5xf32> to vector<3x5xf32>
    %c0_56 = arith.constant 0 : index
    %c0_57 = arith.constant 0 : index
    %c0_58 = arith.constant 0 : index
    %c0_59 = arith.constant 0 : index
    %40 = vector.load %arg14[%c0_56, %c0_57, %c0_58, %c0_59] : memref<4x3x180x18xf32, #tpu.memory_space<vmem>>, vector<1x1x180x18xf32>
    %41 = vector.shape_cast %40 : vector<1x1x180x18xf32> to vector<180x18xf32>
    %c0_60 = arith.constant 0 : index
    %c1_61 = arith.constant 1 : index
    %c0_62 = arith.constant 0 : index
    %c0_63 = arith.constant 0 : index
    %42 = vector.load %arg14[%c0_60, %c1_61, %c0_62, %c0_63] : memref<4x3x180x18xf32, #tpu.memory_space<vmem>>, vector<1x1x180x18xf32>
    %43 = vector.shape_cast %42 : vector<1x1x180x18xf32> to vector<180x18xf32>
    %c0_64 = arith.constant 0 : index
    %c2_65 = arith.constant 2 : index
    %c0_66 = arith.constant 0 : index
    %c0_67 = arith.constant 0 : index
    %44 = vector.load %arg14[%c0_64, %c2_65, %c0_66, %c0_67] : memref<4x3x180x18xf32, #tpu.memory_space<vmem>>, vector<1x1x180x18xf32>
    %45 = vector.shape_cast %44 : vector<1x1x180x18xf32> to vector<180x18xf32>
    %c1_68 = arith.constant 1 : index
    %c0_69 = arith.constant 0 : index
    %c0_70 = arith.constant 0 : index
    %c0_71 = arith.constant 0 : index
    %46 = vector.load %arg14[%c1_68, %c0_69, %c0_70, %c0_71] : memref<4x3x180x18xf32, #tpu.memory_space<vmem>>, vector<1x1x180x18xf32>
    %47 = vector.shape_cast %46 : vector<1x1x180x18xf32> to vector<180x18xf32>
    %c1_72 = arith.constant 1 : index
    %c1_73 = arith.constant 1 : index
    %c0_74 = arith.constant 0 : index
    %c0_75 = arith.constant 0 : index
    %48 = vector.load %arg14[%c1_72, %c1_73, %c0_74, %c0_75] : memref<4x3x180x18xf32, #tpu.memory_space<vmem>>, vector<1x1x180x18xf32>
    %49 = vector.shape_cast %48 : vector<1x1x180x18xf32> to vector<180x18xf32>
    %c1_76 = arith.constant 1 : index
    %c2_77 = arith.constant 2 : index
    %c0_78 = arith.constant 0 : index
    %c0_79 = arith.constant 0 : index
    %50 = vector.load %arg14[%c1_76, %c2_77, %c0_78, %c0_79] : memref<4x3x180x18xf32, #tpu.memory_space<vmem>>, vector<1x1x180x18xf32>
    %51 = vector.shape_cast %50 : vector<1x1x180x18xf32> to vector<180x18xf32>
    %c2_80 = arith.constant 2 : index
    %c0_81 = arith.constant 0 : index
    %c0_82 = arith.constant 0 : index
    %c0_83 = arith.constant 0 : index
    %52 = vector.load %arg14[%c2_80, %c0_81, %c0_82, %c0_83] : memref<4x3x180x18xf32, #tpu.memory_space<vmem>>, vector<1x1x180x18xf32>
    %53 = vector.shape_cast %52 : vector<1x1x180x18xf32> to vector<180x18xf32>
    %c2_84 = arith.constant 2 : index
    %c1_85 = arith.constant 1 : index
    %c0_86 = arith.constant 0 : index
    %c0_87 = arith.constant 0 : index
    %54 = vector.load %arg14[%c2_84, %c1_85, %c0_86, %c0_87] : memref<4x3x180x18xf32, #tpu.memory_space<vmem>>, vector<1x1x180x18xf32>
    %55 = vector.shape_cast %54 : vector<1x1x180x18xf32> to vector<180x18xf32>
    %c2_88 = arith.constant 2 : index
    %c2_89 = arith.constant 2 : index
    %c0_90 = arith.constant 0 : index
    %c0_91 = arith.constant 0 : index
    %56 = vector.load %arg14[%c2_88, %c2_89, %c0_90, %c0_91] : memref<4x3x180x18xf32, #tpu.memory_space<vmem>>, vector<1x1x180x18xf32>
    %57 = vector.shape_cast %56 : vector<1x1x180x18xf32> to vector<180x18xf32>
    %c3_92 = arith.constant 3 : index
    %c0_93 = arith.constant 0 : index
    %c0_94 = arith.constant 0 : index
    %c0_95 = arith.constant 0 : index
    %58 = vector.load %arg14[%c3_92, %c0_93, %c0_94, %c0_95] : memref<4x3x180x18xf32, #tpu.memory_space<vmem>>, vector<1x1x180x18xf32>
    %59 = vector.shape_cast %58 : vector<1x1x180x18xf32> to vector<180x18xf32>
    %c3_96 = arith.constant 3 : index
    %c1_97 = arith.constant 1 : index
    %c0_98 = arith.constant 0 : index
    %c0_99 = arith.constant 0 : index
    %60 = vector.load %arg14[%c3_96, %c1_97, %c0_98, %c0_99] : memref<4x3x180x18xf32, #tpu.memory_space<vmem>>, vector<1x1x180x18xf32>
    %61 = vector.shape_cast %60 : vector<1x1x180x18xf32> to vector<180x18xf32>
    %c3_100 = arith.constant 3 : index
    %c2_101 = arith.constant 2 : index
    %c0_102 = arith.constant 0 : index
    %c0_103 = arith.constant 0 : index
    %62 = vector.load %arg14[%c3_100, %c2_101, %c0_102, %c0_103] : memref<4x3x180x18xf32, #tpu.memory_space<vmem>>, vector<1x1x180x18xf32>
    %63 = vector.shape_cast %62 : vector<1x1x180x18xf32> to vector<180x18xf32>
    %c0_104 = arith.constant 0 : index
    %c0_105 = arith.constant 0 : index
    %64 = vector.load %arg3[%c0_104, %c0_105] : memref<162x18xf32, #tpu.memory_space<vmem>>, vector<162x18xf32>
    %c0_106 = arith.constant 0 : index
    %c0_107 = arith.constant 0 : index
    %65 = vector.load %arg4[%c0_106, %c0_107] : memref<18x162xf32, #tpu.memory_space<vmem>>, vector<18x162xf32>
    %c0_108 = arith.constant 0 : index
    %c0_109 = arith.constant 0 : index
    %66 = vector.load %arg5[%c0_108, %c0_109] : memref<1x18xf32, #tpu.memory_space<vmem>>, vector<1x18xf32>
    %c0_110 = arith.constant 0 : index
    %c0_111 = arith.constant 0 : index
    %67 = vector.load %arg6[%c0_110, %c0_111] : memref<1x18xf32, #tpu.memory_space<vmem>>, vector<1x18xf32>
    %c0_112 = arith.constant 0 : index
    %c0_113 = arith.constant 0 : index
    %68 = vector.load %arg9[%c0_112, %c0_113] : memref<180x36xf32, #tpu.memory_space<vmem>>, vector<180x36xf32>
    %c0_114 = arith.constant 0 : index
    %c0_115 = arith.constant 0 : index
    %69 = vector.load %arg10[%c0_114, %c0_115] : memref<36x180xf32, #tpu.memory_space<vmem>>, vector<36x180xf32>
    %c0_116 = arith.constant 0 : index
    %c0_117 = arith.constant 0 : index
    %70 = vector.load %arg11[%c0_116, %c0_117] : memref<1x36xf32, #tpu.memory_space<vmem>>, vector<1x36xf32>
    %c0_118 = arith.constant 0 : index
    %c0_119 = arith.constant 0 : index
    %71 = vector.load %arg12[%c0_118, %c0_119] : memref<1x36xf32, #tpu.memory_space<vmem>>, vector<1x36xf32>
    %c0_120 = arith.constant 0 : index
    %c0_121 = arith.constant 0 : index
    %72 = vector.load %arg15[%c0_120, %c0_121] : memref<18x128xf32, #tpu.memory_space<vmem>>, vector<18x128xf32>
    %c0_122 = arith.constant 0 : index
    %c0_123 = arith.constant 0 : index
    %73 = vector.load %arg16[%c0_122, %c0_123] : memref<1x128xf32, #tpu.memory_space<vmem>>, vector<1x128xf32>
    %c0_124 = arith.constant 0 : index
    %c0_125 = arith.constant 0 : index
    %c0_126 = arith.constant 0 : index
    %74 = vector.load %arg0[%c0_124, %c0_125, %c0_126] : memref<2x16x64xf32, #tpu.memory_space<vmem>>, vector<1x16x64xf32>
    %75 = vector.shape_cast %74 : vector<1x16x64xf32> to vector<16x64xf32>
    %cst = arith.constant dense<0.000000e+00> : vector<9x64xf32>
    %76 = tpu.matmul %1, %75, %cst {dimension_numbers = #tpu.dot_dimension_numbers<[1], [0], [0], [1], [0, 0, 1, 1], [], []>} : vector<9x16xf32>, vector<16x64xf32>, vector<9x64xf32> -> vector<9x64xf32>
    %cst_127 = arith.constant dense<0.000000e+00> : vector<9x162xf32>
    %77 = tpu.matmul %76, %9, %cst_127 {dimension_numbers = #tpu.dot_dimension_numbers<[1], [0], [0], [1], [0, 0, 1, 1], [], []>} : vector<9x64xf32>, vector<64x162xf32>, vector<9x162xf32> -> vector<9x162xf32>
    %cst_128 = arith.constant dense<0.000000e+00> : vector<9x64xf32>
    %78 = tpu.matmul %3, %75, %cst_128 {dimension_numbers = #tpu.dot_dimension_numbers<[1], [0], [0], [1], [0, 0, 1, 1], [], []>} : vector<9x16xf32>, vector<16x64xf32>, vector<9x64xf32> -> vector<9x64xf32>
    %cst_129 = arith.constant dense<0.000000e+00> : vector<9x162xf32>
    %79 = tpu.matmul %78, %11, %cst_129 {dimension_numbers = #tpu.dot_dimension_numbers<[1], [0], [0], [1], [0, 0, 1, 1], [], []>} : vector<9x64xf32>, vector<64x162xf32>, vector<9x162xf32> -> vector<9x162xf32>
    %80 = arith.addf %77, %79 : vector<9x162xf32>
    %cst_130 = arith.constant dense<0.000000e+00> : vector<9x64xf32>
    %81 = tpu.matmul %5, %75, %cst_130 {dimension_numbers = #tpu.dot_dimension_numbers<[1], [0], [0], [1], [0, 0, 1, 1], [], []>} : vector<9x16xf32>, vector<16x64xf32>, vector<9x64xf32> -> vector<9x64xf32>
    %cst_131 = arith.constant dense<0.000000e+00> : vector<9x162xf32>
    %82 = tpu.matmul %81, %13, %cst_131 {dimension_numbers = #tpu.dot_dimension_numbers<[1], [0], [0], [1], [0, 0, 1, 1], [], []>} : vector<9x64xf32>, vector<64x162xf32>, vector<9x162xf32> -> vector<9x162xf32>
    %83 = arith.addf %80, %82 : vector<9x162xf32>
    %cst_132 = arith.constant dense<0.000000e+00> : vector<9x64xf32>
    %84 = tpu.matmul %7, %75, %cst_132 {dimension_numbers = #tpu.dot_dimension_numbers<[1], [0], [0], [1], [0, 0, 1, 1], [], []>} : vector<9x16xf32>, vector<16x64xf32>, vector<9x64xf32> -> vector<9x64xf32>
    %cst_133 = arith.constant dense<0.000000e+00> : vector<9x162xf32>
    %85 = tpu.matmul %84, %15, %cst_133 {dimension_numbers = #tpu.dot_dimension_numbers<[1], [0], [0], [1], [0, 0, 1, 1], [], []>} : vector<9x64xf32>, vector<64x162xf32>, vector<9x162xf32> -> vector<9x162xf32>
    %86 = arith.addf %83, %85 : vector<9x162xf32>
    %c1_134 = arith.constant 1 : index
    %c0_135 = arith.constant 0 : index
    %c0_136 = arith.constant 0 : index
    %87 = vector.load %arg0[%c1_134, %c0_135, %c0_136] : memref<2x16x64xf32, #tpu.memory_space<vmem>>, vector<1x16x64xf32>
    %88 = vector.shape_cast %87 : vector<1x16x64xf32> to vector<16x64xf32>
    %cst_137 = arith.constant dense<0.000000e+00> : vector<9x64xf32>
    %89 = tpu.matmul %1, %88, %cst_137 {dimension_numbers = #tpu.dot_dimension_numbers<[1], [0], [0], [1], [0, 0, 1, 1], [], []>} : vector<9x16xf32>, vector<16x64xf32>, vector<9x64xf32> -> vector<9x64xf32>
    %cst_138 = arith.constant dense<0.000000e+00> : vector<9x162xf32>
    %90 = tpu.matmul %89, %9, %cst_138 {dimension_numbers = #tpu.dot_dimension_numbers<[1], [0], [0], [1], [0, 0, 1, 1], [], []>} : vector<9x64xf32>, vector<64x162xf32>, vector<9x162xf32> -> vector<9x162xf32>
    %cst_139 = arith.constant dense<0.000000e+00> : vector<9x64xf32>
    %91 = tpu.matmul %3, %88, %cst_139 {dimension_numbers = #tpu.dot_dimension_numbers<[1], [0], [0], [1], [0, 0, 1, 1], [], []>} : vector<9x16xf32>, vector<16x64xf32>, vector<9x64xf32> -> vector<9x64xf32>
    %cst_140 = arith.constant dense<0.000000e+00> : vector<9x162xf32>
    %92 = tpu.matmul %91, %11, %cst_140 {dimension_numbers = #tpu.dot_dimension_numbers<[1], [0], [0], [1], [0, 0, 1, 1], [], []>} : vector<9x64xf32>, vector<64x162xf32>, vector<9x162xf32> -> vector<9x162xf32>
    %93 = arith.addf %90, %92 : vector<9x162xf32>
    %cst_141 = arith.constant dense<0.000000e+00> : vector<9x64xf32>
    %94 = tpu.matmul %5, %88, %cst_141 {dimension_numbers = #tpu.dot_dimension_numbers<[1], [0], [0], [1], [0, 0, 1, 1], [], []>} : vector<9x16xf32>, vector<16x64xf32>, vector<9x64xf32> -> vector<9x64xf32>
    %cst_142 = arith.constant dense<0.000000e+00> : vector<9x162xf32>
    %95 = tpu.matmul %94, %13, %cst_142 {dimension_numbers = #tpu.dot_dimension_numbers<[1], [0], [0], [1], [0, 0, 1, 1], [], []>} : vector<9x64xf32>, vector<64x162xf32>, vector<9x162xf32> -> vector<9x162xf32>
    %96 = arith.addf %93, %95 : vector<9x162xf32>
    %cst_143 = arith.constant dense<0.000000e+00> : vector<9x64xf32>
    %97 = tpu.matmul %7, %88, %cst_143 {dimension_numbers = #tpu.dot_dimension_numbers<[1], [0], [0], [1], [0, 0, 1, 1], [], []>} : vector<9x16xf32>, vector<16x64xf32>, vector<9x64xf32> -> vector<9x64xf32>
    %cst_144 = arith.constant dense<0.000000e+00> : vector<9x162xf32>
    %98 = tpu.matmul %97, %15, %cst_144 {dimension_numbers = #tpu.dot_dimension_numbers<[1], [0], [0], [1], [0, 0, 1, 1], [], []>} : vector<9x64xf32>, vector<64x162xf32>, vector<9x162xf32> -> vector<9x162xf32>
    %99 = arith.addf %96, %98 : vector<9x162xf32>
    %cst_145 = arith.constant dense<0.000000e+00> : vector<162xf32>
    %100 = vector.multi_reduction <add>, %86, %cst_145 [0] : vector<9x162xf32> to vector<162xf32>
    %101 = vector.shape_cast %100 : vector<162xf32> to vector<1x162xf32>
    %cst_146 = arith.constant dense<0.000000e+00> : vector<1x18xf32>
    %102 = tpu.matmul %101, %64, %cst_146 {dimension_numbers = #tpu.dot_dimension_numbers<[1], [0], [0], [1], [0, 0, 1, 1], [], []>} : vector<1x162xf32>, vector<162x18xf32>, vector<1x18xf32> -> vector<1x18xf32>
    %103 = arith.mulf %86, %86 : vector<9x162xf32>
    %cst_147 = arith.constant dense<0.000000e+00> : vector<162xf32>
    %104 = vector.multi_reduction <add>, %103, %cst_147 [0] : vector<9x162xf32> to vector<162xf32>
    %105 = vector.shape_cast %104 : vector<162xf32> to vector<1x162xf32>
    %cst_148 = arith.constant dense<0.000000e+00> : vector<1x18xf32>
    %106 = tpu.matmul %105, %64, %cst_148 {dimension_numbers = #tpu.dot_dimension_numbers<[1], [0], [0], [1], [0, 0, 1, 1], [], []>} : vector<1x162xf32>, vector<162x18xf32>, vector<1x18xf32> -> vector<1x18xf32>
    %cst_149 = arith.constant dense<0.000000e+00> : vector<162xf32>
    %107 = vector.multi_reduction <add>, %99, %cst_149 [0] : vector<9x162xf32> to vector<162xf32>
    %108 = vector.shape_cast %107 : vector<162xf32> to vector<1x162xf32>
    %cst_150 = arith.constant dense<0.000000e+00> : vector<1x18xf32>
    %109 = tpu.matmul %108, %64, %cst_150 {dimension_numbers = #tpu.dot_dimension_numbers<[1], [0], [0], [1], [0, 0, 1, 1], [], []>} : vector<1x162xf32>, vector<162x18xf32>, vector<1x18xf32> -> vector<1x18xf32>
    %110 = arith.mulf %99, %99 : vector<9x162xf32>
    %cst_151 = arith.constant dense<0.000000e+00> : vector<162xf32>
    %111 = vector.multi_reduction <add>, %110, %cst_151 [0] : vector<9x162xf32> to vector<162xf32>
    %112 = vector.shape_cast %111 : vector<162xf32> to vector<1x162xf32>
    %cst_152 = arith.constant dense<0.000000e+00> : vector<1x18xf32>
    %113 = tpu.matmul %112, %64, %cst_152 {dimension_numbers = #tpu.dot_dimension_numbers<[1], [0], [0], [1], [0, 0, 1, 1], [], []>} : vector<1x162xf32>, vector<162x18xf32>, vector<1x18xf32> -> vector<1x18xf32>
    %114 = arith.addf %102, %109 : vector<1x18xf32>
    %115 = arith.addf %106, %113 : vector<1x18xf32>
    %cst_153 = arith.constant 0.00617283955 : f32
    %116 = vector.broadcast %cst_153 : f32 to vector<1x18xf32>
    %117 = arith.mulf %114, %116 : vector<1x18xf32>
    %cst_154 = arith.constant 0.00617283955 : f32
    %118 = vector.broadcast %cst_154 : f32 to vector<1x18xf32>
    %119 = arith.mulf %115, %118 : vector<1x18xf32>
    %120 = arith.mulf %117, %117 : vector<1x18xf32>
    %121 = arith.subf %119, %120 : vector<1x18xf32>
    %cst_155 = arith.constant 9.99999974E-6 : f32
    %122 = vector.broadcast %cst_155 : f32 to vector<1x18xf32>
    %123 = arith.addf %121, %122 : vector<1x18xf32>
    %124 = math.rsqrt %123 : vector<1x18xf32>
    %125 = arith.mulf %66, %124 : vector<1x18xf32>
    %126 = arith.mulf %117, %125 : vector<1x18xf32>
    %127 = arith.subf %67, %126 : vector<1x18xf32>
    %cst_156 = arith.constant dense<0.000000e+00> : vector<1x162xf32>
    %128 = tpu.matmul %125, %65, %cst_156 {dimension_numbers = #tpu.dot_dimension_numbers<[1], [0], [0], [1], [0, 0, 1, 1], [], []>} : vector<1x18xf32>, vector<18x162xf32>, vector<1x162xf32> -> vector<1x162xf32>
    %cst_157 = arith.constant dense<0.000000e+00> : vector<1x162xf32>
    %129 = tpu.matmul %127, %65, %cst_157 {dimension_numbers = #tpu.dot_dimension_numbers<[1], [0], [0], [1], [0, 0, 1, 1], [], []>} : vector<1x18xf32>, vector<18x162xf32>, vector<1x162xf32> -> vector<1x162xf32>
    %130 = vector.broadcast %128 : vector<1x162xf32> to vector<9x162xf32>
    %131 = arith.mulf %86, %130 : vector<9x162xf32>
    %132 = vector.broadcast %129 : vector<1x162xf32> to vector<9x162xf32>
    %133 = arith.addf %131, %132 : vector<9x162xf32>
    %cst_158 = arith.constant 0.000000e+00 : f32
    %134 = vector.broadcast %cst_158 : f32 to vector<9x162xf32>
    %135 = arith.cmpf ogt, %133, %134 : vector<9x162xf32>
    %cst_159 = arith.constant 0.00999999977 : f32
    %136 = vector.broadcast %cst_159 : f32 to vector<9x162xf32>
    %137 = arith.mulf %136, %133 : vector<9x162xf32>
    %138 = arith.select %135, %133, %137 : vector<9x162xi1>, vector<9x162xf32>
    %139 = vector.broadcast %128 : vector<1x162xf32> to vector<9x162xf32>
    %140 = arith.mulf %99, %139 : vector<9x162xf32>
    %141 = vector.broadcast %129 : vector<1x162xf32> to vector<9x162xf32>
    %142 = arith.addf %140, %141 : vector<9x162xf32>
    %cst_160 = arith.constant 0.000000e+00 : f32
    %143 = vector.broadcast %cst_160 : f32 to vector<9x162xf32>
    %144 = arith.cmpf ogt, %142, %143 : vector<9x162xf32>
    %cst_161 = arith.constant 0.00999999977 : f32
    %145 = vector.broadcast %cst_161 : f32 to vector<9x162xf32>
    %146 = arith.mulf %145, %142 : vector<9x162xf32>
    %147 = arith.select %144, %142, %146 : vector<9x162xi1>, vector<9x162xf32>
    %cst_162 = arith.constant dense<0.000000e+00> : vector<5x162xf32>
    %148 = tpu.matmul %17, %138, %cst_162 {dimension_numbers = #tpu.dot_dimension_numbers<[1], [0], [0], [1], [0, 0, 1, 1], [], []>} : vector<5x9xf32>, vector<9x162xf32>, vector<5x162xf32> -> vector<5x162xf32>
    %cst_163 = arith.constant dense<0.000000e+00> : vector<5x180xf32>
    %149 = tpu.matmul %148, %25, %cst_163 {dimension_numbers = #tpu.dot_dimension_numbers<[1], [0], [0], [1], [0, 0, 1, 1], [], []>} : vector<5x162xf32>, vector<162x180xf32>, vector<5x180xf32> -> vector<5x180xf32>
    %cst_164 = arith.constant dense<0.000000e+00> : vector<5x162xf32>
    %150 = tpu.matmul %19, %138, %cst_164 {dimension_numbers = #tpu.dot_dimension_numbers<[1], [0], [0], [1], [0, 0, 1, 1], [], []>} : vector<5x9xf32>, vector<9x162xf32>, vector<5x162xf32> -> vector<5x162xf32>
    %cst_165 = arith.constant dense<0.000000e+00> : vector<5x180xf32>
    %151 = tpu.matmul %150, %27, %cst_165 {dimension_numbers = #tpu.dot_dimension_numbers<[1], [0], [0], [1], [0, 0, 1, 1], [], []>} : vector<5x162xf32>, vector<162x180xf32>, vector<5x180xf32> -> vector<5x180xf32>
    %152 = arith.addf %149, %151 : vector<5x180xf32>
    %cst_166 = arith.constant dense<0.000000e+00> : vector<5x162xf32>
    %153 = tpu.matmul %21, %138, %cst_166 {dimension_numbers = #tpu.dot_dimension_numbers<[1], [0], [0], [1], [0, 0, 1, 1], [], []>} : vector<5x9xf32>, vector<9x162xf32>, vector<5x162xf32> -> vector<5x162xf32>
    %cst_167 = arith.constant dense<0.000000e+00> : vector<5x180xf32>
    %154 = tpu.matmul %153, %29, %cst_167 {dimension_numbers = #tpu.dot_dimension_numbers<[1], [0], [0], [1], [0, 0, 1, 1], [], []>} : vector<5x162xf32>, vector<162x180xf32>, vector<5x180xf32> -> vector<5x180xf32>
    %155 = arith.addf %152, %154 : vector<5x180xf32>
    %cst_168 = arith.constant dense<0.000000e+00> : vector<5x162xf32>
    %156 = tpu.matmul %23, %138, %cst_168 {dimension_numbers = #tpu.dot_dimension_numbers<[1], [0], [0], [1], [0, 0, 1, 1], [], []>} : vector<5x9xf32>, vector<9x162xf32>, vector<5x162xf32> -> vector<5x162xf32>
    %cst_169 = arith.constant dense<0.000000e+00> : vector<5x180xf32>
    %157 = tpu.matmul %156, %31, %cst_169 {dimension_numbers = #tpu.dot_dimension_numbers<[1], [0], [0], [1], [0, 0, 1, 1], [], []>} : vector<5x162xf32>, vector<162x180xf32>, vector<5x180xf32> -> vector<5x180xf32>
    %158 = arith.addf %155, %157 : vector<5x180xf32>
    %cst_170 = arith.constant dense<0.000000e+00> : vector<5x162xf32>
    %159 = tpu.matmul %17, %147, %cst_170 {dimension_numbers = #tpu.dot_dimension_numbers<[1], [0], [0], [1], [0, 0, 1, 1], [], []>} : vector<5x9xf32>, vector<9x162xf32>, vector<5x162xf32> -> vector<5x162xf32>
    %cst_171 = arith.constant dense<0.000000e+00> : vector<5x180xf32>
    %160 = tpu.matmul %159, %25, %cst_171 {dimension_numbers = #tpu.dot_dimension_numbers<[1], [0], [0], [1], [0, 0, 1, 1], [], []>} : vector<5x162xf32>, vector<162x180xf32>, vector<5x180xf32> -> vector<5x180xf32>
    %cst_172 = arith.constant dense<0.000000e+00> : vector<5x162xf32>
    %161 = tpu.matmul %19, %147, %cst_172 {dimension_numbers = #tpu.dot_dimension_numbers<[1], [0], [0], [1], [0, 0, 1, 1], [], []>} : vector<5x9xf32>, vector<9x162xf32>, vector<5x162xf32> -> vector<5x162xf32>
    %cst_173 = arith.constant dense<0.000000e+00> : vector<5x180xf32>
    %162 = tpu.matmul %161, %27, %cst_173 {dimension_numbers = #tpu.dot_dimension_numbers<[1], [0], [0], [1], [0, 0, 1, 1], [], []>} : vector<5x162xf32>, vector<162x180xf32>, vector<5x180xf32> -> vector<5x180xf32>
    %163 = arith.addf %160, %162 : vector<5x180xf32>
    %cst_174 = arith.constant dense<0.000000e+00> : vector<5x162xf32>
    %164 = tpu.matmul %21, %147, %cst_174 {dimension_numbers = #tpu.dot_dimension_numbers<[1], [0], [0], [1], [0, 0, 1, 1], [], []>} : vector<5x9xf32>, vector<9x162xf32>, vector<5x162xf32> -> vector<5x162xf32>
    %cst_175 = arith.constant dense<0.000000e+00> : vector<5x180xf32>
    %165 = tpu.matmul %164, %29, %cst_175 {dimension_numbers = #tpu.dot_dimension_numbers<[1], [0], [0], [1], [0, 0, 1, 1], [], []>} : vector<5x162xf32>, vector<162x180xf32>, vector<5x180xf32> -> vector<5x180xf32>
    %166 = arith.addf %163, %165 : vector<5x180xf32>
    %cst_176 = arith.constant dense<0.000000e+00> : vector<5x162xf32>
    %167 = tpu.matmul %23, %147, %cst_176 {dimension_numbers = #tpu.dot_dimension_numbers<[1], [0], [0], [1], [0, 0, 1, 1], [], []>} : vector<5x9xf32>, vector<9x162xf32>, vector<5x162xf32> -> vector<5x162xf32>
    %cst_177 = arith.constant dense<0.000000e+00> : vector<5x180xf32>
    %168 = tpu.matmul %167, %31, %cst_177 {dimension_numbers = #tpu.dot_dimension_numbers<[1], [0], [0], [1], [0, 0, 1, 1], [], []>} : vector<5x162xf32>, vector<162x180xf32>, vector<5x180xf32> -> vector<5x180xf32>
    %169 = arith.addf %166, %168 : vector<5x180xf32>
    %cst_178 = arith.constant dense<0.000000e+00> : vector<180xf32>
    %170 = vector.multi_reduction <add>, %158, %cst_178 [0] : vector<5x180xf32> to vector<180xf32>
    %171 = vector.shape_cast %170 : vector<180xf32> to vector<1x180xf32>
    %cst_179 = arith.constant dense<0.000000e+00> : vector<1x36xf32>
    %172 = tpu.matmul %171, %68, %cst_179 {dimension_numbers = #tpu.dot_dimension_numbers<[1], [0], [0], [1], [0, 0, 1, 1], [], []>} : vector<1x180xf32>, vector<180x36xf32>, vector<1x36xf32> -> vector<1x36xf32>
    %173 = arith.mulf %158, %158 : vector<5x180xf32>
    %cst_180 = arith.constant dense<0.000000e+00> : vector<180xf32>
    %174 = vector.multi_reduction <add>, %173, %cst_180 [0] : vector<5x180xf32> to vector<180xf32>
    %175 = vector.shape_cast %174 : vector<180xf32> to vector<1x180xf32>
    %cst_181 = arith.constant dense<0.000000e+00> : vector<1x36xf32>
    %176 = tpu.matmul %175, %68, %cst_181 {dimension_numbers = #tpu.dot_dimension_numbers<[1], [0], [0], [1], [0, 0, 1, 1], [], []>} : vector<1x180xf32>, vector<180x36xf32>, vector<1x36xf32> -> vector<1x36xf32>
    %cst_182 = arith.constant dense<0.000000e+00> : vector<180xf32>
    %177 = vector.multi_reduction <add>, %169, %cst_182 [0] : vector<5x180xf32> to vector<180xf32>
    %178 = vector.shape_cast %177 : vector<180xf32> to vector<1x180xf32>
    %cst_183 = arith.constant dense<0.000000e+00> : vector<1x36xf32>
    %179 = tpu.matmul %178, %68, %cst_183 {dimension_numbers = #tpu.dot_dimension_numbers<[1], [0], [0], [1], [0, 0, 1, 1], [], []>} : vector<1x180xf32>, vector<180x36xf32>, vector<1x36xf32> -> vector<1x36xf32>
    %180 = arith.mulf %169, %169 : vector<5x180xf32>
    %cst_184 = arith.constant dense<0.000000e+00> : vector<180xf32>
    %181 = vector.multi_reduction <add>, %180, %cst_184 [0] : vector<5x180xf32> to vector<180xf32>
    %182 = vector.shape_cast %181 : vector<180xf32> to vector<1x180xf32>
    %cst_185 = arith.constant dense<0.000000e+00> : vector<1x36xf32>
    %183 = tpu.matmul %182, %68, %cst_185 {dimension_numbers = #tpu.dot_dimension_numbers<[1], [0], [0], [1], [0, 0, 1, 1], [], []>} : vector<1x180xf32>, vector<180x36xf32>, vector<1x36xf32> -> vector<1x36xf32>
    %184 = arith.addf %172, %179 : vector<1x36xf32>
    %185 = arith.addf %176, %183 : vector<1x36xf32>
    %cst_186 = arith.constant 2.000000e-02 : f32
    %186 = vector.broadcast %cst_186 : f32 to vector<1x36xf32>
    %187 = arith.mulf %184, %186 : vector<1x36xf32>
    %cst_187 = arith.constant 2.000000e-02 : f32
    %188 = vector.broadcast %cst_187 : f32 to vector<1x36xf32>
    %189 = arith.mulf %185, %188 : vector<1x36xf32>
    %190 = arith.mulf %187, %187 : vector<1x36xf32>
    %191 = arith.subf %189, %190 : vector<1x36xf32>
    %cst_188 = arith.constant 9.99999974E-6 : f32
    %192 = vector.broadcast %cst_188 : f32 to vector<1x36xf32>
    %193 = arith.addf %191, %192 : vector<1x36xf32>
    %194 = math.rsqrt %193 : vector<1x36xf32>
    %195 = arith.mulf %70, %194 : vector<1x36xf32>
    %196 = arith.mulf %187, %195 : vector<1x36xf32>
    %197 = arith.subf %71, %196 : vector<1x36xf32>
    %cst_189 = arith.constant dense<0.000000e+00> : vector<1x180xf32>
    %198 = tpu.matmul %195, %69, %cst_189 {dimension_numbers = #tpu.dot_dimension_numbers<[1], [0], [0], [1], [0, 0, 1, 1], [], []>} : vector<1x36xf32>, vector<36x180xf32>, vector<1x180xf32> -> vector<1x180xf32>
    %cst_190 = arith.constant dense<0.000000e+00> : vector<1x180xf32>
    %199 = tpu.matmul %197, %69, %cst_190 {dimension_numbers = #tpu.dot_dimension_numbers<[1], [0], [0], [1], [0, 0, 1, 1], [], []>} : vector<1x36xf32>, vector<36x180xf32>, vector<1x180xf32> -> vector<1x180xf32>
    %200 = vector.broadcast %198 : vector<1x180xf32> to vector<5x180xf32>
    %201 = arith.mulf %158, %200 : vector<5x180xf32>
    %202 = vector.broadcast %199 : vector<1x180xf32> to vector<5x180xf32>
    %203 = arith.addf %201, %202 : vector<5x180xf32>
    %cst_191 = arith.constant 0.000000e+00 : f32
    %204 = vector.broadcast %cst_191 : f32 to vector<5x180xf32>
    %205 = arith.cmpf ogt, %203, %204 : vector<5x180xf32>
    %cst_192 = arith.constant 0.00999999977 : f32
    %206 = vector.broadcast %cst_192 : f32 to vector<5x180xf32>
    %207 = arith.mulf %206, %203 : vector<5x180xf32>
    %208 = arith.select %205, %203, %207 : vector<5x180xi1>, vector<5x180xf32>
    %209 = vector.broadcast %198 : vector<1x180xf32> to vector<5x180xf32>
    %210 = arith.mulf %169, %209 : vector<5x180xf32>
    %211 = vector.broadcast %199 : vector<1x180xf32> to vector<5x180xf32>
    %212 = arith.addf %210, %211 : vector<5x180xf32>
    %cst_193 = arith.constant 0.000000e+00 : f32
    %213 = vector.broadcast %cst_193 : f32 to vector<5x180xf32>
    %214 = arith.cmpf ogt, %212, %213 : vector<5x180xf32>
    %cst_194 = arith.constant 0.00999999977 : f32
    %215 = vector.broadcast %cst_194 : f32 to vector<5x180xf32>
    %216 = arith.mulf %215, %212 : vector<5x180xf32>
    %217 = arith.select %214, %212, %216 : vector<5x180xi1>, vector<5x180xf32>
    %cst_195 = arith.constant 0.000000e+00 : f32
    %218 = vector.broadcast %cst_195 : f32 to vector<8x128xf32>
    %c0_196 = arith.constant 0 : index
    %c0_197 = arith.constant 0 : index
    %219 = vector.load %arg17[%c0_196, %c0_197] : memref<8x128xf32, #tpu.memory_space<vmem>>, vector<8x128xf32>
    tpu.vector_store %arg17[%c0_196, %c0_197], %218 {strides = array<i32>} : memref<8x128xf32, #tpu.memory_space<vmem>>, vector<8x128xf32>,
    %cst_198 = arith.constant dense<0.000000e+00> : vector<3x180xf32>
    %220 = tpu.matmul %33, %208, %cst_198 {dimension_numbers = #tpu.dot_dimension_numbers<[1], [0], [0], [1], [0, 0, 1, 1], [], []>} : vector<3x5xf32>, vector<5x180xf32>, vector<3x180xf32> -> vector<3x180xf32>
    %cst_199 = arith.constant dense<0.000000e+00> : vector<3x180xf32>
    %221 = tpu.matmul %35, %208, %cst_199 {dimension_numbers = #tpu.dot_dimension_numbers<[1], [0], [0], [1], [0, 0, 1, 1], [], []>} : vector<3x5xf32>, vector<5x180xf32>, vector<3x180xf32> -> vector<3x180xf32>
    %cst_200 = arith.constant dense<0.000000e+00> : vector<3x180xf32>
    %222 = tpu.matmul %37, %208, %cst_200 {dimension_numbers = #tpu.dot_dimension_numbers<[1], [0], [0], [1], [0, 0, 1, 1], [], []>} : vector<3x5xf32>, vector<5x180xf32>, vector<3x180xf32> -> vector<3x180xf32>
    %cst_201 = arith.constant dense<0.000000e+00> : vector<3x180xf32>
    %223 = tpu.matmul %39, %208, %cst_201 {dimension_numbers = #tpu.dot_dimension_numbers<[1], [0], [0], [1], [0, 0, 1, 1], [], []>} : vector<3x5xf32>, vector<5x180xf32>, vector<3x180xf32> -> vector<3x180xf32>
    %cst_202 = arith.constant dense<0.000000e+00> : vector<3x18xf32>
    %224 = tpu.matmul %220, %41, %cst_202 {dimension_numbers = #tpu.dot_dimension_numbers<[1], [0], [0], [1], [0, 0, 1, 1], [], []>} : vector<3x180xf32>, vector<180x18xf32>, vector<3x18xf32> -> vector<3x18xf32>
    %cst_203 = arith.constant dense<0.000000e+00> : vector<3x18xf32>
    %225 = tpu.matmul %221, %47, %cst_203 {dimension_numbers = #tpu.dot_dimension_numbers<[1], [0], [0], [1], [0, 0, 1, 1], [], []>} : vector<3x180xf32>, vector<180x18xf32>, vector<3x18xf32> -> vector<3x18xf32>
    %226 = arith.addf %224, %225 : vector<3x18xf32>
    %cst_204 = arith.constant dense<0.000000e+00> : vector<3x18xf32>
    %227 = tpu.matmul %222, %53, %cst_204 {dimension_numbers = #tpu.dot_dimension_numbers<[1], [0], [0], [1], [0, 0, 1, 1], [], []>} : vector<3x180xf32>, vector<180x18xf32>, vector<3x18xf32> -> vector<3x18xf32>
    %228 = arith.addf %226, %227 : vector<3x18xf32>
    %cst_205 = arith.constant dense<0.000000e+00> : vector<3x18xf32>
    %229 = tpu.matmul %223, %59, %cst_205 {dimension_numbers = #tpu.dot_dimension_numbers<[1], [0], [0], [1], [0, 0, 1, 1], [], []>} : vector<3x180xf32>, vector<180x18xf32>, vector<3x18xf32> -> vector<3x18xf32>
    %230 = arith.addf %228, %229 : vector<3x18xf32>
    %cst_206 = arith.constant dense<0.000000e+00> : vector<3x18xf32>
    %231 = tpu.matmul %220, %43, %cst_206 {dimension_numbers = #tpu.dot_dimension_numbers<[1], [0], [0], [1], [0, 0, 1, 1], [], []>} : vector<3x180xf32>, vector<180x18xf32>, vector<3x18xf32> -> vector<3x18xf32>
    %cst_207 = arith.constant dense<0.000000e+00> : vector<3x18xf32>
    %232 = tpu.matmul %221, %49, %cst_207 {dimension_numbers = #tpu.dot_dimension_numbers<[1], [0], [0], [1], [0, 0, 1, 1], [], []>} : vector<3x180xf32>, vector<180x18xf32>, vector<3x18xf32> -> vector<3x18xf32>
    %233 = arith.addf %231, %232 : vector<3x18xf32>
    %cst_208 = arith.constant dense<0.000000e+00> : vector<3x18xf32>
    %234 = tpu.matmul %222, %55, %cst_208 {dimension_numbers = #tpu.dot_dimension_numbers<[1], [0], [0], [1], [0, 0, 1, 1], [], []>} : vector<3x180xf32>, vector<180x18xf32>, vector<3x18xf32> -> vector<3x18xf32>
    %235 = arith.addf %233, %234 : vector<3x18xf32>
    %cst_209 = arith.constant dense<0.000000e+00> : vector<3x18xf32>
    %236 = tpu.matmul %223, %61, %cst_209 {dimension_numbers = #tpu.dot_dimension_numbers<[1], [0], [0], [1], [0, 0, 1, 1], [], []>} : vector<3x180xf32>, vector<180x18xf32>, vector<3x18xf32> -> vector<3x18xf32>
    %237 = arith.addf %235, %236 : vector<3x18xf32>
    %238 = arith.maximumf %230, %237 : vector<3x18xf32>
    %cst_210 = arith.constant dense<0.000000e+00> : vector<3x18xf32>
    %239 = tpu.matmul %220, %45, %cst_210 {dimension_numbers = #tpu.dot_dimension_numbers<[1], [0], [0], [1], [0, 0, 1, 1], [], []>} : vector<3x180xf32>, vector<180x18xf32>, vector<3x18xf32> -> vector<3x18xf32>
    %cst_211 = arith.constant dense<0.000000e+00> : vector<3x18xf32>
    %240 = tpu.matmul %221, %51, %cst_211 {dimension_numbers = #tpu.dot_dimension_numbers<[1], [0], [0], [1], [0, 0, 1, 1], [], []>} : vector<3x180xf32>, vector<180x18xf32>, vector<3x18xf32> -> vector<3x18xf32>
    %241 = arith.addf %239, %240 : vector<3x18xf32>
    %cst_212 = arith.constant dense<0.000000e+00> : vector<3x18xf32>
    %242 = tpu.matmul %222, %57, %cst_212 {dimension_numbers = #tpu.dot_dimension_numbers<[1], [0], [0], [1], [0, 0, 1, 1], [], []>} : vector<3x180xf32>, vector<180x18xf32>, vector<3x18xf32> -> vector<3x18xf32>
    %243 = arith.addf %241, %242 : vector<3x18xf32>
    %cst_213 = arith.constant dense<0.000000e+00> : vector<3x18xf32>
    %244 = tpu.matmul %223, %63, %cst_213 {dimension_numbers = #tpu.dot_dimension_numbers<[1], [0], [0], [1], [0, 0, 1, 1], [], []>} : vector<3x180xf32>, vector<180x18xf32>, vector<3x18xf32> -> vector<3x18xf32>
    %245 = arith.addf %243, %244 : vector<3x18xf32>
    %246 = arith.maximumf %238, %245 : vector<3x18xf32>
    %cst_214 = arith.constant dense<0xFF800000> : vector<18xf32>
    %247 = vector.multi_reduction <maximumf>, %246, %cst_214 [0] : vector<3x18xf32> to vector<18xf32>
    %248 = vector.shape_cast %247 : vector<18xf32> to vector<1x18xf32>
    %cst_215 = arith.constant dense<0.000000e+00> : vector<1x128xf32>
    %249 = tpu.matmul %248, %72, %cst_215 {dimension_numbers = #tpu.dot_dimension_numbers<[1], [0], [0], [1], [0, 0, 1, 1], [], []>} : vector<1x18xf32>, vector<18x128xf32>, vector<1x128xf32> -> vector<1x128xf32>
    %250 = arith.addf %249, %73 : vector<1x128xf32>
    %c0_216 = arith.constant 0 : index
    %c0_217 = arith.constant 0 : index
    %251 = vector.load %arg17[%c0_216, %c0_217] : memref<8x128xf32, #tpu.memory_space<vmem>>, vector<1x128xf32>
    tpu.vector_store %arg17[%c0_216, %c0_217], %250 {strides = array<i32>} : memref<8x128xf32, #tpu.memory_space<vmem>>, vector<1x128xf32>,
    %cst_218 = arith.constant dense<0.000000e+00> : vector<3x180xf32>
    %252 = tpu.matmul %33, %217, %cst_218 {dimension_numbers = #tpu.dot_dimension_numbers<[1], [0], [0], [1], [0, 0, 1, 1], [], []>} : vector<3x5xf32>, vector<5x180xf32>, vector<3x180xf32> -> vector<3x180xf32>
    %cst_219 = arith.constant dense<0.000000e+00> : vector<3x180xf32>
    %253 = tpu.matmul %35, %217, %cst_219 {dimension_numbers = #tpu.dot_dimension_numbers<[1], [0], [0], [1], [0, 0, 1, 1], [], []>} : vector<3x5xf32>, vector<5x180xf32>, vector<3x180xf32> -> vector<3x180xf32>
    %cst_220 = arith.constant dense<0.000000e+00> : vector<3x180xf32>
    %254 = tpu.matmul %37, %217, %cst_220 {dimension_numbers = #tpu.dot_dimension_numbers<[1], [0], [0], [1], [0, 0, 1, 1], [], []>} : vector<3x5xf32>, vector<5x180xf32>, vector<3x180xf32> -> vector<3x180xf32>
    %cst_221 = arith.constant dense<0.000000e+00> : vector<3x180xf32>
    %255 = tpu.matmul %39, %217, %cst_221 {dimension_numbers = #tpu.dot_dimension_numbers<[1], [0], [0], [1], [0, 0, 1, 1], [], []>} : vector<3x5xf32>, vector<5x180xf32>, vector<3x180xf32> -> vector<3x180xf32>
    %cst_222 = arith.constant dense<0.000000e+00> : vector<3x18xf32>
    %256 = tpu.matmul %252, %41, %cst_222 {dimension_numbers = #tpu.dot_dimension_numbers<[1], [0], [0], [1], [0, 0, 1, 1], [], []>} : vector<3x180xf32>, vector<180x18xf32>, vector<3x18xf32> -> vector<3x18xf32>
    %cst_223 = arith.constant dense<0.000000e+00> : vector<3x18xf32>
    %257 = tpu.matmul %253, %47, %cst_223 {dimension_numbers = #tpu.dot_dimension_numbers<[1], [0], [0], [1], [0, 0, 1, 1], [], []>} : vector<3x180xf32>, vector<180x18xf32>, vector<3x18xf32> -> vector<3x18xf32>
    %258 = arith.addf %256, %257 : vector<3x18xf32>
    %cst_224 = arith.constant dense<0.000000e+00> : vector<3x18xf32>
    %259 = tpu.matmul %254, %53, %cst_224 {dimension_numbers = #tpu.dot_dimension_numbers<[1], [0], [0], [1], [0, 0, 1, 1], [], []>} : vector<3x180xf32>, vector<180x18xf32>, vector<3x18xf32> -> vector<3x18xf32>
    %260 = arith.addf %258, %259 : vector<3x18xf32>
    %cst_225 = arith.constant dense<0.000000e+00> : vector<3x18xf32>
    %261 = tpu.matmul %255, %59, %cst_225 {dimension_numbers = #tpu.dot_dimension_numbers<[1], [0], [0], [1], [0, 0, 1, 1], [], []>} : vector<3x180xf32>, vector<180x18xf32>, vector<3x18xf32> -> vector<3x18xf32>
    %262 = arith.addf %260, %261 : vector<3x18xf32>
    %cst_226 = arith.constant dense<0.000000e+00> : vector<3x18xf32>
    %263 = tpu.matmul %252, %43, %cst_226 {dimension_numbers = #tpu.dot_dimension_numbers<[1], [0], [0], [1], [0, 0, 1, 1], [], []>} : vector<3x180xf32>, vector<180x18xf32>, vector<3x18xf32> -> vector<3x18xf32>
    %cst_227 = arith.constant dense<0.000000e+00> : vector<3x18xf32>
    %264 = tpu.matmul %253, %49, %cst_227 {dimension_numbers = #tpu.dot_dimension_numbers<[1], [0], [0], [1], [0, 0, 1, 1], [], []>} : vector<3x180xf32>, vector<180x18xf32>, vector<3x18xf32> -> vector<3x18xf32>
    %265 = arith.addf %263, %264 : vector<3x18xf32>
    %cst_228 = arith.constant dense<0.000000e+00> : vector<3x18xf32>
    %266 = tpu.matmul %254, %55, %cst_228 {dimension_numbers = #tpu.dot_dimension_numbers<[1], [0], [0], [1], [0, 0, 1, 1], [], []>} : vector<3x180xf32>, vector<180x18xf32>, vector<3x18xf32> -> vector<3x18xf32>
    %267 = arith.addf %265, %266 : vector<3x18xf32>
    %cst_229 = arith.constant dense<0.000000e+00> : vector<3x18xf32>
    %268 = tpu.matmul %255, %61, %cst_229 {dimension_numbers = #tpu.dot_dimension_numbers<[1], [0], [0], [1], [0, 0, 1, 1], [], []>} : vector<3x180xf32>, vector<180x18xf32>, vector<3x18xf32> -> vector<3x18xf32>
    %269 = arith.addf %267, %268 : vector<3x18xf32>
    %270 = arith.maximumf %262, %269 : vector<3x18xf32>
    %cst_230 = arith.constant dense<0.000000e+00> : vector<3x18xf32>
    %271 = tpu.matmul %252, %45, %cst_230 {dimension_numbers = #tpu.dot_dimension_numbers<[1], [0], [0], [1], [0, 0, 1, 1], [], []>} : vector<3x180xf32>, vector<180x18xf32>, vector<3x18xf32> -> vector<3x18xf32>
    %cst_231 = arith.constant dense<0.000000e+00> : vector<3x18xf32>
    %272 = tpu.matmul %253, %51, %cst_231 {dimension_numbers = #tpu.dot_dimension_numbers<[1], [0], [0], [1], [0, 0, 1, 1], [], []>} : vector<3x180xf32>, vector<180x18xf32>, vector<3x18xf32> -> vector<3x18xf32>
    %273 = arith.addf %271, %272 : vector<3x18xf32>
    %cst_232 = arith.constant dense<0.000000e+00> : vector<3x18xf32>
    %274 = tpu.matmul %254, %57, %cst_232 {dimension_numbers = #tpu.dot_dimension_numbers<[1], [0], [0], [1], [0, 0, 1, 1], [], []>} : vector<3x180xf32>, vector<180x18xf32>, vector<3x18xf32> -> vector<3x18xf32>
    %275 = arith.addf %273, %274 : vector<3x18xf32>
    %cst_233 = arith.constant dense<0.000000e+00> : vector<3x18xf32>
    %276 = tpu.matmul %255, %63, %cst_233 {dimension_numbers = #tpu.dot_dimension_numbers<[1], [0], [0], [1], [0, 0, 1, 1], [], []>} : vector<3x180xf32>, vector<180x18xf32>, vector<3x18xf32> -> vector<3x18xf32>
    %277 = arith.addf %275, %276 : vector<3x18xf32>
    %278 = arith.maximumf %270, %277 : vector<3x18xf32>
    %cst_234 = arith.constant dense<0xFF800000> : vector<18xf32>
    %279 = vector.multi_reduction <maximumf>, %278, %cst_234 [0] : vector<3x18xf32> to vector<18xf32>
    %280 = vector.shape_cast %279 : vector<18xf32> to vector<1x18xf32>
    %cst_235 = arith.constant dense<0.000000e+00> : vector<1x128xf32>
    %281 = tpu.matmul %280, %72, %cst_235 {dimension_numbers = #tpu.dot_dimension_numbers<[1], [0], [0], [1], [0, 0, 1, 1], [], []>} : vector<1x18xf32>, vector<18x128xf32>, vector<1x128xf32> -> vector<1x128xf32>
    %282 = arith.addf %281, %73 : vector<1x128xf32>
    %c1_236 = arith.constant 1 : index
    %c0_237 = arith.constant 0 : index
    %283 = vector.load %arg17[%c1_236, %c0_237] : memref<8x128xf32, #tpu.memory_space<vmem>>, vector<1x128xf32>
    tpu.vector_store %arg17[%c1_236, %c0_237], %282 {strides = array<i32>} : memref<8x128xf32, #tpu.memory_space<vmem>>, vector<1x128xf32>,
    return
  }
}

</mosaic_0001>

<llo_original>
// kernel: upps_net_forward.1
$region0: #{upps_net_forward.1}
  #allocation0 [shape = 'u32[]', space=smem, size = 0x4, offset = 0x4, fixed_abs, tag = 'smem constant byte address 0x4 - core index']
  #allocation1 [shape = 'u32[72,128]{1,0:T(1,128)}', space=vmem, size = 0x9000, scoped, tag = 'internal scratch']
  %s0 = inlined_call_operand.vmem [shape: f32[2,16,64], index: 0, kind: input, shape index: {}]
  %s1 = inlined_call_operand.vmem [shape: f32[4,9,16], index: 1, kind: input, shape index: {}]
  %s2 = inlined_call_operand.vmem [shape: f32[4,64,162], index: 2, kind: input, shape index: {}]
  %s3 = inlined_call_operand.vmem [shape: f32[162,18], index: 3, kind: input, shape index: {}]
  %s4 = inlined_call_operand.vmem [shape: f32[18,162], index: 4, kind: input, shape index: {}]
  %s5 = inlined_call_operand.vmem [shape: f32[1,18], index: 5, kind: input, shape index: {}]
  %s6 = inlined_call_operand.vmem [shape: f32[1,18], index: 6, kind: input, shape index: {}]
  %s7 = inlined_call_operand.vmem [shape: f32[4,5,9], index: 7, kind: input, shape index: {}]
  %s8 = inlined_call_operand.vmem [shape: f32[4,162,180], index: 8, kind: input, shape index: {}]
  %s9 = inlined_call_operand.vmem [shape: f32[180,36], index: 9, kind: input, shape index: {}]
  %s10 = inlined_call_operand.vmem [shape: f32[36,180], index: 10, kind: input, shape index: {}]
  %s11 = inlined_call_operand.vmem [shape: f32[1,36], index: 11, kind: input, shape index: {}]
  %s12 = inlined_call_operand.vmem [shape: f32[1,36], index: 12, kind: input, shape index: {}]
  %s13 = inlined_call_operand.vmem [shape: f32[4,3,5], index: 13, kind: input, shape index: {}]
  %s14 = inlined_call_operand.vmem [shape: f32[4,3,180,18], index: 14, kind: input, shape index: {}]
  %s15 = inlined_call_operand.vmem [shape: f32[18,128], index: 15, kind: input, shape index: {}]
  %s16 = inlined_call_operand.vmem [shape: f32[1,128], index: 16, kind: input, shape index: {}]
  %s17 = inlined_call_operand.vmem [shape: f32[8,128], index: 17, kind: output, shape index: {}]
  %s18 = sld [smem:[#allocation0]]
  $region78: #{upps_net_forward.1} parent=0
    _
  %s20 = ssub.s32 1, %s18
  %s21 = scalar_select 0, %s20, %s18
  // Predicated region
  $region2: #{upps_net_forward.1} parent=0 // pred_check
    _
  $region3: #{upps_net_forward.1} parent=0 // pred_check_branch
    %23 = sbr.rel (0) target = $region5
  $region4: #{upps_net_forward.1} parent=0 // pred_region
    _
  $region5: #{upps_net_forward.1} parent=0 // pred_fallthru
    _
  // Predicated region
  $region6: #{upps_net_forward.1} parent=0 // pred_check
    _
  $region7: #{upps_net_forward.1} parent=0 // pred_check_branch
    %25 = sbr.rel (0) target = $region9
  $region8: #{upps_net_forward.1} parent=0 // pred_region
    _
  $region9: #{upps_net_forward.1} parent=0 // pred_fallthru
    _
  // Predicated region
  $region10: #{upps_net_forward.1} parent=0 // pred_check
    _
  $region11: #{upps_net_forward.1} parent=0 // pred_check_branch
    %27 = sbr.rel (0) target = $region13
  $region12: #{upps_net_forward.1} parent=0 // pred_region
    _
  $region13: #{upps_net_forward.1} parent=0 // pred_fallthru
    _
  // Predicated region
  $region14: #{upps_net_forward.1} parent=0 // pred_check
    _
  $region15: #{upps_net_forward.1} parent=0 // pred_check_branch
    %29 = sbr.rel (0) target = $region17
  $region16: #{upps_net_forward.1} parent=0 // pred_region
    _
  $region17: #{upps_net_forward.1} parent=0 // pred_fallthru
    _
  // Predicated region
  $region18: #{upps_net_forward.1} parent=0 // pred_check
    _
  $region19: #{upps_net_forward.1} parent=0 // pred_check_branch
    %31 = sbr.rel (0) target = $region21
  $region20: #{upps_net_forward.1} parent=0 // pred_region
    _
  $region21: #{upps_net_forward.1} parent=0 // pred_fallthru
    _
  // Predicated region
  $region22: #{upps_net_forward.1} parent=0 // pred_check
    _
  $region23: #{upps_net_forward.1} parent=0 // pred_check_branch
    %33 = sbr.rel (0) target = $region25
  $region24: #{upps_net_forward.1} parent=0 // pred_region
    _
  $region25: #{upps_net_forward.1} parent=0 // pred_fallthru
    _
  // Predicated region
  $region26: #{upps_net_forward.1} parent=0 // pred_check
    _
  $region27: #{upps_net_forward.1} parent=0 // pred_check_branch
    %35 = sbr.rel (0) target = $region29
  $region28: #{upps_net_forward.1} parent=0 // pred_region
    _
  $region29: #{upps_net_forward.1} parent=0 // pred_fallthru
    _
  // Predicated region
  $region30: #{upps_net_forward.1} parent=0 // pred_check
    _
  $region31: #{upps_net_forward.1} parent=0 // pred_check_branch
    %37 = sbr.rel (0) target = $region33
  $region32: #{upps_net_forward.1} parent=0 // pred_region
    _
  $region33: #{upps_net_forward.1} parent=0 // pred_fallthru
    _
  // Predicated region
  $region34: #{upps_net_forward.1} parent=0 // pred_check
    _
  $region35: #{upps_net_forward.1} parent=0 // pred_check_branch
    %39 = sbr.rel (0) target = $region37
  $region36: #{upps_net_forward.1} parent=0 // pred_region
    _
  $region37: #{upps_net_forward.1} parent=0 // pred_fallthru
    _
  // Predicated region
  $region38: #{upps_net_forward.1} parent=0 // pred_check
    _
  $region39: #{upps_net_forward.1} parent=0 // pred_check_branch
    %41 = sbr.rel (0) target = $region41
  $region40: #{upps_net_forward.1} parent=0 // pred_region
    _
  $region41: #{upps_net_forward.1} parent=0 // pred_fallthru
    _
  // Predicated region
  $region42: #{upps_net_forward.1} parent=0 // pred_check
    _
  $region43: #{upps_net_forward.1} parent=0 // pred_check_branch
    %43 = sbr.rel (0) target = $region45
  $region44: #{upps_net_forward.1} parent=0 // pred_region
    _
  $region45: #{upps_net_forward.1} parent=0 // pred_fallthru
    _
  // Predicated region
  $region46: #{upps_net_forward.1} parent=0 // pred_check
    _
  $region47: #{upps_net_forward.1} parent=0 // pred_check_branch
    %45 = sbr.rel (0) target = $region49
  $region48: #{upps_net_forward.1} parent=0 // pred_region
    _
  $region49: #{upps_net_forward.1} parent=0 // pred_fallthru
    _
  // Predicated region
  $region50: #{upps_net_forward.1} parent=0 // pred_check
    _
  $region51: #{upps_net_forward.1} parent=0 // pred_check_branch
    %47 = sbr.rel (0) target = $region53
  $region52: #{upps_net_forward.1} parent=0 // pred_region
    _
  $region53: #{upps_net_forward.1} parent=0 // pred_fallthru
    _
  // Predicated region
  $region54: #{upps_net_forward.1} parent=0 // pred_check
    _
  $region55: #{upps_net_forward.1} parent=0 // pred_check_branch
    %49 = sbr.rel (0) target = $region57
  $region56: #{upps_net_forward.1} parent=0 // pred_region
    _
  $region57: #{upps_net_forward.1} parent=0 // pred_fallthru
    _
  // Predicated region
  $region58: #{upps_net_forward.1} parent=0 // pred_check
    _
  $region59: #{upps_net_forward.1} parent=0 // pred_check_branch
    %51 = sbr.rel (0) target = $region61
  $region60: #{upps_net_forward.1} parent=0 // pred_region
    _
  $region61: #{upps_net_forward.1} parent=0 // pred_fallthru
    _
  // Predicated region
  $region62: #{upps_net_forward.1} parent=0 // pred_check
    _
  $region63: #{upps_net_forward.1} parent=0 // pred_check_branch
    %53 = sbr.rel (0) target = $region65
  $region64: #{upps_net_forward.1} parent=0 // pred_region
    _
  $region65: #{upps_net_forward.1} parent=0 // pred_fallthru
    _
  // Predicated region
  $region66: #{upps_net_forward.1} parent=0 // pred_check
    _
  $region67: #{upps_net_forward.1} parent=0 // pred_check_branch
    %55 = sbr.rel (0) target = $region69
  $region68: #{upps_net_forward.1} parent=0 // pred_region
    _
  $region69: #{upps_net_forward.1} parent=0 // pred_fallthru
    _
  %v56 = vld [vmem:[%s1] sm:$0xff]
  %v57 = vld [vmem:[%s1 + $0x8] sm:$0x1]
  %s58 = scalar_lea.vmem %s1, 16
  %v59 = vld [vmem:[%s58] sm:$0xff]
  %v60 = vld [vmem:[%s58 + $0x8] sm:$0x1]
  %s61 = scalar_lea.vmem %s1, 32
  %v62 = vld [vmem:[%s61] sm:$0xff]
  %v63 = vld [vmem:[%s61 + $0x8] sm:$0x1]
  %s64 = scalar_lea.vmem %s1, 48
  %v65 = vld [vmem:[%s64] sm:$0xff]
  %v66 = vld [vmem:[%s64 + $0x8] sm:$0x1]
  %v67 = vld [vmem:[%s2] sm:$0xff]
  %v68 = vld [vmem:[%s2 + $0x8] sm:$0xff]
  %v69 = vld [vmem:[%s2 + $0x10] sm:$0xff]
  %v70 = vld [vmem:[%s2 + $0x18] sm:$0xff]
  %v71 = vld [vmem:[%s2 + $0x20] sm:$0xff]
  %v72 = vld [vmem:[%s2 + $0x28] sm:$0xff]
  %v73 = vld [vmem:[%s2 + $0x30] sm:$0xff]
  %v74 = vld [vmem:[%s2 + $0x38] sm:$0xff]
  %v75 = vld [vmem:[%s2 + $0x40] sm:$0xff]
  %v76 = vld [vmem:[%s2 + $0x48] sm:$0xff]
  %v77 = vld [vmem:[%s2 + $0x50] sm:$0xff]
  %v78 = vld [vmem:[%s2 + $0x58] sm:$0xff]
  %v79 = vld [vmem:[%s2 + $0x60] sm:$0xff]
  %v80 = vld [vmem:[%s2 + $0x68] sm:$0xff]
  %v81 = vld [vmem:[%s2 + $0x70] sm:$0xff]
  %v82 = vld [vmem:[%s2 + $0x78] sm:$0xff]
  %s83 = scalar_lea.vmem %s2, 128
  %v84 = vld [vmem:[%s83] sm:$0xff]
  %v85 = vld [vmem:[%s83 + $0x8] sm:$0xff]
  %v86 = vld [vmem:[%s83 + $0x10] sm:$0xff]
  %v87 = vld [vmem:[%s83 + $0x18] sm:$0xff]
  %v88 = vld [vmem:[%s83 + $0x20] sm:$0xff]
  %v89 = vld [vmem:[%s83 + $0x28] sm:$0xff]
  %v90 = vld [vmem:[%s83 + $0x30] sm:$0xff]
  %v91 = vld [vmem:[%s83 + $0x38] sm:$0xff]
  %v92 = vld [vmem:[%s83 + $0x40] sm:$0xff]
  %v93 = vld [vmem:[%s83 + $0x48] sm:$0xff]
  %v94 = vld [vmem:[%s83 + $0x50] sm:$0xff]
  %v95 = vld [vmem:[%s83 + $0x58] sm:$0xff]
  %v96 = vld [vmem:[%s83 + $0x60] sm:$0xff]
  %v97 = vld [vmem:[%s83 + $0x68] sm:$0xff]
  %v98 = vld [vmem:[%s83 + $0x70] sm:$0xff]
  %v99 = vld [vmem:[%s83 + $0x78] sm:$0xff]
  %s100 = scalar_lea.vmem %s2, 256
  %v101 = vld [vmem:[%s100] sm:$0xff]
  %v102 = vld [vmem:[%s100 + $0x8] sm:$0xff]
  %v103 = vld [vmem:[%s100 + $0x10] sm:$0xff]
  %v104 = vld [vmem:[%s100 + $0x18] sm:$0xff]
  %v105 = vld [vmem:[%s100 + $0x20] sm:$0xff]
  %v106 = vld [vmem:[%s100 + $0x28] sm:$0xff]
  %v107 = vld [vmem:[%s100 + $0x30] sm:$0xff]
  %v108 = vld [vmem:[%s100 + $0x38] sm:$0xff]
  %v109 = vld [vmem:[%s100 + $0x40] sm:$0xff]
  %v110 = vld [vmem:[%s100 + $0x48] sm:$0xff]
  %v111 = vld [vmem:[%s100 + $0x50] sm:$0xff]
  %v112 = vld [vmem:[%s100 + $0x58] sm:$0xff]
  %v113 = vld [vmem:[%s100 + $0x60] sm:$0xff]
  %v114 = vld [vmem:[%s100 + $0x68] sm:$0xff]
  %v115 = vld [vmem:[%s100 + $0x70] sm:$0xff]
  %v116 = vld [vmem:[%s100 + $0x78] sm:$0xff]
  %s117 = scalar_lea.vmem %s2, 384
  %v118 = vld [vmem:[%s117] sm:$0xff]
  %v119 = vld [vmem:[%s117 + $0x8] sm:$0xff]
  %v120 = vld [vmem:[%s117 + $0x10] sm:$0xff]
  %v121 = vld [vmem:[%s117 + $0x18] sm:$0xff]
  %v122 = vld [vmem:[%s117 + $0x20] sm:$0xff]
  %v123 = vld [vmem:[%s117 + $0x28] sm:$0xff]
  %v124 = vld [vmem:[%s117 + $0x30] sm:$0xff]
  %v125 = vld [vmem:[%s117 + $0x38] sm:$0xff]
  %v126 = vld [vmem:[%s117 + $0x40] sm:$0xff]
  %v127 = vld [vmem:[%s117 + $0x48] sm:$0xff]
  %v128 = vld [vmem:[%s117 + $0x50] sm:$0xff]
  %v129 = vld [vmem:[%s117 + $0x58] sm:$0xff]
  %v130 = vld [vmem:[%s117 + $0x60] sm:$0xff]
  %v131 = vld [vmem:[%s117 + $0x68] sm:$0xff]
  %v132 = vld [vmem:[%s117 + $0x70] sm:$0xff]
  %v133 = vld [vmem:[%s117 + $0x78] sm:$0xff]
  %v134 = vld [vmem:[%s7] sm:$0x1f]
  %s135 = scalar_lea.vmem %s7, 8
  %v136 = vld [vmem:[%s135] sm:$0x1f]
  %s137 = scalar_lea.vmem %s7, 16
  %v138 = vld [vmem:[%s137] sm:$0x1f]
  %s139 = scalar_lea.vmem %s7, 24
  %v140 = vld [vmem:[%s139] sm:$0x1f]
  %v141 = vld [vmem:[%s8] sm:$0xff]
  %v142 = vld [vmem:[%s8 + $0x8] sm:$0xff]
  %v143 = vld [vmem:[%s8 + $0x10] sm:$0xff]
  %v144 = vld [vmem:[%s8 + $0x18] sm:$0xff]
  %v145 = vld [vmem:[%s8 + $0x20] sm:$0xff]
  %v146 = vld [vmem:[%s8 + $0x28] sm:$0xff]
  %v147 = vld [vmem:[%s8 + $0x30] sm:$0xff]
  %v148 = vld [vmem:[%s8 + $0x38] sm:$0xff]
  %v149 = vld [vmem:[%s8 + $0x40] sm:$0xff]
  %v150 = vld [vmem:[%s8 + $0x48] sm:$0xff]
  %v151 = vld [vmem:[%s8 + $0x50] sm:$0xff]
  %v152 = vld [vmem:[%s8 + $0x58] sm:$0xff]
  %v153 = vld [vmem:[%s8 + $0x60] sm:$0xff]
  %v154 = vld [vmem:[%s8 + $0x68] sm:$0xff]
  %v155 = vld [vmem:[%s8 + $0x70] sm:$0xff]
  %v156 = vld [vmem:[%s8 + $0x78] sm:$0xff]
  %v157 = vld [vmem:[%s8 + $0x80] sm:$0xff]
  %v158 = vld [vmem:[%s8 + $0x88] sm:$0xff]
  %v159 = vld [vmem:[%s8 + $0x90] sm:$0xff]
  %v160 = vld [vmem:[%s8 + $0x98] sm:$0xff]
  %v161 = vld [vmem:[%s8 + $0xa0] sm:$0xff]
  %v162 = vld [vmem:[%s8 + $0xa8] sm:$0xff]
  %v163 = vld [vmem:[%s8 + $0xb0] sm:$0xff]
  %v164 = vld [vmem:[%s8 + $0xb8] sm:$0xff]
  %v165 = vld [vmem:[%s8 + $0xc0] sm:$0xff]
  %v166 = vld [vmem:[%s8 + $0xc8] sm:$0xff]
  %v167 = vld [vmem:[%s8 + $0xd0] sm:$0xff]
  %v168 = vld [vmem:[%s8 + $0xd8] sm:$0xff]
  %v169 = vld [vmem:[%s8 + $0xe0] sm:$0xff]
  %v170 = vld [vmem:[%s8 + $0xe8] sm:$0xff]
  %v171 = vld [vmem:[%s8 + $0xf0] sm:$0xff]
  %v172 = vld [vmem:[%s8 + $0xf8] sm:$0xff]
  %v173 = vld [vmem:[%s8 + $0x100] sm:$0xff]
  %v174 = vld [vmem:[%s8 + $0x108] sm:$0xff]
  %v175 = vld [vmem:[%s8 + $0x110] sm:$0xff]
  %v176 = vld [vmem:[%s8 + $0x118] sm:$0xff]
  %v177 = vld [vmem:[%s8 + $0x120] sm:$0xff]
  %v178 = vld [vmem:[%s8 + $0x128] sm:$0xff]
  %v179 = vld [vmem:[%s8 + $0x130] sm:$0xff]
  %v180 = vld [vmem:[%s8 + $0x138] sm:$0xff]
  %v181 = vld [vmem:[%s8 + $0x140] sm:$0x3]
  %v182 = vld [vmem:[%s8 + $0x148] sm:$0x3]
  %s183 = scalar_lea.vmem %s8, 336
  %v184 = vld [vmem:[%s183] sm:$0xff]
  %v185 = vld [vmem:[%s183 + $0x8] sm:$0xff]
  %v186 = vld [vmem:[%s183 + $0x10] sm:$0xff]
  %v187 = vld [vmem:[%s183 + $0x18] sm:$0xff]
  %v188 = vld [vmem:[%s183 + $0x20] sm:$0xff]
  %v189 = vld [vmem:[%s183 + $0x28] sm:$0xff]
  %v190 = vld [vmem:[%s183 + $0x30] sm:$0xff]
  %v191 = vld [vmem:[%s183 + $0x38] sm:$0xff]
  %v192 = vld [vmem:[%s183 + $0x40] sm:$0xff]
  %v193 = vld [vmem:[%s183 + $0x48] sm:$0xff]
  %v194 = vld [vmem:[%s183 + $0x50] sm:$0xff]
  %v195 = vld [vmem:[%s183 + $0x58] sm:$0xff]
  %v196 = vld [vmem:[%s183 + $0x60] sm:$0xff]
  %v197 = vld [vmem:[%s183 + $0x68] sm:$0xff]
  %v198 = vld [vmem:[%s183 + $0x70] sm:$0xff]
  %v199 = vld [vmem:[%s183 + $0x78] sm:$0xff]
  %v200 = vld [vmem:[%s183 + $0x80] sm:$0xff]
  %v201 = vld [vmem:[%s183 + $0x88] sm:$0xff]
  %v202 = vld [vmem:[%s183 + $0x90] sm:$0xff]
  %v203 = vld [vmem:[%s183 + $0x98] sm:$0xff]
  %v204 = vld [vmem:[%s183 + $0xa0] sm:$0xff]
  %v205 = vld [vmem:[%s183 + $0xa8] sm:$0xff]
  %v206 = vld [vmem:[%s183 + $0xb0] sm:$0xff]
  %v207 = vld [vmem:[%s183 + $0xb8] sm:$0xff]
  %v208 = vld [vmem:[%s183 + $0xc0] sm:$0xff]
  %v209 = vld [vmem:[%s183 + $0xc8] sm:$0xff]
  %v210 = vld [vmem:[%s183 + $0xd0] sm:$0xff]
  %v211 = vld [vmem:[%s183 + $0xd8] sm:$0xff]
  %v212 = vld [vmem:[%s183 + $0xe0] sm:$0xff]
  %v213 = vld [vmem:[%s183 + $0xe8] sm:$0xff]
  %v214 = vld [vmem:[%s183 + $0xf0] sm:$0xff]
  %v215 = vld [vmem:[%s183 + $0xf8] sm:$0xff]
  %v216 = vld [vmem:[%s183 + $0x100] sm:$0xff]
  %v217 = vld [vmem:[%s183 + $0x108] sm:$0xff]
  %v218 = vld [vmem:[%s183 + $0x110] sm:$0xff]
  %v219 = vld [vmem:[%s183 + $0x118] sm:$0xff]
  %v220 = vld [vmem:[%s183 + $0x120] sm:$0xff]
  %v221 = vld [vmem:[%s183 + $0x128] sm:$0xff]
  %v222 = vld [vmem:[%s183 + $0x130] sm:$0xff]
  %v223 = vld [vmem:[%s183 + $0x138] sm:$0xff]
  %v224 = vld [vmem:[%s183 + $0x140] sm:$0x3]
  %v225 = vld [vmem:[%s183 + $0x148] sm:$0x3]
  %s226 = scalar_lea.vmem %s8, 672
  %v227 = vld [vmem:[%s226] sm:$0xff]
  %v228 = vld [vmem:[%s226 + $0x8] sm:$0xff]
  %v229 = vld [vmem:[%s226 + $0x10] sm:$0xff]
  %v230 = vld [vmem:[%s226 + $0x18] sm:$0xff]
  %v231 = vld [vmem:[%s226 + $0x20] sm:$0xff]
  %v232 = vld [vmem:[%s226 + $0x28] sm:$0xff]
  %v233 = vld [vmem:[%s226 + $0x30] sm:$0xff]
  %v234 = vld [vmem:[%s226 + $0x38] sm:$0xff]
  %v235 = vld [vmem:[%s226 + $0x40] sm:$0xff]
  %v236 = vld [vmem:[%s226 + $0x48] sm:$0xff]
  %v237 = vld [vmem:[%s226 + $0x50] sm:$0xff]
  %v238 = vld [vmem:[%s226 + $0x58] sm:$0xff]
  %v239 = vld [vmem:[%s226 + $0x60] sm:$0xff]
  %v240 = vld [vmem:[%s226 + $0x68] sm:$0xff]
  %v241 = vld [vmem:[%s226 + $0x70] sm:$0xff]
  %v242 = vld [vmem:[%s226 + $0x78] sm:$0xff]
  %v243 = vld [vmem:[%s226 + $0x80] sm:$0xff]
  %v244 = vld [vmem:[%s226 + $0x88] sm:$0xff]
  %v245 = vld [vmem:[%s226 + $0x90] sm:$0xff]
  %v246 = vld [vmem:[%s226 + $0x98] sm:$0xff]
  %v247 = vld [vmem:[%s226 + $0xa0] sm:$0xff]
  %v248 = vld [vmem:[%s226 + $0xa8] sm:$0xff]
  %v249 = vld [vmem:[%s226 + $0xb0] sm:$0xff]
  %v250 = vld [vmem:[%s226 + $0xb8] sm:$0xff]
  %v251 = vld [vmem:[%s226 + $0xc0] sm:$0xff]
  %v252 = vld [vmem:[%s226 + $0xc8] sm:$0xff]
  %v253 = vld [vmem:[%s226 + $0xd0] sm:$0xff]
  %v254 = vld [vmem:[%s226 + $0xd8] sm:$0xff]
  %v255 = vld [vmem:[%s226 + $0xe0] sm:$0xff]
  %v256 = vld [vmem:[%s226 + $0xe8] sm:$0xff]
  %v257 = vld [vmem:[%s226 + $0xf0] sm:$0xff]
  %v258 = vld [vmem:[%s226 + $0xf8] sm:$0xff]
  %v259 = vld [vmem:[%s226 + $0x100] sm:$0xff]
  %v260 = vld [vmem:[%s226 + $0x108] sm:$0xff]
  %v261 = vld [vmem:[%s226 + $0x110] sm:$0xff]
  %v262 = vld [vmem:[%s226 + $0x118] sm:$0xff]
  %v263 = vld [vmem:[%s226 + $0x120] sm:$0xff]
  %v264 = vld [vmem:[%s226 + $0x128] sm:$0xff]
  %v265 = vld [vmem:[%s226 + $0x130] sm:$0xff]
  %v266 = vld [vmem:[%s226 + $0x138] sm:$0xff]
  %v267 = vld [vmem:[%s226 + $0x140] sm:$0x3]
  %v268 = vld [vmem:[%s226 + $0x148] sm:$0x3]
  %s269 = scalar_lea.vmem %s8, 1008
  %v270 = vld [vmem:[%s269] sm:$0xff]
  %v271 = vld [vmem:[%s269 + $0x8] sm:$0xff]
  %v272 = vld [vmem:[%s269 + $0x10] sm:$0xff]
  %v273 = vld [vmem:[%s269 + $0x18] sm:$0xff]
  %v274 = vld [vmem:[%s269 + $0x20] sm:$0xff]
  %v275 = vld [vmem:[%s269 + $0x28] sm:$0xff]
  %v276 = vld [vmem:[%s269 + $0x30] sm:$0xff]
  %v277 = vld [vmem:[%s269 + $0x38] sm:$0xff]
  %v278 = vld [vmem:[%s269 + $0x40] sm:$0xff]
  %v279 = vld [vmem:[%s269 + $0x48] sm:$0xff]
  %v280 = vld [vmem:[%s269 + $0x50] sm:$0xff]
  %v281 = vld [vmem:[%s269 + $0x58] sm:$0xff]
  %v282 = vld [vmem:[%s269 + $0x60] sm:$0xff]
  %v283 = vld [vmem:[%s269 + $0x68] sm:$0xff]
  %v284 = vld [vmem:[%s269 + $0x70] sm:$0xff]
  %v285 = vld [vmem:[%s269 + $0x78] sm:$0xff]
  %v286 = vld [vmem:[%s269 + $0x80] sm:$0xff]
  %v287 = vld [vmem:[%s269 + $0x88] sm:$0xff]
  %v288 = vld [vmem:[%s269 + $0x90] sm:$0xff]
  %v289 = vld [vmem:[%s269 + $0x98] sm:$0xff]
  %v290 = vld [vmem:[%s269 + $0xa0] sm:$0xff]
  %v291 = vld [vmem:[%s269 + $0xa8] sm:$0xff]
  %v292 = vld [vmem:[%s269 + $0xb0] sm:$0xff]
  %v293 = vld [vmem:[%s269 + $0xb8] sm:$0xff]
  %v294 = vld [vmem:[%s269 + $0xc0] sm:$0xff]
  %v295 = vld [vmem:[%s269 + $0xc8] sm:$0xff]
  %v296 = vld [vmem:[%s269 + $0xd0] sm:$0xff]
  %v297 = vld [vmem:[%s269 + $0xd8] sm:$0xff]
  %v298 = vld [vmem:[%s269 + $0xe0] sm:$0xff]
  %v299 = vld [vmem:[%s269 + $0xe8] sm:$0xff]
  %v300 = vld [vmem:[%s269 + $0xf0] sm:$0xff]
  %v301 = vld [vmem:[%s269 + $0xf8] sm:$0xff]
  %v302 = vld [vmem:[%s269 + $0x100] sm:$0xff]
  %v303 = vld [vmem:[%s269 + $0x108] sm:$0xff]
  %v304 = vld [vmem:[%s269 + $0x110] sm:$0xff]
  %v305 = vld [vmem:[%s269 + $0x118] sm:$0xff]
  %v306 = vld [vmem:[%s269 + $0x120] sm:$0xff]
  %v307 = vld [vmem:[%s269 + $0x128] sm:$0xff]
  %v308 = vld [vmem:[%s269 + $0x130] sm:$0xff]
  %v309 = vld [vmem:[%s269 + $0x138] sm:$0xff]
  %v310 = vld [vmem:[%s269 + $0x140] sm:$0x3]
  %v311 = vld [vmem:[%s269 + $0x148] sm:$0x3]
  %v312 = vld [vmem:[%s13] sm:$0x7]
  %s313 = scalar_lea.vmem %s13, 4
  %v314 = vld [vmem:[%s313] sm:$0x7]
  %s315 = scalar_lea.vmem %s13, 8
  %v316 = vld [vmem:[%s315] sm:$0x7]
  %s317 = scalar_lea.vmem %s13, 12
  %v318 = vld [vmem:[%s317] sm:$0x7]
  %v319 = vld [vmem:[%s14] sm:$0xff]
  %v320 = vld [vmem:[%s14 + $0x8] sm:$0xff]
  %v321 = vld [vmem:[%s14 + $0x10] sm:$0xff]
  %v322 = vld [vmem:[%s14 + $0x18] sm:$0xff]
  %v323 = vld [vmem:[%s14 + $0x20] sm:$0xff]
  %v324 = vld [vmem:[%s14 + $0x28] sm:$0xff]
  %v325 = vld [vmem:[%s14 + $0x30] sm:$0xff]
  %v326 = vld [vmem:[%s14 + $0x38] sm:$0xff]
  %v327 = vld [vmem:[%s14 + $0x40] sm:$0xff]
  %v328 = vld [vmem:[%s14 + $0x48] sm:$0xff]
  %v329 = vld [vmem:[%s14 + $0x50] sm:$0xff]
  %v330 = vld [vmem:[%s14 + $0x58] sm:$0xff]
  %v331 = vld [vmem:[%s14 + $0x60] sm:$0xff]
  %v332 = vld [vmem:[%s14 + $0x68] sm:$0xff]
  %v333 = vld [vmem:[%s14 + $0x70] sm:$0xff]
  %v334 = vld [vmem:[%s14 + $0x78] sm:$0xff]
  %v335 = vld [vmem:[%s14 + $0x80] sm:$0xff]
  %v336 = vld [vmem:[%s14 + $0x88] sm:$0xff]
  %v337 = vld [vmem:[%s14 + $0x90] sm:$0xff]
  %v338 = vld [vmem:[%s14 + $0x98] sm:$0xff]
  %v339 = vld [vmem:[%s14 + $0xa0] sm:$0xff]
  %v340 = vld [vmem:[%s14 + $0xa8] sm:$0xff]
  %v341 = vld [vmem:[%s14 + $0xb0] sm:$0xf]
  %s342 = scalar_lea.vmem %s14, 184
  %v343 = vld [vmem:[%s342] sm:$0xff]
  %v344 = vld [vmem:[%s342 + $0x8] sm:$0xff]
  %v345 = vld [vmem:[%s342 + $0x10] sm:$0xff]
  %v346 = vld [vmem:[%s342 + $0x18] sm:$0xff]
  %v347 = vld [vmem:[%s342 + $0x20] sm:$0xff]
  %v348 = vld [vmem:[%s342 + $0x28] sm:$0xff]
  %v349 = vld [vmem:[%s342 + $0x30] sm:$0xff]
  %v350 = vld [vmem:[%s342 + $0x38] sm:$0xff]
  %v351 = vld [vmem:[%s342 + $0x40] sm:$0xff]
  %v352 = vld [vmem:[%s342 + $0x48] sm:$0xff]
  %v353 = vld [vmem:[%s342 + $0x50] sm:$0xff]
  %v354 = vld [vmem:[%s342 + $0x58] sm:$0xff]
  %v355 = vld [vmem:[%s342 + $0x60] sm:$0xff]
  %v356 = vld [vmem:[%s342 + $0x68] sm:$0xff]
  %v357 = vld [vmem:[%s342 + $0x70] sm:$0xff]
  %v358 = vld [vmem:[%s342 + $0x78] sm:$0xff]
  %v359 = vld [vmem:[%s342 + $0x80] sm:$0xff]
  %v360 = vld [vmem:[%s342 + $0x88] sm:$0xff]
  %v361 = vld [vmem:[%s342 + $0x90] sm:$0xff]
  %v362 = vld [vmem:[%s342 + $0x98] sm:$0xff]
  %v363 = vld [vmem:[%s342 + $0xa0] sm:$0xff]
  %v364 = vld [vmem:[%s342 + $0xa8] sm:$0xff]
  %v365 = vld [vmem:[%s342 + $0xb0] sm:$0xf]
  %s366 = scalar_lea.vmem %s14, 368
  %v367 = vld [vmem:[%s366] sm:$0xff]
  %v368 = vld [vmem:[%s366 + $0x8] sm:$0xff]
  %v369 = vld [vmem:[%s366 + $0x10] sm:$0xff]
  %v370 = vld [vmem:[%s366 + $0x18] sm:$0xff]
  %v371 = vld [vmem:[%s366 + $0x20] sm:$0xff]
  %v372 = vld [vmem:[%s366 + $0x28] sm:$0xff]
  %v373 = vld [vmem:[%s366 + $0x30] sm:$0xff]
  %v374 = vld [vmem:[%s366 + $0x38] sm:$0xff]
  %v375 = vld [vmem:[%s366 + $0x40] sm:$0xff]
  %v376 = vld [vmem:[%s366 + $0x48] sm:$0xff]
  %v377 = vld [vmem:[%s366 + $0x50] sm:$0xff]
  %v378 = vld [vmem:[%s366 + $0x58] sm:$0xff]
  %v379 = vld [vmem:[%s366 + $0x60] sm:$0xff]
  %v380 = vld [vmem:[%s366 + $0x68] sm:$0xff]
  %v381 = vld [vmem:[%s366 + $0x70] sm:$0xff]
  %v382 = vld [vmem:[%s366 + $0x78] sm:$0xff]
  %v383 = vld [vmem:[%s366 + $0x80] sm:$0xff]
  %v384 = vld [vmem:[%s366 + $0x88] sm:$0xff]
  %v385 = vld [vmem:[%s366 + $0x90] sm:$0xff]
  %v386 = vld [vmem:[%s366 + $0x98] sm:$0xff]
  %v387 = vld [vmem:[%s366 + $0xa0] sm:$0xff]
  %v388 = vld [vmem:[%s366 + $0xa8] sm:$0xff]
  %v389 = vld [vmem:[%s366 + $0xb0] sm:$0xf]
  %s390 = scalar_lea.vmem %s14, 552
  %v391 = vld [vmem:[%s390] sm:$0xff]
  %v392 = vld [vmem:[%s390 + $0x8] sm:$0xff]
  %v393 = vld [vmem:[%s390 + $0x10] sm:$0xff]
  %v394 = vld [vmem:[%s390 + $0x18] sm:$0xff]
  %v395 = vld [vmem:[%s390 + $0x20] sm:$0xff]
  %v396 = vld [vmem:[%s390 + $0x28] sm:$0xff]
  %v397 = vld [vmem:[%s390 + $0x30] sm:$0xff]
  %v398 = vld [vmem:[%s390 + $0x38] sm:$0xff]
  %v399 = vld [vmem:[%s390 + $0x40] sm:$0xff]
  %v400 = vld [vmem:[%s390 + $0x48] sm:$0xff]
  %v401 = vld [vmem:[%s390 + $0x50] sm:$0xff]
  %v402 = vld [vmem:[%s390 + $0x58] sm:$0xff]
  %v403 = vld [vmem:[%s390 + $0x60] sm:$0xff]
  %v404 = vld [vmem:[%s390 + $0x68] sm:$0xff]
  %v405 = vld [vmem:[%s390 + $0x70] sm:$0xff]
  %v406 = vld [vmem:[%s390 + $0x78] sm:$0xff]
  %v407 = vld [vmem:[%s390 + $0x80] sm:$0xff]
  %v408 = vld [vmem:[%s390 + $0x88] sm:$0xff]
  %v409 = vld [vmem:[%s390 + $0x90] sm:$0xff]
  %v410 = vld [vmem:[%s390 + $0x98] sm:$0xff]
  %v411 = vld [vmem:[%s390 + $0xa0] sm:$0xff]
  %v412 = vld [vmem:[%s390 + $0xa8] sm:$0xff]
  %v413 = vld [vmem:[%s390 + $0xb0] sm:$0xf]
  %s414 = scalar_lea.vmem %s14, 736
  %v415 = vld [vmem:[%s414] sm:$0xff]
  %v416 = vld [vmem:[%s414 + $0x8] sm:$0xff]
  %v417 = vld [vmem:[%s414 + $0x10] sm:$0xff]
  %v418 = vld [vmem:[%s414 + $0x18] sm:$0xff]
  %v419 = vld [vmem:[%s414 + $0x20] sm:$0xff]
  %v420 = vld [vmem:[%s414 + $0x28] sm:$0xff]
  %v421 = vld [vmem:[%s414 + $0x30] sm:$0xff]
  %v422 = vld [vmem:[%s414 + $0x38] sm:$0xff]
  %v423 = vld [vmem:[%s414 + $0x40] sm:$0xff]
  %v424 = vld [vmem:[%s414 + $0x48] sm:$0xff]
  %v425 = vld [vmem:[%s414 + $0x50] sm:$0xff]
  %v426 = vld [vmem:[%s414 + $0x58] sm:$0xff]
  %v427 = vld [vmem:[%s414 + $0x60] sm:$0xff]
  %v428 = vld [vmem:[%s414 + $0x68] sm:$0xff]
  %v429 = vld [vmem:[%s414 + $0x70] sm:$0xff]
  %v430 = vld [vmem:[%s414 + $0x78] sm:$0xff]
  %v431 = vld [vmem:[%s414 + $0x80] sm:$0xff]
  %v432 = vld [vmem:[%s414 + $0x88] sm:$0xff]
  %v433 = vld [vmem:[%s414 + $0x90] sm:$0xff]
  %v434 = vld [vmem:[%s414 + $0x98] sm:$0xff]
  %v435 = vld [vmem:[%s414 + $0xa0] sm:$0xff]
  %v436 = vld [vmem:[%s414 + $0xa8] sm:$0xff]
  %v437 = vld [vmem:[%s414 + $0xb0] sm:$0xf]
  %s438 = scalar_lea.vmem %s14, 920
  %v439 = vld [vmem:[%s438] sm:$0xff]
  %v440 = vld [vmem:[%s438 + $0x8] sm:$0xff]
  %v441 = vld [vmem:[%s438 + $0x10] sm:$0xff]
  %v442 = vld [vmem:[%s438 + $0x18] sm:$0xff]
  %v443 = vld [vmem:[%s438 + $0x20] sm:$0xff]
  %v444 = vld [vmem:[%s438 + $0x28] sm:$0xff]
  %v445 = vld [vmem:[%s438 + $0x30] sm:$0xff]
  %v446 = vld [vmem:[%s438 + $0x38] sm:$0xff]
  %v447 = vld [vmem:[%s438 + $0x40] sm:$0xff]
  %v448 = vld [vmem:[%s438 + $0x48] sm:$0xff]
  %v449 = vld [vmem:[%s438 + $0x50] sm:$0xff]
  %v450 = vld [vmem:[%s438 + $0x58] sm:$0xff]
  %v451 = vld [vmem:[%s438 + $0x60] sm:$0xff]
  %v452 = vld [vmem:[%s438 + $0x68] sm:$0xff]
  %v453 = vld [vmem:[%s438 + $0x70] sm:$0xff]
  %v454 = vld [vmem:[%s438 + $0x78] sm:$0xff]
  %v455 = vld [vmem:[%s438 + $0x80] sm:$0xff]
  %v456 = vld [vmem:[%s438 + $0x88] sm:$0xff]
  %v457 = vld [vmem:[%s438 + $0x90] sm:$0xff]
  %v458 = vld [vmem:[%s438 + $0x98] sm:$0xff]
  %v459 = vld [vmem:[%s438 + $0xa0] sm:$0xff]
  %v460 = vld [vmem:[%s438 + $0xa8] sm:$0xff]
  %v461 = vld [vmem:[%s438 + $0xb0] sm:$0xf]
  %s462 = scalar_lea.vmem %s14, 1104
  %v463 = vld [vmem:[%s462] sm:$0xff]
  %v464 = vld [vmem:[%s462 + $0x8] sm:$0xff]
  %v465 = vld [vmem:[%s462 + $0x10] sm:$0xff]
  %v466 = vld [vmem:[%s462 + $0x18] sm:$0xff]
  %v467 = vld [vmem:[%s462 + $0x20] sm:$0xff]
  %v468 = vld [vmem:[%s462 + $0x28] sm:$0xff]
  %v469 = vld [vmem:[%s462 + $0x30] sm:$0xff]
  %v470 = vld [vmem:[%s462 + $0x38] sm:$0xff]
  %v471 = vld [vmem:[%s462 + $0x40] sm:$0xff]
  %v472 = vld [vmem:[%s462 + $0x48] sm:$0xff]
  %v473 = vld [vmem:[%s462 + $0x50] sm:$0xff]
  %v474 = vld [vmem:[%s462 + $0x58] sm:$0xff]
  %v475 = vld [vmem:[%s462 + $0x60] sm:$0xff]
  %v476 = vld [vmem:[%s462 + $0x68] sm:$0xff]
  %v477 = vld [vmem:[%s462 + $0x70] sm:$0xff]
  %v478 = vld [vmem:[%s462 + $0x78] sm:$0xff]
  %v479 = vld [vmem:[%s462 + $0x80] sm:$0xff]
  %v480 = vld [vmem:[%s462 + $0x88] sm:$0xff]
  %v481 = vld [vmem:[%s462 + $0x90] sm:$0xff]
  %v482 = vld [vmem:[%s462 + $0x98] sm:$0xff]
  %v483 = vld [vmem:[%s462 + $0xa0] sm:$0xff]
  %v484 = vld [vmem:[%s462 + $0xa8] sm:$0xff]
  %v485 = vld [vmem:[%s462 + $0xb0] sm:$0xf]
  %s486 = scalar_lea.vmem %s14, 1288
  %v487 = vld [vmem:[%s486] sm:$0xff]
  %v488 = vld [vmem:[%s486 + $0x8] sm:$0xff]
  %v489 = vld [vmem:[%s486 + $0x10] sm:$0xff]
  %v490 = vld [vmem:[%s486 + $0x18] sm:$0xff]
  %v491 = vld [vmem:[%s486 + $0x20] sm:$0xff]
  %v492 = vld [vmem:[%s486 + $0x28] sm:$0xff]
  %v493 = vld [vmem:[%s486 + $0x30] sm:$0xff]
  %v494 = vld [vmem:[%s486 + $0x38] sm:$0xff]
  %v495 = vld [vmem:[%s486 + $0x40] sm:$0xff]
  %v496 = vld [vmem:[%s486 + $0x48] sm:$0xff]
  %v497 = vld [vmem:[%s486 + $0x50] sm:$0xff]
  %v498 = vld [vmem:[%s486 + $0x58] sm:$0xff]
  %v499 = vld [vmem:[%s486 + $0x60] sm:$0xff]
  %v500 = vld [vmem:[%s486 + $0x68] sm:$0xff]
  %v501 = vld [vmem:[%s486 + $0x70] sm:$0xff]
  %v502 = vld [vmem:[%s486 + $0x78] sm:$0xff]
  %v503 = vld [vmem:[%s486 + $0x80] sm:$0xff]
  %v504 = vld [vmem:[%s486 + $0x88] sm:$0xff]
  %v505 = vld [vmem:[%s486 + $0x90] sm:$0xff]
  %v506 = vld [vmem:[%s486 + $0x98] sm:$0xff]
  %v507 = vld [vmem:[%s486 + $0xa0] sm:$0xff]
  %v508 = vld [vmem:[%s486 + $0xa8] sm:$0xff]
  %v509 = vld [vmem:[%s486 + $0xb0] sm:$0xf]
  %s510 = scalar_lea.vmem %s14, 1472
  %v511 = vld [vmem:[%s510] sm:$0xff]
  %v512 = vld [vmem:[%s510 + $0x8] sm:$0xff]
  %v513 = vld [vmem:[%s510 + $0x10] sm:$0xff]
  %v514 = vld [vmem:[%s510 + $0x18] sm:$0xff]
  %v515 = vld [vmem:[%s510 + $0x20] sm:$0xff]
  %v516 = vld [vmem:[%s510 + $0x28] sm:$0xff]
  %v517 = vld [vmem:[%s510 + $0x30] sm:$0xff]
  %v518 = vld [vmem:[%s510 + $0x38] sm:$0xff]
  %v519 = vld [vmem:[%s510 + $0x40] sm:$0xff]
  %v520 = vld [vmem:[%s510 + $0x48] sm:$0xff]
  %v521 = vld [vmem:[%s510 + $0x50] sm:$0xff]
  %v522 = vld [vmem:[%s510 + $0x58] sm:$0xff]
  %v523 = vld [vmem:[%s510 + $0x60] sm:$0xff]
  %v524 = vld [vmem:[%s510 + $0x68] sm:$0xff]
  %v525 = vld [vmem:[%s510 + $0x70] sm:$0xff]
  %v526 = vld [vmem:[%s510 + $0x78] sm:$0xff]
  %v527 = vld [vmem:[%s510 + $0x80] sm:$0xff]
  %v528 = vld [vmem:[%s510 + $0x88] sm:$0xff]
  %v529 = vld [vmem:[%s510 + $0x90] sm:$0xff]
  %v530 = vld [vmem:[%s510 + $0x98] sm:$0xff]
  %v531 = vld [vmem:[%s510 + $0xa0] sm:$0xff]
  %v532 = vld [vmem:[%s510 + $0xa8] sm:$0xff]
  %v533 = vld [vmem:[%s510 + $0xb0] sm:$0xf]
  %s534 = scalar_lea.vmem %s14, 1656
  %v535 = vld [vmem:[%s534] sm:$0xff]
  %v536 = vld [vmem:[%s534 + $0x8] sm:$0xff]
  %v537 = vld [vmem:[%s534 + $0x10] sm:$0xff]
  %v538 = vld [vmem:[%s534 + $0x18] sm:$0xff]
  %v539 = vld [vmem:[%s534 + $0x20] sm:$0xff]
  %v540 = vld [vmem:[%s534 + $0x28] sm:$0xff]
  %v541 = vld [vmem:[%s534 + $0x30] sm:$0xff]
  %v542 = vld [vmem:[%s534 + $0x38] sm:$0xff]
  %v543 = vld [vmem:[%s534 + $0x40] sm:$0xff]
  %v544 = vld [vmem:[%s534 + $0x48] sm:$0xff]
  %v545 = vld [vmem:[%s534 + $0x50] sm:$0xff]
  %v546 = vld [vmem:[%s534 + $0x58] sm:$0xff]
  %v547 = vld [vmem:[%s534 + $0x60] sm:$0xff]
  %v548 = vld [vmem:[%s534 + $0x68] sm:$0xff]
  %v549 = vld [vmem:[%s534 + $0x70] sm:$0xff]
  %v550 = vld [vmem:[%s534 + $0x78] sm:$0xff]
  %v551 = vld [vmem:[%s534 + $0x80] sm:$0xff]
  %v552 = vld [vmem:[%s534 + $0x88] sm:$0xff]
  %v553 = vld [vmem:[%s534 + $0x90] sm:$0xff]
  %v554 = vld [vmem:[%s534 + $0x98] sm:$0xff]
  %v555 = vld [vmem:[%s534 + $0xa0] sm:$0xff]
  %v556 = vld [vmem:[%s534 + $0xa8] sm:$0xff]
  %v557 = vld [vmem:[%s534 + $0xb0] sm:$0xf]
  %s558 = scalar_lea.vmem %s14, 1840
  %v559 = vld [vmem:[%s558] sm:$0xff]
  %v560 = vld [vmem:[%s558 + $0x8] sm:$0xff]
  %v561 = vld [vmem:[%s558 + $0x10] sm:$0xff]
  %v562 = vld [vmem:[%s558 + $0x18] sm:$0xff]
  %v563 = vld [vmem:[%s558 + $0x20] sm:$0xff]
  %v564 = vld [vmem:[%s558 + $0x28] sm:$0xff]
  %v565 = vld [vmem:[%s558 + $0x30] sm:$0xff]
  %v566 = vld [vmem:[%s558 + $0x38] sm:$0xff]
  %v567 = vld [vmem:[%s558 + $0x40] sm:$0xff]
  %v568 = vld [vmem:[%s558 + $0x48] sm:$0xff]
  %v569 = vld [vmem:[%s558 + $0x50] sm:$0xff]
  %v570 = vld [vmem:[%s558 + $0x58] sm:$0xff]
  %v571 = vld [vmem:[%s558 + $0x60] sm:$0xff]
  %v572 = vld [vmem:[%s558 + $0x68] sm:$0xff]
  %v573 = vld [vmem:[%s558 + $0x70] sm:$0xff]
  %v574 = vld [vmem:[%s558 + $0x78] sm:$0xff]
  %v575 = vld [vmem:[%s558 + $0x80] sm:$0xff]
  %v576 = vld [vmem:[%s558 + $0x88] sm:$0xff]
  %v577 = vld [vmem:[%s558 + $0x90] sm:$0xff]
  %v578 = vld [vmem:[%s558 + $0x98] sm:$0xff]
  %v579 = vld [vmem:[%s558 + $0xa0] sm:$0xff]
  %v580 = vld [vmem:[%s558 + $0xa8] sm:$0xff]
  %v581 = vld [vmem:[%s558 + $0xb0] sm:$0xf]
  %s582 = scalar_lea.vmem %s14, 2024
  %v583 = vld [vmem:[%s582] sm:$0xff]
  %v584 = vld [vmem:[%s582 + $0x8] sm:$0xff]
  %v585 = vld [vmem:[%s582 + $0x10] sm:$0xff]
  %v586 = vld [vmem:[%s582 + $0x18] sm:$0xff]
  %v587 = vld [vmem:[%s582 + $0x20] sm:$0xff]
  %v588 = vld [vmem:[%s582 + $0x28] sm:$0xff]
  %v589 = vld [vmem:[%s582 + $0x30] sm:$0xff]
  %v590 = vld [vmem:[%s582 + $0x38] sm:$0xff]
  %v591 = vld [vmem:[%s582 + $0x40] sm:$0xff]
  %v592 = vld [vmem:[%s582 + $0x48] sm:$0xff]
  %v593 = vld [vmem:[%s582 + $0x50] sm:$0xff]
  %v594 = vld [vmem:[%s582 + $0x58] sm:$0xff]
  %v595 = vld [vmem:[%s582 + $0x60] sm:$0xff]
  %v596 = vld [vmem:[%s582 + $0x68] sm:$0xff]
  %v597 = vld [vmem:[%s582 + $0x70] sm:$0xff]
  %v598 = vld [vmem:[%s582 + $0x78] sm:$0xff]
  %v599 = vld [vmem:[%s582 + $0x80] sm:$0xff]
  %v600 = vld [vmem:[%s582 + $0x88] sm:$0xff]
  %v601 = vld [vmem:[%s582 + $0x90] sm:$0xff]
  %v602 = vld [vmem:[%s582 + $0x98] sm:$0xff]
  %v603 = vld [vmem:[%s582 + $0xa0] sm:$0xff]
  %v604 = vld [vmem:[%s582 + $0xa8] sm:$0xff]
  %v605 = vld [vmem:[%s582 + $0xb0] sm:$0xf]
  %v606 = vld [vmem:[%s3] sm:$0xff]
  %v607 = vld [vmem:[%s3 + $0x8] sm:$0xff]
  %v608 = vld [vmem:[%s3 + $0x10] sm:$0xff]
  %v609 = vld [vmem:[%s3 + $0x18] sm:$0xff]
  %v610 = vld [vmem:[%s3 + $0x20] sm:$0xff]
  %v611 = vld [vmem:[%s3 + $0x28] sm:$0xff]
  %v612 = vld [vmem:[%s3 + $0x30] sm:$0xff]
  %v613 = vld [vmem:[%s3 + $0x38] sm:$0xff]
  %v614 = vld [vmem:[%s3 + $0x40] sm:$0xff]
  %v615 = vld [vmem:[%s3 + $0x48] sm:$0xff]
  %v616 = vld [vmem:[%s3 + $0x50] sm:$0xff]
  %v617 = vld [vmem:[%s3 + $0x58] sm:$0xff]
  %v618 = vld [vmem:[%s3 + $0x60] sm:$0xff]
  %v619 = vld [vmem:[%s3 + $0x68] sm:$0xff]
  %v620 = vld [vmem:[%s3 + $0x70] sm:$0xff]
  %v621 = vld [vmem:[%s3 + $0x78] sm:$0xff]
  %v622 = vld [vmem:[%s3 + $0x80] sm:$0xff]
  %v623 = vld [vmem:[%s3 + $0x88] sm:$0xff]
  %v624 = vld [vmem:[%s3 + $0x90] sm:$0xff]
  %v625 = vld [vmem:[%s3 + $0x98] sm:$0xff]
  %v626 = vld [vmem:[%s3 + $0xa0] sm:$0x3]
  %v627 = vld [vmem:[%s4] sm:$0xff]
  %v628 = vld [vmem:[%s4 + $0x8] sm:$0xff]
  %v629 = vld [vmem:[%s4 + $0x10] sm:$0xff]
  %v630 = vld [vmem:[%s4 + $0x18] sm:$0xff]
  %v631 = vld [vmem:[%s4 + $0x20] sm:$0x3]
  %v632 = vld [vmem:[%s4 + $0x28] sm:$0x3]
  %v633 = vld [vmem:[%s5] sm:$0x1]
  %v634 = vld [vmem:[%s6] sm:$0x1]
  %v635 = vld [vmem:[%s9] sm:$0xff]
  %v636 = vld [vmem:[%s9 + $0x8] sm:$0xff]
  %v637 = vld [vmem:[%s9 + $0x10] sm:$0xff]
  %v638 = vld [vmem:[%s9 + $0x18] sm:$0xff]
  %v639 = vld [vmem:[%s9 + $0x20] sm:$0xff]
  %v640 = vld [vmem:[%s9 + $0x28] sm:$0xff]
  %v641 = vld [vmem:[%s9 + $0x30] sm:$0xff]
  %v642 = vld [vmem:[%s9 + $0x38] sm:$0xff]
  %v643 = vld [vmem:[%s9 + $0x40] sm:$0xff]
  %v644 = vld [vmem:[%s9 + $0x48] sm:$0xff]
  %v645 = vld [vmem:[%s9 + $0x50] sm:$0xff]
  %v646 = vld [vmem:[%s9 + $0x58] sm:$0xff]
  %v647 = vld [vmem:[%s9 + $0x60] sm:$0xff]
  %v648 = vld [vmem:[%s9 + $0x68] sm:$0xff]
  %v649 = vld [vmem:[%s9 + $0x70] sm:$0xff]
  %v650 = vld [vmem:[%s9 + $0x78] sm:$0xff]
  %v651 = vld [vmem:[%s9 + $0x80] sm:$0xff]
  %v652 = vld [vmem:[%s9 + $0x88] sm:$0xff]
  %v653 = vld [vmem:[%s9 + $0x90] sm:$0xff]
  %v654 = vld [vmem:[%s9 + $0x98] sm:$0xff]
  %v655 = vld [vmem:[%s9 + $0xa0] sm:$0xff]
  %v656 = vld [vmem:[%s9 + $0xa8] sm:$0xff]
  %v657 = vld [vmem:[%s9 + $0xb0] sm:$0xf]
  %v658 = vld [vmem:[%s10] sm:$0xff]
  %v659 = vld [vmem:[%s10 + $0x8] sm:$0xff]
  %v660 = vld [vmem:[%s10 + $0x10] sm:$0xff]
  %v661 = vld [vmem:[%s10 + $0x18] sm:$0xff]
  %v662 = vld [vmem:[%s10 + $0x20] sm:$0xff]
  %v663 = vld [vmem:[%s10 + $0x28] sm:$0xff]
  %v664 = vld [vmem:[%s10 + $0x30] sm:$0xff]
  %v665 = vld [vmem:[%s10 + $0x38] sm:$0xff]
  %v666 = vld [vmem:[%s10 + $0x40] sm:$0xf]
  %v667 = vld [vmem:[%s10 + $0x48] sm:$0xf]
  %v668 = vld [vmem:[%s11] sm:$0x1]
  %v669 = vld [vmem:[%s12] sm:$0x1]
  %v670 = vld [vmem:[%s15] sm:$0xff]
  %v671 = vld [vmem:[%s15 + $0x8] sm:$0xff]
  %v672 = vld [vmem:[%s15 + $0x10] sm:$0x3]
  %v673 = vld [vmem:[%s16] sm:$0x1]
  %v674 = vld [vmem:[%s0] sm:$0xff]
  %v675 = vld [vmem:[%s0 + $0x8] sm:$0xff]
  %vm676 = vcmask 130048
  %v678 = vsel %vm676, %v56, 0
  %v681 = vsel %vm676, %v57, 0
  %683 = vmatpush.msra.mxu0 0.0
  %684 = vmatpush.msra.mxu0 0.0
  %685 = vmatpush.msra.mxu0 0.0
  %686 = vmatpush.msra.mxu0 0.0
  %687 = vmatpush.msra.mxu0 0.0
  %688 = vmatpush.msra.mxu0 0.0
  %689 = vmatpush.msra.mxu0 0.0
  %690 = vmatpush.msra.mxu0 0.0
  %691 = vmatpush.msra.mxu0 0.0
  %692 = vmatpush.msra.mxu0 0.0
  %693 = vmatpush.msra.mxu0 0.0
  %694 = vmatpush.msra.mxu0 0.0
  %695 = vmatpush.msra.mxu0 0.0
  %696 = vmatpush.msra.mxu0 0.0
  %697 = vmatpush.msra.mxu0 %v675
  %698 = vmatpush.msra.mxu0 %v674
  %699 = vmatmul.f32.gmra.mxu0 %v678
  %v700 = vpop.f32.mrf.mxu0
  %v701 = vadd.f32 0.0, %v700
  %702 = vmatmul.f32.gmra.mxu0 %v681
  %v703 = vpop.f32.mrf.mxu0
  %v704 = vadd.f32 0.0, %v703
  %705 = vdwg.mxu0
  %v707 = vsel %vm676, %v59, 0
  %v710 = vsel %vm676, %v60, 0
  %712 = vmatpush.msra.mxu0 0.0
  %713 = vmatpush.msra.mxu0 0.0
  %714 = vmatpush.msra.mxu0 0.0
  %715 = vmatpush.msra.mxu0 0.0
  %716 = vmatpush.msra.mxu0 0.0
  %717 = vmatpush.msra.mxu0 0.0
  %718 = vmatpush.msra.mxu0 0.0
  %719 = vmatpush.msra.mxu0 0.0
  %720 = vmatpush.msra.mxu0 0.0
  %721 = vmatpush.msra.mxu0 0.0
  %722 = vmatpush.msra.mxu0 0.0
  %723 = vmatpush.msra.mxu0 0.0
  %724 = vmatpush.msra.mxu0 0.0
  %725 = vmatpush.msra.mxu0 0.0
  %726 = vmatpush.msra.mxu0 %v675
  %727 = vmatpush.msra.mxu0 %v674
  %728 = vmatmul.f32.gmra.mxu0 %v707
  %v729 = vpop.f32.mrf.mxu0
  %v730 = vadd.f32 0.0, %v729
  %731 = vmatmul.f32.gmra.mxu0 %v710
  %v732 = vpop.f32.mrf.mxu0
  %v733 = vadd.f32 0.0, %v732
  %734 = vdwg.mxu0
  %vm735 = vcmask 523264
  %v737 = vsel %vm735, %v730, 0
  %v740 = vsel %vm735, %v733, 0
  %742 = vmatpush.msra.mxu0 0.0
  %743 = vmatpush.msra.mxu0 0.0
  %744 = vmatpush.msra.mxu0 0.0
  %745 = vmatpush.msra.mxu0 0.0
  %746 = vmatpush.msra.mxu0 0.0
  %747 = vmatpush.msra.mxu0 0.0
  %748 = vmatpush.msra.mxu0 0.0
  %749 = vmatpush.msra.mxu0 0.0
  %750 = vmatpush.msra.mxu0 %v98
  %751 = vmatpush.msra.mxu0 %v96
  %752 = vmatpush.msra.mxu0 %v94
  %753 = vmatpush.msra.mxu0 %v92
  %754 = vmatpush.msra.mxu0 %v90
  %755 = vmatpush.msra.mxu0 %v88
  %756 = vmatpush.msra.mxu0 %v86
  %757 = vmatpush.msra.mxu0 %v84
  %758 = vmatmul.f32.gmra.mxu0 %v737
  %v759 = vpop.f32.mrf.mxu0
  %v760 = vadd.f32 0.0, %v759
  %761 = vmatmul.f32.gmra.mxu0 %v740
  %v762 = vpop.f32.mrf.mxu0
  %v763 = vadd.f32 0.0, %v762
  %764 = vdwg.mxu0
  %765 = vmatpush.msra.mxu0 0.0
  %766 = vmatpush.msra.mxu0 0.0
  %767 = vmatpush.msra.mxu0 0.0
  %768 = vmatpush.msra.mxu0 0.0
  %769 = vmatpush.msra.mxu0 0.0
  %770 = vmatpush.msra.mxu0 0.0
  %771 = vmatpush.msra.mxu0 0.0
  %772 = vmatpush.msra.mxu0 0.0
  %773 = vmatpush.msra.mxu0 %v99
  %774 = vmatpush.msra.mxu0 %v97
  %775 = vmatpush.msra.mxu0 %v95
  %776 = vmatpush.msra.mxu0 %v93
  %777 = vmatpush.msra.mxu0 %v91
  %778 = vmatpush.msra.mxu0 %v89
  %779 = vmatpush.msra.mxu0 %v87
  %780 = vmatpush.msra.mxu0 %v85
  %781 = vmatmul.f32.gmra.mxu0 %v737
  %v782 = vpop.f32.mrf.mxu0
  %v783 = vadd.f32 0.0, %v782
  %784 = vmatmul.f32.gmra.mxu0 %v740
  %v785 = vpop.f32.mrf.mxu0
  %v786 = vadd.f32 0.0, %v785
  %787 = vdwg.mxu0
  %v789 = vsel %vm735, %v701, 0
  %v792 = vsel %vm735, %v704, 0
  %794 = vmatpush.msra.mxu0 0.0
  %795 = vmatpush.msra.mxu0 0.0
  %796 = vmatpush.msra.mxu0 0.0
  %797 = vmatpush.msra.mxu0 0.0
  %798 = vmatpush.msra.mxu0 0.0
  %799 = vmatpush.msra.mxu0 0.0
  %800 = vmatpush.msra.mxu0 0.0
  %801 = vmatpush.msra.mxu0 0.0
  %802 = vmatpush.msra.mxu0 %v81
  %803 = vmatpush.msra.mxu0 %v79
  %804 = vmatpush.msra.mxu0 %v77
  %805 = vmatpush.msra.mxu0 %v75
  %806 = vmatpush.msra.mxu0 %v73
  %807 = vmatpush.msra.mxu0 %v71
  %808 = vmatpush.msra.mxu0 %v69
  %809 = vmatpush.msra.mxu0 %v67
  %810 = vmatmul.f32.gmra.mxu0 %v789
  %v811 = vpop.f32.mrf.mxu0
  %v812 = vadd.f32 %v760, %v811
  %813 = vmatmul.f32.gmra.mxu0 %v792
  %v814 = vpop.f32.mrf.mxu0
  %v815 = vadd.f32 %v763, %v814
  %816 = vdwg.mxu0
  %817 = vmatpush.msra.mxu0 0.0
  %818 = vmatpush.msra.mxu0 0.0
  %819 = vmatpush.msra.mxu0 0.0
  %820 = vmatpush.msra.mxu0 0.0
  %821 = vmatpush.msra.mxu0 0.0
  %822 = vmatpush.msra.mxu0 0.0
  %823 = vmatpush.msra.mxu0 0.0
  %824 = vmatpush.msra.mxu0 0.0
  %825 = vmatpush.msra.mxu0 %v82
  %826 = vmatpush.msra.mxu0 %v80
  %827 = vmatpush.msra.mxu0 %v78
  %828 = vmatpush.msra.mxu0 %v76
  %829 = vmatpush.msra.mxu0 %v74
  %830 = vmatpush.msra.mxu0 %v72
  %831 = vmatpush.msra.mxu0 %v70
  %832 = vmatpush.msra.mxu0 %v68
  %833 = vmatmul.f32.gmra.mxu0 %v789
  %v834 = vpop.f32.mrf.mxu0
  %v835 = vadd.f32 %v783, %v834
  %836 = vmatmul.f32.gmra.mxu0 %v792
  %v837 = vpop.f32.mrf.mxu0
  %v838 = vadd.f32 %v786, %v837
  %839 = vdwg.mxu0
  %v841 = vsel %vm676, %v62, 0
  %v844 = vsel %vm676, %v63, 0
  %846 = vmatpush.msra.mxu0 0.0
  %847 = vmatpush.msra.mxu0 0.0
  %848 = vmatpush.msra.mxu0 0.0
  %849 = vmatpush.msra.mxu0 0.0
  %850 = vmatpush.msra.mxu0 0.0
  %851 = vmatpush.msra.mxu0 0.0
  %852 = vmatpush.msra.mxu0 0.0
  %853 = vmatpush.msra.mxu0 0.0
  %854 = vmatpush.msra.mxu0 0.0
  %855 = vmatpush.msra.mxu0 0.0
  %856 = vmatpush.msra.mxu0 0.0
  %857 = vmatpush.msra.mxu0 0.0
  %858 = vmatpush.msra.mxu0 0.0
  %859 = vmatpush.msra.mxu0 0.0
  %860 = vmatpush.msra.mxu0 %v675
  %861 = vmatpush.msra.mxu0 %v674
  %862 = vmatmul.f32.gmra.mxu0 %v841
  %v863 = vpop.f32.mrf.mxu0
  %v864 = vadd.f32 0.0, %v863
  %865 = vmatmul.f32.gmra.mxu0 %v844
  %v866 = vpop.f32.mrf.mxu0
  %v867 = vadd.f32 0.0, %v866
  %868 = vdwg.mxu0
  %v870 = vsel %vm735, %v864, 0
  %v873 = vsel %vm735, %v867, 0
  %875 = vmatpush.msra.mxu0 0.0
  %876 = vmatpush.msra.mxu0 0.0
  %877 = vmatpush.msra.mxu0 0.0
  %878 = vmatpush.msra.mxu0 0.0
  %879 = vmatpush.msra.mxu0 0.0
  %880 = vmatpush.msra.mxu0 0.0
  %881 = vmatpush.msra.mxu0 0.0
  %882 = vmatpush.msra.mxu0 0.0
  %883 = vmatpush.msra.mxu0 %v115
  %884 = vmatpush.msra.mxu0 %v113
  %885 = vmatpush.msra.mxu0 %v111
  %886 = vmatpush.msra.mxu0 %v109
  %887 = vmatpush.msra.mxu0 %v107
  %888 = vmatpush.msra.mxu0 %v105
  %889 = vmatpush.msra.mxu0 %v103
  %890 = vmatpush.msra.mxu0 %v101
  %891 = vmatmul.f32.gmra.mxu0 %v870
  %v892 = vpop.f32.mrf.mxu0
  %v893 = vadd.f32 0.0, %v892
  %894 = vmatmul.f32.gmra.mxu0 %v873
  %v895 = vpop.f32.mrf.mxu0
  %v896 = vadd.f32 0.0, %v895
  %897 = vdwg.mxu0
  %898 = vmatpush.msra.mxu0 0.0
  %899 = vmatpush.msra.mxu0 0.0
  %900 = vmatpush.msra.mxu0 0.0
  %901 = vmatpush.msra.mxu0 0.0
  %902 = vmatpush.msra.mxu0 0.0
  %903 = vmatpush.msra.mxu0 0.0
  %904 = vmatpush.msra.mxu0 0.0
  %905 = vmatpush.msra.mxu0 0.0
  %906 = vmatpush.msra.mxu0 %v116
  %907 = vmatpush.msra.mxu0 %v114
  %908 = vmatpush.msra.mxu0 %v112
  %909 = vmatpush.msra.mxu0 %v110
  %910 = vmatpush.msra.mxu0 %v108
  %911 = vmatpush.msra.mxu0 %v106
  %912 = vmatpush.msra.mxu0 %v104
  %913 = vmatpush.msra.mxu0 %v102
  %914 = vmatmul.f32.gmra.mxu0 %v870
  %v915 = vpop.f32.mrf.mxu0
  %v916 = vadd.f32 0.0, %v915
  %917 = vmatmul.f32.gmra.mxu0 %v873
  %v918 = vpop.f32.mrf.mxu0
  %v919 = vadd.f32 0.0, %v918
  %920 = vdwg.mxu0
  %v921 = vadd.f32 %v812, %v893
  %v922 = vadd.f32 %v835, %v916
  %v923 = vadd.f32 %v815, %v896
  %v924 = vadd.f32 %v838, %v919
  %v926 = vsel %vm676, %v65, 0
  %v929 = vsel %vm676, %v66, 0
  %931 = vmatpush.msra.mxu0 0.0
  %932 = vmatpush.msra.mxu0 0.0
  %933 = vmatpush.msra.mxu0 0.0
  %934 = vmatpush.msra.mxu0 0.0
  %935 = vmatpush.msra.mxu0 0.0
  %936 = vmatpush.msra.mxu0 0.0
  %937 = vmatpush.msra.mxu0 0.0
  %938 = vmatpush.msra.mxu0 0.0
  %939 = vmatpush.msra.mxu0 0.0
  %940 = vmatpush.msra.mxu0 0.0
  %941 = vmatpush.msra.mxu0 0.0
  %942 = vmatpush.msra.mxu0 0.0
  %943 = vmatpush.msra.mxu0 0.0
  %944 = vmatpush.msra.mxu0 0.0
  %945 = vmatpush.msra.mxu0 %v675
  %946 = vmatpush.msra.mxu0 %v674
  %947 = vmatmul.f32.gmra.mxu0 %v926
  %v948 = vpop.f32.mrf.mxu0
  %v949 = vadd.f32 0.0, %v948
  %950 = vmatmul.f32.gmra.mxu0 %v929
  %v951 = vpop.f32.mrf.mxu0
  %v952 = vadd.f32 0.0, %v951
  %953 = vdwg.mxu0
  %v955 = vsel %vm735, %v949, 0
  %v958 = vsel %vm735, %v952, 0
  %960 = vmatpush.msra.mxu0 0.0
  %961 = vmatpush.msra.mxu0 0.0
  %962 = vmatpush.msra.mxu0 0.0
  %963 = vmatpush.msra.mxu0 0.0
  %964 = vmatpush.msra.mxu0 0.0
  %965 = vmatpush.msra.mxu0 0.0
  %966 = vmatpush.msra.mxu0 0.0
  %967 = vmatpush.msra.mxu0 0.0
  %968 = vmatpush.msra.mxu0 %v132
  %969 = vmatpush.msra.mxu0 %v130
  %970 = vmatpush.msra.mxu0 %v128
  %971 = vmatpush.msra.mxu0 %v126
  %972 = vmatpush.msra.mxu0 %v124
  %973 = vmatpush.msra.mxu0 %v122
  %974 = vmatpush.msra.mxu0 %v120
  %975 = vmatpush.msra.mxu0 %v118
  %976 = vmatmul.f32.gmra.mxu0 %v955
  %v977 = vpop.f32.mrf.mxu0
  %v978 = vadd.f32 0.0, %v977
  %979 = vmatmul.f32.gmra.mxu0 %v958
  %v980 = vpop.f32.mrf.mxu0
  %v981 = vadd.f32 0.0, %v980
  %982 = vdwg.mxu0
  %983 = vmatpush.msra.mxu0 0.0
  %984 = vmatpush.msra.mxu0 0.0
  %985 = vmatpush.msra.mxu0 0.0
  %986 = vmatpush.msra.mxu0 0.0
  %987 = vmatpush.msra.mxu0 0.0
  %988 = vmatpush.msra.mxu0 0.0
  %989 = vmatpush.msra.mxu0 0.0
  %990 = vmatpush.msra.mxu0 0.0
  %991 = vmatpush.msra.mxu0 %v133
  %992 = vmatpush.msra.mxu0 %v131
  %993 = vmatpush.msra.mxu0 %v129
  %994 = vmatpush.msra.mxu0 %v127
  %995 = vmatpush.msra.mxu0 %v125
  %996 = vmatpush.msra.mxu0 %v123
  %997 = vmatpush.msra.mxu0 %v121
  %998 = vmatpush.msra.mxu0 %v119
  %999 = vmatmul.f32.gmra.mxu0 %v955
  %v1000 = vpop.f32.mrf.mxu0
  %v1001 = vadd.f32 0.0, %v1000
  %1002 = vmatmul.f32.gmra.mxu0 %v958
  %v1003 = vpop.f32.mrf.mxu0
  %v1004 = vadd.f32 0.0, %v1003
  %1005 = vdwg.mxu0
  %v1006 = vadd.f32 %v921, %v978
  %v1007 = vadd.f32 %v922, %v1001
  %v1008 = vadd.f32 %v923, %v981
  %v1009 = vadd.f32 %v924, %v1004
  %s1010 = scalar_lea.vmem %s0, 16
  %v1011 = vld [vmem:[%s1010] sm:$0xff]
  %v1012 = vld [vmem:[%s1010 + $0x8] sm:$0xff]
  %1013 = vmatpush.msra.mxu0 0.0
  %1014 = vmatpush.msra.mxu0 0.0
  %1015 = vmatpush.msra.mxu0 0.0
  %1016 = vmatpush.msra.mxu0 0.0
  %1017 = vmatpush.msra.mxu0 0.0
  %1018 = vmatpush.msra.mxu0 0.0
  %1019 = vmatpush.msra.mxu0 0.0
  %1020 = vmatpush.msra.mxu0 0.0
  %1021 = vmatpush.msra.mxu0 0.0
  %1022 = vmatpush.msra.mxu0 0.0
  %1023 = vmatpush.msra.mxu0 0.0
  %1024 = vmatpush.msra.mxu0 0.0
  %1025 = vmatpush.msra.mxu0 0.0
  %1026 = vmatpush.msra.mxu0 0.0
  %1027 = vmatpush.msra.mxu0 %v1012
  %1028 = vmatpush.msra.mxu0 %v1011
  %1029 = vmatmul.f32.gmra.mxu0 %v678
  %v1030 = vpop.f32.mrf.mxu0
  %v1031 = vadd.f32 0.0, %v1030
  %1032 = vmatmul.f32.gmra.mxu0 %v681
  %v1033 = vpop.f32.mrf.mxu0
  %v1034 = vadd.f32 0.0, %v1033
  %1035 = vdwg.mxu0
  %1036 = vmatpush.msra.mxu0 0.0
  %1037 = vmatpush.msra.mxu0 0.0
  %1038 = vmatpush.msra.mxu0 0.0
  %1039 = vmatpush.msra.mxu0 0.0
  %1040 = vmatpush.msra.mxu0 0.0
  %1041 = vmatpush.msra.mxu0 0.0
  %1042 = vmatpush.msra.mxu0 0.0
  %1043 = vmatpush.msra.mxu0 0.0
  %1044 = vmatpush.msra.mxu0 0.0
  %1045 = vmatpush.msra.mxu0 0.0
  %1046 = vmatpush.msra.mxu0 0.0
  %1047 = vmatpush.msra.mxu0 0.0
  %1048 = vmatpush.msra.mxu0 0.0
  %1049 = vmatpush.msra.mxu0 0.0
  %1050 = vmatpush.msra.mxu0 %v1012
  %1051 = vmatpush.msra.mxu0 %v1011
  %1052 = vmatmul.f32.gmra.mxu0 %v707
  %v1053 = vpop.f32.mrf.mxu0
  %v1054 = vadd.f32 0.0, %v1053
  %1055 = vmatmul.f32.gmra.mxu0 %v710
  %v1056 = vpop.f32.mrf.mxu0
  %v1057 = vadd.f32 0.0, %v1056
  %1058 = vdwg.mxu0
  %v1060 = vsel %vm735, %v1054, 0
  %v1063 = vsel %vm735, %v1057, 0
  %1065 = vmatpush.msra.mxu0 0.0
  %1066 = vmatpush.msra.mxu0 0.0
  %1067 = vmatpush.msra.mxu0 0.0
  %1068 = vmatpush.msra.mxu0 0.0
  %1069 = vmatpush.msra.mxu0 0.0
  %1070 = vmatpush.msra.mxu0 0.0
  %1071 = vmatpush.msra.mxu0 0.0
  %1072 = vmatpush.msra.mxu0 0.0
  %1073 = vmatpush.msra.mxu0 %v98
  %1074 = vmatpush.msra.mxu0 %v96
  %1075 = vmatpush.msra.mxu0 %v94
  %1076 = vmatpush.msra.mxu0 %v92
  %1077 = vmatpush.msra.mxu0 %v90
  %1078 = vmatpush.msra.mxu0 %v88
  %1079 = vmatpush.msra.mxu0 %v86
  %1080 = vmatpush.msra.mxu0 %v84
  %1081 = vmatmul.f32.gmra.mxu0 %v1060
  %v1082 = vpop.f32.mrf.mxu0
  %v1083 = vadd.f32 0.0, %v1082
  %1084 = vmatmul.f32.gmra.mxu0 %v1063
  %v1085 = vpop.f32.mrf.mxu0
  %v1086 = vadd.f32 0.0, %v1085
  %1087 = vdwg.mxu0
  %1088 = vmatpush.msra.mxu0 0.0
  %1089 = vmatpush.msra.mxu0 0.0
  %1090 = vmatpush.msra.mxu0 0.0
  %1091 = vmatpush.msra.mxu0 0.0
  %1092 = vmatpush.msra.mxu0 0.0
  %1093 = vmatpush.msra.mxu0 0.0
  %1094 = vmatpush.msra.mxu0 0.0
  %1095 = vmatpush.msra.mxu0 0.0
  %1096 = vmatpush.msra.mxu0 %v99
  %1097 = vmatpush.msra.mxu0 %v97
  %1098 = vmatpush.msra.mxu0 %v95
  %1099 = vmatpush.msra.mxu0 %v93
  %1100 = vmatpush.msra.mxu0 %v91
  %1101 = vmatpush.msra.mxu0 %v89
  %1102 = vmatpush.msra.mxu0 %v87
  %1103 = vmatpush.msra.mxu0 %v85
  %1104 = vmatmul.f32.gmra.mxu0 %v1060
  %v1105 = vpop.f32.mrf.mxu0
  %v1106 = vadd.f32 0.0, %v1105
  %1107 = vmatmul.f32.gmra.mxu0 %v1063
  %v1108 = vpop.f32.mrf.mxu0
  %v1109 = vadd.f32 0.0, %v1108
  %1110 = vdwg.mxu0
  %v1112 = vsel %vm735, %v1031, 0
  %v1115 = vsel %vm735, %v1034, 0
  %1117 = vmatpush.msra.mxu0 0.0
  %1118 = vmatpush.msra.mxu0 0.0
  %1119 = vmatpush.msra.mxu0 0.0
  %1120 = vmatpush.msra.mxu0 0.0
  %1121 = vmatpush.msra.mxu0 0.0
  %1122 = vmatpush.msra.mxu0 0.0
  %1123 = vmatpush.msra.mxu0 0.0
  %1124 = vmatpush.msra.mxu0 0.0
  %1125 = vmatpush.msra.mxu0 %v81
  %1126 = vmatpush.msra.mxu0 %v79
  %1127 = vmatpush.msra.mxu0 %v77
  %1128 = vmatpush.msra.mxu0 %v75
  %1129 = vmatpush.msra.mxu0 %v73
  %1130 = vmatpush.msra.mxu0 %v71
  %1131 = vmatpush.msra.mxu0 %v69
  %1132 = vmatpush.msra.mxu0 %v67
  %1133 = vmatmul.f32.gmra.mxu0 %v1112
  %v1134 = vpop.f32.mrf.mxu0
  %v1135 = vadd.f32 %v1083, %v1134
  %1136 = vmatmul.f32.gmra.mxu0 %v1115
  %v1137 = vpop.f32.mrf.mxu0
  %v1138 = vadd.f32 %v1086, %v1137
  %1139 = vdwg.mxu0
  %1140 = vmatpush.msra.mxu0 0.0
  %1141 = vmatpush.msra.mxu0 0.0
  %1142 = vmatpush.msra.mxu0 0.0
  %1143 = vmatpush.msra.mxu0 0.0
  %1144 = vmatpush.msra.mxu0 0.0
  %1145 = vmatpush.msra.mxu0 0.0
  %1146 = vmatpush.msra.mxu0 0.0
  %1147 = vmatpush.msra.mxu0 0.0
  %1148 = vmatpush.msra.mxu0 %v82
  %1149 = vmatpush.msra.mxu0 %v80
  %1150 = vmatpush.msra.mxu0 %v78
  %1151 = vmatpush.msra.mxu0 %v76
  %1152 = vmatpush.msra.mxu0 %v74
  %1153 = vmatpush.msra.mxu0 %v72
  %1154 = vmatpush.msra.mxu0 %v70
  %1155 = vmatpush.msra.mxu0 %v68
  %1156 = vmatmul.f32.gmra.mxu0 %v1112
  %v1157 = vpop.f32.mrf.mxu0
  %v1158 = vadd.f32 %v1106, %v1157
  %1159 = vmatmul.f32.gmra.mxu0 %v1115
  %v1160 = vpop.f32.mrf.mxu0
  %v1161 = vadd.f32 %v1109, %v1160
  %1162 = vdwg.mxu0
  %1163 = vmatpush.msra.mxu0 0.0
  %1164 = vmatpush.msra.mxu0 0.0
  %1165 = vmatpush.msra.mxu0 0.0
  %1166 = vmatpush.msra.mxu0 0.0
  %1167 = vmatpush.msra.mxu0 0.0
  %1168 = vmatpush.msra.mxu0 0.0
  %1169 = vmatpush.msra.mxu0 0.0
  %1170 = vmatpush.msra.mxu0 0.0
  %1171 = vmatpush.msra.mxu0 0.0
  %1172 = vmatpush.msra.mxu0 0.0
  %1173 = vmatpush.msra.mxu0 0.0
  %1174 = vmatpush.msra.mxu0 0.0
  %1175 = vmatpush.msra.mxu0 0.0
  %1176 = vmatpush.msra.mxu0 0.0
  %1177 = vmatpush.msra.mxu0 %v1012
  %1178 = vmatpush.msra.mxu0 %v1011
  %1179 = vmatmul.f32.gmra.mxu0 %v841
  %v1180 = vpop.f32.mrf.mxu0
  %v1181 = vadd.f32 0.0, %v1180
  %1182 = vmatmul.f32.gmra.mxu0 %v844
  %v1183 = vpop.f32.mrf.mxu0
  %v1184 = vadd.f32 0.0, %v1183
  %1185 = vdwg.mxu0
  %v1187 = vsel %vm735, %v1181, 0
  %v1190 = vsel %vm735, %v1184, 0
  %1192 = vmatpush.msra.mxu0 0.0
  %1193 = vmatpush.msra.mxu0 0.0
  %1194 = vmatpush.msra.mxu0 0.0
  %1195 = vmatpush.msra.mxu0 0.0
  %1196 = vmatpush.msra.mxu0 0.0
  %1197 = vmatpush.msra.mxu0 0.0
  %1198 = vmatpush.msra.mxu0 0.0
  %1199 = vmatpush.msra.mxu0 0.0
  %1200 = vmatpush.msra.mxu0 %v115
  %1201 = vmatpush.msra.mxu0 %v113
  %1202 = vmatpush.msra.mxu0 %v111
  %1203 = vmatpush.msra.mxu0 %v109
  %1204 = vmatpush.msra.mxu0 %v107
  %1205 = vmatpush.msra.mxu0 %v105
  %1206 = vmatpush.msra.mxu0 %v103
  %1207 = vmatpush.msra.mxu0 %v101
  %1208 = vmatmul.f32.gmra.mxu0 %v1187
  %v1209 = vpop.f32.mrf.mxu0
  %v1210 = vadd.f32 0.0, %v1209
  %1211 = vmatmul.f32.gmra.mxu0 %v1190
  %v1212 = vpop.f32.mrf.mxu0
  %v1213 = vadd.f32 0.0, %v1212
  %1214 = vdwg.mxu0
  %1215 = vmatpush.msra.mxu0 0.0
  %1216 = vmatpush.msra.mxu0 0.0
  %1217 = vmatpush.msra.mxu0 0.0
  %1218 = vmatpush.msra.mxu0 0.0
  %1219 = vmatpush.msra.mxu0 0.0
  %1220 = vmatpush.msra.mxu0 0.0
  %1221 = vmatpush.msra.mxu0 0.0
  %1222 = vmatpush.msra.mxu0 0.0
  %1223 = vmatpush.msra.mxu0 %v116
  %1224 = vmatpush.msra.mxu0 %v114
  %1225 = vmatpush.msra.mxu0 %v112
  %1226 = vmatpush.msra.mxu0 %v110
  %1227 = vmatpush.msra.mxu0 %v108
  %1228 = vmatpush.msra.mxu0 %v106
  %1229 = vmatpush.msra.mxu0 %v104
  %1230 = vmatpush.msra.mxu0 %v102
  %1231 = vmatmul.f32.gmra.mxu0 %v1187
  %v1232 = vpop.f32.mrf.mxu0
  %v1233 = vadd.f32 0.0, %v1232
  %1234 = vmatmul.f32.gmra.mxu0 %v1190
  %v1235 = vpop.f32.mrf.mxu0
  %v1236 = vadd.f32 0.0, %v1235
  %1237 = vdwg.mxu0
  %v1238 = vadd.f32 %v1135, %v1210
  %v1239 = vadd.f32 %v1158, %v1233
  %v1240 = vadd.f32 %v1138, %v1213
  %v1241 = vadd.f32 %v1161, %v1236
  %1242 = vmatpush.msra.mxu0 0.0
  %1243 = vmatpush.msra.mxu0 0.0
  %1244 = vmatpush.msra.mxu0 0.0
  %1245 = vmatpush.msra.mxu0 0.0
  %1246 = vmatpush.msra.mxu0 0.0
  %1247 = vmatpush.msra.mxu0 0.0
  %1248 = vmatpush.msra.mxu0 0.0
  %1249 = vmatpush.msra.mxu0 0.0
  %1250 = vmatpush.msra.mxu0 0.0
  %1251 = vmatpush.msra.mxu0 0.0
  %1252 = vmatpush.msra.mxu0 0.0
  %1253 = vmatpush.msra.mxu0 0.0
  %1254 = vmatpush.msra.mxu0 0.0
  %1255 = vmatpush.msra.mxu0 0.0
  %1256 = vmatpush.msra.mxu0 %v1012
  %1257 = vmatpush.msra.mxu0 %v1011
  %1258 = vmatmul.f32.gmra.mxu0 %v926
  %v1259 = vpop.f32.mrf.mxu0
  %v1260 = vadd.f32 0.0, %v1259
  %1261 = vmatmul.f32.gmra.mxu0 %v929
  %v1262 = vpop.f32.mrf.mxu0
  %v1263 = vadd.f32 0.0, %v1262
  %1264 = vdwg.mxu0
  %v1266 = vsel %vm735, %v1260, 0
  %v1269 = vsel %vm735, %v1263, 0
  %1271 = vmatpush.msra.mxu0 0.0
  %1272 = vmatpush.msra.mxu0 0.0
  %1273 = vmatpush.msra.mxu0 0.0
  %1274 = vmatpush.msra.mxu0 0.0
  %1275 = vmatpush.msra.mxu0 0.0
  %1276 = vmatpush.msra.mxu0 0.0
  %1277 = vmatpush.msra.mxu0 0.0
  %1278 = vmatpush.msra.mxu0 0.0
  %1279 = vmatpush.msra.mxu0 %v132
  %1280 = vmatpush.msra.mxu0 %v130
  %1281 = vmatpush.msra.mxu0 %v128
  %1282 = vmatpush.msra.mxu0 %v126
  %1283 = vmatpush.msra.mxu0 %v124
  %1284 = vmatpush.msra.mxu0 %v122
  %1285 = vmatpush.msra.mxu0 %v120
  %1286 = vmatpush.msra.mxu0 %v118
  %1287 = vmatmul.f32.gmra.mxu0 %v1266
  %v1288 = vpop.f32.mrf.mxu0
  %v1289 = vadd.f32 0.0, %v1288
  %1290 = vmatmul.f32.gmra.mxu0 %v1269
  %v1291 = vpop.f32.mrf.mxu0
  %v1292 = vadd.f32 0.0, %v1291
  %1293 = vdwg.mxu0
  %1294 = vmatpush.msra.mxu0 0.0
  %1295 = vmatpush.msra.mxu0 0.0
  %1296 = vmatpush.msra.mxu0 0.0
  %1297 = vmatpush.msra.mxu0 0.0
  %1298 = vmatpush.msra.mxu0 0.0
  %1299 = vmatpush.msra.mxu0 0.0
  %1300 = vmatpush.msra.mxu0 0.0
  %1301 = vmatpush.msra.mxu0 0.0
  %1302 = vmatpush.msra.mxu0 %v133
  %1303 = vmatpush.msra.mxu0 %v131
  %1304 = vmatpush.msra.mxu0 %v129
  %1305 = vmatpush.msra.mxu0 %v127
  %1306 = vmatpush.msra.mxu0 %v125
  %1307 = vmatpush.msra.mxu0 %v123
  %1308 = vmatpush.msra.mxu0 %v121
  %1309 = vmatpush.msra.mxu0 %v119
  %1310 = vmatmul.f32.gmra.mxu0 %v1266
  %v1311 = vpop.f32.mrf.mxu0
  %v1312 = vadd.f32 0.0, %v1311
  %1313 = vmatmul.f32.gmra.mxu0 %v1269
  %v1314 = vpop.f32.mrf.mxu0
  %v1315 = vadd.f32 0.0, %v1314
  %1316 = vdwg.mxu0
  %v1317 = vadd.f32 %v1238, %v1289
  %v1318 = vadd.f32 %v1239, %v1312
  %v1319 = vadd.f32 %v1240, %v1292
  %v1320 = vadd.f32 %v1241, %v1315
  %vm1321 = vcmask 1040384
  %v1322 = vsel %vm1321, %v1008, 0.0
  %v1323 = vadd.f32 %v1006, %v1322
  %v1324 = vrot.slane %v1323, 4
  %v1325 = vadd.f32 %v1323, %v1324
  %v1326 = vrot.slane %v1325, 2
  %v1327 = vadd.f32 %v1325, %v1326
  %v1328 = vrot.slane %v1327, 1
  %v1329 = vadd.f32 %v1327, %v1328
  %vm1330 = vcmask 277504
  %v1331 = vsel %vm1330, %v1007, 0.0
  %vm1332 = vcmask 270336
  %v1333 = vsel %vm1332, %v1009, 0.0
  %v1334 = vadd.f32 %v1331, %v1333
  %v1335 = vrot.slane %v1334, 4
  %v1336 = vadd.f32 %v1334, %v1335
  %v1337 = vrot.slane %v1336, 2
  %v1338 = vadd.f32 %v1336, %v1337
  %v1339 = vrot.slane %v1338, 1
  %v1340 = vadd.f32 %v1338, %v1339
  %v1341 = vmul.f32 %v1006, %v1006
  %v1342 = vmul.f32 %v1007, %v1007
  %v1343 = vmul.f32 %v1008, %v1008
  %v1344 = vmul.f32 %v1009, %v1009
  %v1345 = vsel %vm1321, %v1343, 0.0
  %v1346 = vadd.f32 %v1341, %v1345
  %v1347 = vrot.slane %v1346, 4
  %v1348 = vadd.f32 %v1346, %v1347
  %v1349 = vrot.slane %v1348, 2
  %v1350 = vadd.f32 %v1348, %v1349
  %v1351 = vrot.slane %v1350, 1
  %v1352 = vadd.f32 %v1350, %v1351
  %v1353 = vsel %vm1330, %v1342, 0.0
  %v1354 = vsel %vm1332, %v1344, 0.0
  %v1355 = vadd.f32 %v1353, %v1354
  %v1356 = vrot.slane %v1355, 4
  %v1357 = vadd.f32 %v1355, %v1356
  %v1358 = vrot.slane %v1357, 2
  %v1359 = vadd.f32 %v1357, %v1358
  %v1360 = vrot.slane %v1359, 1
  %v1361 = vadd.f32 %v1359, %v1360
  %v1362 = vsel %vm1321, %v1319, 0.0
  %v1363 = vadd.f32 %v1317, %v1362
  %v1364 = vrot.slane %v1363, 4
  %v1365 = vadd.f32 %v1363, %v1364
  %v1366 = vrot.slane %v1365, 2
  %v1367 = vadd.f32 %v1365, %v1366
  %v1368 = vrot.slane %v1367, 1
  %v1369 = vadd.f32 %v1367, %v1368
  %v1370 = vsel %vm1330, %v1318, 0.0
  %v1371 = vsel %vm1332, %v1320, 0.0
  %v1372 = vadd.f32 %v1370, %v1371
  %v1373 = vrot.slane %v1372, 4
  %v1374 = vadd.f32 %v1372, %v1373
  %v1375 = vrot.slane %v1374, 2
  %v1376 = vadd.f32 %v1374, %v1375
  %v1377 = vrot.slane %v1376, 1
  %v1378 = vadd.f32 %v1376, %v1377
  %v1380 = vsel %vm1330, %v1378, 0
  %vm1382 = vcmask 1041408
  %v1384 = vsel %vm1382, %v626, 0
  %1386 = vmatpush.msra.mxu0 %v621
  %1387 = vmatpush.msra.mxu0 %v620
  %1388 = vmatpush.msra.mxu0 %v619
  %1389 = vmatpush.msra.mxu0 %v618
  %1390 = vmatpush.msra.mxu0 %v617
  %1391 = vmatpush.msra.mxu0 %v616
  %1392 = vmatpush.msra.mxu0 %v615
  %1393 = vmatpush.msra.mxu0 %v614
  %1394 = vmatpush.msra.mxu0 %v613
  %1395 = vmatpush.msra.mxu0 %v612
  %1396 = vmatpush.msra.mxu0 %v611
  %1397 = vmatpush.msra.mxu0 %v610
  %1398 = vmatpush.msra.mxu0 %v609
  %1399 = vmatpush.msra.mxu0 %v608
  %1400 = vmatpush.msra.mxu0 %v607
  %1401 = vmatpush.msra.mxu0 %v606
  %1402 = vmatmul.f32.gmra.mxu0 %v1369
  %v1403 = vpop.f32.mrf.mxu0
  %v1404 = vadd.f32 0.0, %v1403
  %1405 = vdwg.mxu0
  %1406 = vmatpush.msra.mxu0 0.0
  %1407 = vmatpush.msra.mxu0 0.0
  %1408 = vmatpush.msra.mxu0 0.0
  %1409 = vmatpush.msra.mxu0 0.0
  %1410 = vmatpush.msra.mxu0 0.0
  %1411 = vmatpush.msra.mxu0 0.0
  %1412 = vmatpush.msra.mxu0 0.0
  %1413 = vmatpush.msra.mxu0 0.0
  %1414 = vmatpush.msra.mxu0 0.0
  %1415 = vmatpush.msra.mxu0 0.0
  %1416 = vmatpush.msra.mxu0 0.0
  %1417 = vmatpush.msra.mxu0 %v1384
  %1418 = vmatpush.msra.mxu0 %v625
  %1419 = vmatpush.msra.mxu0 %v624
  %1420 = vmatpush.msra.mxu0 %v623
  %1421 = vmatpush.msra.mxu0 %v622
  %1422 = vmatmul.f32.gmra.mxu0 %v1380
  %v1423 = vpop.f32.mrf.mxu0
  %v1424 = vadd.f32 %v1404, %v1423
  %1425 = vdwg.mxu0
  %v1426 = vmul.f32 %v1317, %v1317
  %v1427 = vmul.f32 %v1318, %v1318
  %v1428 = vmul.f32 %v1319, %v1319
  %v1429 = vmul.f32 %v1320, %v1320
  %v1430 = vsel %vm1321, %v1428, 0.0
  %v1431 = vadd.f32 %v1426, %v1430
  %v1432 = vrot.slane %v1431, 4
  %v1433 = vadd.f32 %v1431, %v1432
  %v1434 = vrot.slane %v1433, 2
  %v1435 = vadd.f32 %v1433, %v1434
  %v1436 = vrot.slane %v1435, 1
  %v1437 = vadd.f32 %v1435, %v1436
  %v1438 = vsel %vm1330, %v1427, 0.0
  %v1439 = vsel %vm1332, %v1429, 0.0
  %v1440 = vadd.f32 %v1438, %v1439
  %v1441 = vrot.slane %v1440, 4
  %v1442 = vadd.f32 %v1440, %v1441
  %v1443 = vrot.slane %v1442, 2
  %v1444 = vadd.f32 %v1442, %v1443
  %v1445 = vrot.slane %v1444, 1
  %v1446 = vadd.f32 %v1444, %v1445
  %v1448 = vsel %vm1330, %v1446, 0
  %1450 = vmatpush.msra.mxu0 %v621
  %1451 = vmatpush.msra.mxu0 %v620
  %1452 = vmatpush.msra.mxu0 %v619
  %1453 = vmatpush.msra.mxu0 %v618
  %1454 = vmatpush.msra.mxu0 %v617
  %1455 = vmatpush.msra.mxu0 %v616
  %1456 = vmatpush.msra.mxu0 %v615
  %1457 = vmatpush.msra.mxu0 %v614
  %1458 = vmatpush.msra.mxu0 %v613
  %1459 = vmatpush.msra.mxu0 %v612
  %1460 = vmatpush.msra.mxu0 %v611
  %1461 = vmatpush.msra.mxu0 %v610
  %1462 = vmatpush.msra.mxu0 %v609
  %1463 = vmatpush.msra.mxu0 %v608
  %1464 = vmatpush.msra.mxu0 %v607
  %1465 = vmatpush.msra.mxu0 %v606
  %1466 = vmatmul.f32.gmra.mxu0 %v1437
  %v1467 = vpop.f32.mrf.mxu0
  %v1468 = vadd.f32 0.0, %v1467
  %1469 = vdwg.mxu0
  %1470 = vmatpush.msra.mxu0 0.0
  %1471 = vmatpush.msra.mxu0 0.0
  %1472 = vmatpush.msra.mxu0 0.0
  %1473 = vmatpush.msra.mxu0 0.0
  %1474 = vmatpush.msra.mxu0 0.0
  %1475 = vmatpush.msra.mxu0 0.0
  %1476 = vmatpush.msra.mxu0 0.0
  %1477 = vmatpush.msra.mxu0 0.0
  %1478 = vmatpush.msra.mxu0 0.0
  %1479 = vmatpush.msra.mxu0 0.0
  %1480 = vmatpush.msra.mxu0 0.0
  %1481 = vmatpush.msra.mxu0 %v1384
  %1482 = vmatpush.msra.mxu0 %v625
  %1483 = vmatpush.msra.mxu0 %v624
  %1484 = vmatpush.msra.mxu0 %v623
  %1485 = vmatpush.msra.mxu0 %v622
  %1486 = vmatmul.f32.gmra.mxu0 %v1448
  %v1487 = vpop.f32.mrf.mxu0
  %v1488 = vadd.f32 %v1468, %v1487
  %1489 = vdwg.mxu0
  %v1491 = vsel %vm1330, %v1340, 0
  %1493 = vmatpush.msra.mxu0 %v621
  %1494 = vmatpush.msra.mxu0 %v620
  %1495 = vmatpush.msra.mxu0 %v619
  %1496 = vmatpush.msra.mxu0 %v618
  %1497 = vmatpush.msra.mxu0 %v617
  %1498 = vmatpush.msra.mxu0 %v616
  %1499 = vmatpush.msra.mxu0 %v615
  %1500 = vmatpush.msra.mxu0 %v614
  %1501 = vmatpush.msra.mxu0 %v613
  %1502 = vmatpush.msra.mxu0 %v612
  %1503 = vmatpush.msra.mxu0 %v611
  %1504 = vmatpush.msra.mxu0 %v610
  %1505 = vmatpush.msra.mxu0 %v609
  %1506 = vmatpush.msra.mxu0 %v608
  %1507 = vmatpush.msra.mxu0 %v607
  %1508 = vmatpush.msra.mxu0 %v606
  %1509 = vmatmul.f32.gmra.mxu0 %v1329
  %v1510 = vpop.f32.mrf.mxu0
  %v1511 = vadd.f32 %v1424, %v1510
  %1512 = vdwg.mxu0
  %1513 = vmatpush.msra.mxu0 0.0
  %1514 = vmatpush.msra.mxu0 0.0
  %1515 = vmatpush.msra.mxu0 0.0
  %1516 = vmatpush.msra.mxu0 0.0
  %1517 = vmatpush.msra.mxu0 0.0
  %1518 = vmatpush.msra.mxu0 0.0
  %1519 = vmatpush.msra.mxu0 0.0
  %1520 = vmatpush.msra.mxu0 0.0
  %1521 = vmatpush.msra.mxu0 0.0
  %1522 = vmatpush.msra.mxu0 0.0
  %1523 = vmatpush.msra.mxu0 0.0
  %1524 = vmatpush.msra.mxu0 %v1384
  %1525 = vmatpush.msra.mxu0 %v625
  %1526 = vmatpush.msra.mxu0 %v624
  %1527 = vmatpush.msra.mxu0 %v623
  %1528 = vmatpush.msra.mxu0 %v622
  %1529 = vmatmul.f32.gmra.mxu0 %v1491
  %v1530 = vpop.f32.mrf.mxu0
  %v1531 = vadd.f32 %v1511, %v1530
  %1532 = vdwg.mxu0
  %v1534 = vsel %vm1330, %v1361, 0
  %1536 = vmatpush.msra.mxu0 %v621
  %1537 = vmatpush.msra.mxu0 %v620
  %1538 = vmatpush.msra.mxu0 %v619
  %1539 = vmatpush.msra.mxu0 %v618
  %1540 = vmatpush.msra.mxu0 %v617
  %1541 = vmatpush.msra.mxu0 %v616
  %1542 = vmatpush.msra.mxu0 %v615
  %1543 = vmatpush.msra.mxu0 %v614
  %1544 = vmatpush.msra.mxu0 %v613
  %1545 = vmatpush.msra.mxu0 %v612
  %1546 = vmatpush.msra.mxu0 %v611
  %1547 = vmatpush.msra.mxu0 %v610
  %1548 = vmatpush.msra.mxu0 %v609
  %1549 = vmatpush.msra.mxu0 %v608
  %1550 = vmatpush.msra.mxu0 %v607
  %1551 = vmatpush.msra.mxu0 %v606
  %1552 = vmatmul.f32.gmra.mxu0 %v1352
  %v1553 = vpop.f32.mrf.mxu0
  %v1554 = vadd.f32 %v1488, %v1553
  %1555 = vdwg.mxu0
  %1556 = vmatpush.msra.mxu0 0.0
  %1557 = vmatpush.msra.mxu0 0.0
  %1558 = vmatpush.msra.mxu0 0.0
  %1559 = vmatpush.msra.mxu0 0.0
  %1560 = vmatpush.msra.mxu0 0.0
  %1561 = vmatpush.msra.mxu0 0.0
  %1562 = vmatpush.msra.mxu0 0.0
  %1563 = vmatpush.msra.mxu0 0.0
  %1564 = vmatpush.msra.mxu0 0.0
  %1565 = vmatpush.msra.mxu0 0.0
  %1566 = vmatpush.msra.mxu0 0.0
  %1567 = vmatpush.msra.mxu0 %v1384
  %1568 = vmatpush.msra.mxu0 %v625
  %1569 = vmatpush.msra.mxu0 %v624
  %1570 = vmatpush.msra.mxu0 %v623
  %1571 = vmatpush.msra.mxu0 %v622
  %1572 = vmatmul.f32.gmra.mxu0 %v1534
  %v1573 = vpop.f32.mrf.mxu0
  %v1574 = vadd.f32 %v1554, %v1573
  %1575 = vdwg.mxu0
  %v1576 = vmul.f32 %v1531, 0.0061728396
  %v1577 = vmul.f32 %v1574, 0.0061728396
  %v1578 = vmul.f32 %v1576, %v1576
  %v1579 = vsub.f32 %v1577, %v1578
  %v1580 = vadd.f32 %v1579, 1e-05
  %v1581 = vrsqrt.pop %v1580
  %v1582 = vmul.f32 %v1581, %v1580
  %v1583 = vmul.f32 %v1582, %v1581
  %v1584 = vmul.f32 0.5, %v1583
  %v1585 = vsub.f32 1.5, %v1584
  %v1586 = vmul.f32 %v1581, %v1585
  %vm1587 = vweird.f32 %v1580
  %vm1588 = vweird.f32 %v1581
  %vm1589 = vmor %vm1587, %vm1588
  %v1590 = vsel %vm1589, %v1581, %v1586
  %v1591 = vmul.f32 %v633, %v1590
  %v1592 = vmul.f32 %v1576, %v1591
  %v1593 = vsub.f32 %v634, %v1592
  %vm1594 = vcmask 146432
  %v1596 = vsel %vm1594, %v1591, 0
  %v1599 = vsel %vm1382, %v631, 0
  %v1602 = vsel %vm1382, %v632, 0
  %1604 = vmatpush.msra.mxu0 0.0
  %1605 = vmatpush.msra.mxu0 0.0
  %1606 = vmatpush.msra.mxu0 0.0
  %1607 = vmatpush.msra.mxu0 0.0
  %1608 = vmatpush.msra.mxu0 0.0
  %1609 = vmatpush.msra.mxu0 0.0
  %1610 = vmatpush.msra.mxu0 0.0
  %1611 = vmatpush.msra.mxu0 0.0
  %1612 = vmatpush.msra.mxu0 0.0
  %1613 = vmatpush.msra.mxu0 0.0
  %1614 = vmatpush.msra.mxu0 0.0
  %1615 = vmatpush.msra.mxu0 0.0
  %1616 = vmatpush.msra.mxu0 0.0
  %1617 = vmatpush.msra.mxu0 %v1599
  %1618 = vmatpush.msra.mxu0 %v629
  %1619 = vmatpush.msra.mxu0 %v627
  %1620 = vmatmul.f32.gmra.mxu0 %v1596
  %v1621 = vpop.f32.mrf.mxu0
  %v1622 = vadd.f32 0.0, %v1621
  %1623 = vdwg.mxu0
  %1624 = vmatpush.msra.mxu0 0.0
  %1625 = vmatpush.msra.mxu0 0.0
  %1626 = vmatpush.msra.mxu0 0.0
  %1627 = vmatpush.msra.mxu0 0.0
  %1628 = vmatpush.msra.mxu0 0.0
  %1629 = vmatpush.msra.mxu0 0.0
  %1630 = vmatpush.msra.mxu0 0.0
  %1631 = vmatpush.msra.mxu0 0.0
  %1632 = vmatpush.msra.mxu0 0.0
  %1633 = vmatpush.msra.mxu0 0.0
  %1634 = vmatpush.msra.mxu0 0.0
  %1635 = vmatpush.msra.mxu0 0.0
  %1636 = vmatpush.msra.mxu0 0.0
  %1637 = vmatpush.msra.mxu0 %v1602
  %1638 = vmatpush.msra.mxu0 %v630
  %1639 = vmatpush.msra.mxu0 %v628
  %1640 = vmatmul.f32.gmra.mxu0 %v1596
  %v1641 = vpop.f32.mrf.mxu0
  %v1642 = vadd.f32 0.0, %v1641
  %1643 = vdwg.mxu0
  %v1645 = vsel %vm1594, %v1593, 0
  %1647 = vmatpush.msra.mxu0 0.0
  %1648 = vmatpush.msra.mxu0 0.0
  %1649 = vmatpush.msra.mxu0 0.0
  %1650 = vmatpush.msra.mxu0 0.0
  %1651 = vmatpush.msra.mxu0 0.0
  %1652 = vmatpush.msra.mxu0 0.0
  %1653 = vmatpush.msra.mxu0 0.0
  %1654 = vmatpush.msra.mxu0 0.0
  %1655 = vmatpush.msra.mxu0 0.0
  %1656 = vmatpush.msra.mxu0 0.0
  %1657 = vmatpush.msra.mxu0 0.0
  %1658 = vmatpush.msra.mxu0 0.0
  %1659 = vmatpush.msra.mxu0 0.0
  %1660 = vmatpush.msra.mxu0 %v1599
  %1661 = vmatpush.msra.mxu0 %v629
  %1662 = vmatpush.msra.mxu0 %v627
  %1663 = vmatmul.f32.gmra.mxu0 %v1645
  %v1664 = vpop.f32.mrf.mxu0
  %v1665 = vadd.f32 0.0, %v1664
  %1666 = vdwg.mxu0
  %1667 = vmatpush.msra.mxu0 0.0
  %1668 = vmatpush.msra.mxu0 0.0
  %1669 = vmatpush.msra.mxu0 0.0
  %1670 = vmatpush.msra.mxu0 0.0
  %1671 = vmatpush.msra.mxu0 0.0
  %1672 = vmatpush.msra.mxu0 0.0
  %1673 = vmatpush.msra.mxu0 0.0
  %1674 = vmatpush.msra.mxu0 0.0
  %1675 = vmatpush.msra.mxu0 0.0
  %1676 = vmatpush.msra.mxu0 0.0
  %1677 = vmatpush.msra.mxu0 0.0
  %1678 = vmatpush.msra.mxu0 0.0
  %1679 = vmatpush.msra.mxu0 0.0
  %1680 = vmatpush.msra.mxu0 %v1602
  %1681 = vmatpush.msra.mxu0 %v630
  %1682 = vmatpush.msra.mxu0 %v628
  %1683 = vmatmul.f32.gmra.mxu0 %v1645
  %v1684 = vpop.f32.mrf.mxu0
  %v1685 = vadd.f32 0.0, %v1684
  %1686 = vdwg.mxu0
  %v1687 = vperm.slane %v1622, 0
  %v1688 = vperm.slane %v1642, 0
  %v1689 = vmul.f32 %v1006, %v1687
  %v1690 = vmul.f32 %v1007, %v1688
  %v1691 = vmul.f32 %v1008, %v1687
  %v1692 = vmul.f32 %v1009, %v1688
  %v1693 = vperm.slane %v1665, 0
  %v1694 = vperm.slane %v1685, 0
  %v1695 = vadd.f32 %v1689, %v1693
  %v1696 = vadd.f32 %v1690, %v1694
  %v1697 = vadd.f32 %v1691, %v1693
  %v1698 = vadd.f32 %v1692, %v1694
  %vm1699 = vcmp.gt.f32.partialorder %v1695, 0.0
  %vm1700 = vcmp.gt.f32.partialorder %v1696, 0.0
  %vm1701 = vcmp.gt.f32.partialorder %v1697, 0.0
  %vm1702 = vcmp.gt.f32.partialorder %v1698, 0.0
  %v1703 = vmul.f32 %v1695, 0.01
  %v1704 = vmul.f32 %v1696, 0.01
  %v1705 = vmul.f32 %v1697, 0.01
  %v1706 = vmul.f32 %v1698, 0.01
  %v1707 = vsel %vm1699, %v1695, %v1703
  %v1708 = vsel %vm1700, %v1696, %v1704
  %v1709 = vsel %vm1701, %v1697, %v1705
  %v1710 = vsel %vm1702, %v1698, %v1706
  %v1711 = vmul.f32 %v1317, %v1687
  %v1712 = vmul.f32 %v1318, %v1688
  %v1713 = vmul.f32 %v1319, %v1687
  %v1714 = vmul.f32 %v1320, %v1688
  %v1715 = vadd.f32 %v1711, %v1693
  %v1716 = vadd.f32 %v1712, %v1694
  %v1717 = vadd.f32 %v1713, %v1693
  %v1718 = vadd.f32 %v1714, %v1694
  %vm1719 = vcmp.gt.f32.partialorder %v1715, 0.0
  %vm1720 = vcmp.gt.f32.partialorder %v1716, 0.0
  %vm1721 = vcmp.gt.f32.partialorder %v1717, 0.0
  %vm1722 = vcmp.gt.f32.partialorder %v1718, 0.0
  %v1723 = vmul.f32 %v1715, 0.01
  %v1724 = vmul.f32 %v1716, 0.01
  %v1725 = vmul.f32 %v1717, 0.01
  %v1726 = vmul.f32 %v1718, 0.01
  %v1727 = vsel %vm1719, %v1715, %v1723
  %v1728 = vsel %vm1720, %v1716, %v1724
  %v1729 = vsel %vm1721, %v1717, %v1725
  %v1730 = vsel %vm1722, %v1718, %v1726
  %vm1731 = vcmask 72704
  %v1733 = vsel %vm1731, %v134, 0
  %v1736 = vsel %vm1321, %v1709, 0
  %v1739 = vsel %vm1321, %v1710, 0
  %1741 = vmatpush.msra.mxu0 0.0
  %1742 = vmatpush.msra.mxu0 0.0
  %1743 = vmatpush.msra.mxu0 0.0
  %1744 = vmatpush.msra.mxu0 0.0
  %1745 = vmatpush.msra.mxu0 0.0
  %1746 = vmatpush.msra.mxu0 0.0
  %1747 = vmatpush.msra.mxu0 0.0
  %1748 = vmatpush.msra.mxu0 0.0
  %1749 = vmatpush.msra.mxu0 0.0
  %1750 = vmatpush.msra.mxu0 0.0
  %1751 = vmatpush.msra.mxu0 0.0
  %1752 = vmatpush.msra.mxu0 0.0
  %1753 = vmatpush.msra.mxu0 0.0
  %1754 = vmatpush.msra.mxu0 0.0
  %1755 = vmatpush.msra.mxu0 %v1736
  %1756 = vmatpush.msra.mxu0 %v1707
  %1757 = vmatmul.f32.gmra.mxu0 %v1733
  %v1758 = vpop.f32.mrf.mxu0
  %v1759 = vadd.f32 0.0, %v1758
  %1760 = vdwg.mxu0
  %1761 = vmatpush.msra.mxu0 0.0
  %1762 = vmatpush.msra.mxu0 0.0
  %1763 = vmatpush.msra.mxu0 0.0
  %1764 = vmatpush.msra.mxu0 0.0
  %1765 = vmatpush.msra.mxu0 0.0
  %1766 = vmatpush.msra.mxu0 0.0
  %1767 = vmatpush.msra.mxu0 0.0
  %1768 = vmatpush.msra.mxu0 0.0
  %1769 = vmatpush.msra.mxu0 0.0
  %1770 = vmatpush.msra.mxu0 0.0
  %1771 = vmatpush.msra.mxu0 0.0
  %1772 = vmatpush.msra.mxu0 0.0
  %1773 = vmatpush.msra.mxu0 0.0
  %1774 = vmatpush.msra.mxu0 0.0
  %1775 = vmatpush.msra.mxu0 %v1739
  %1776 = vmatpush.msra.mxu0 %v1708
  %1777 = vmatmul.f32.gmra.mxu0 %v1733
  %v1778 = vpop.f32.mrf.mxu0
  %v1779 = vadd.f32 0.0, %v1778
  %1780 = vdwg.mxu0
  %v1782 = vsel %vm1731, %v136, 0
  %1784 = vmatpush.msra.mxu0 0.0
  %1785 = vmatpush.msra.mxu0 0.0
  %1786 = vmatpush.msra.mxu0 0.0
  %1787 = vmatpush.msra.mxu0 0.0
  %1788 = vmatpush.msra.mxu0 0.0
  %1789 = vmatpush.msra.mxu0 0.0
  %1790 = vmatpush.msra.mxu0 0.0
  %1791 = vmatpush.msra.mxu0 0.0
  %1792 = vmatpush.msra.mxu0 0.0
  %1793 = vmatpush.msra.mxu0 0.0
  %1794 = vmatpush.msra.mxu0 0.0
  %1795 = vmatpush.msra.mxu0 0.0
  %1796 = vmatpush.msra.mxu0 0.0
  %1797 = vmatpush.msra.mxu0 0.0
  %1798 = vmatpush.msra.mxu0 %v1736
  %1799 = vmatpush.msra.mxu0 %v1707
  %1800 = vmatmul.f32.gmra.mxu0 %v1782
  %v1801 = vpop.f32.mrf.mxu0
  %v1802 = vadd.f32 0.0, %v1801
  %1803 = vdwg.mxu0
  %1804 = vmatpush.msra.mxu0 0.0
  %1805 = vmatpush.msra.mxu0 0.0
  %1806 = vmatpush.msra.mxu0 0.0
  %1807 = vmatpush.msra.mxu0 0.0
  %1808 = vmatpush.msra.mxu0 0.0
  %1809 = vmatpush.msra.mxu0 0.0
  %1810 = vmatpush.msra.mxu0 0.0
  %1811 = vmatpush.msra.mxu0 0.0
  %1812 = vmatpush.msra.mxu0 0.0
  %1813 = vmatpush.msra.mxu0 0.0
  %1814 = vmatpush.msra.mxu0 0.0
  %1815 = vmatpush.msra.mxu0 0.0
  %1816 = vmatpush.msra.mxu0 0.0
  %1817 = vmatpush.msra.mxu0 0.0
  %1818 = vmatpush.msra.mxu0 %v1739
  %1819 = vmatpush.msra.mxu0 %v1708
  %1820 = vmatmul.f32.gmra.mxu0 %v1782
  %v1821 = vpop.f32.mrf.mxu0
  %v1822 = vadd.f32 0.0, %v1821
  %1823 = vdwg.mxu0
  %v1825 = vsel %vm1330, %v1822, 0
  %v1828 = vsel %vm1382, %v224, 0
  %v1831 = vsel %vm1382, %v225, 0
  %1833 = vmatpush.msra.mxu0 %v214
  %1834 = vmatpush.msra.mxu0 %v212
  %1835 = vmatpush.msra.mxu0 %v210
  %1836 = vmatpush.msra.mxu0 %v208
  %1837 = vmatpush.msra.mxu0 %v206
  %1838 = vmatpush.msra.mxu0 %v204
  %1839 = vmatpush.msra.mxu0 %v202
  %1840 = vmatpush.msra.mxu0 %v200
  %1841 = vmatpush.msra.mxu0 %v198
  %1842 = vmatpush.msra.mxu0 %v196
  %1843 = vmatpush.msra.mxu0 %v194
  %1844 = vmatpush.msra.mxu0 %v192
  %1845 = vmatpush.msra.mxu0 %v190
  %1846 = vmatpush.msra.mxu0 %v188
  %1847 = vmatpush.msra.mxu0 %v186
  %1848 = vmatpush.msra.mxu0 %v184
  %1849 = vmatmul.f32.gmra.mxu0 %v1802
  %v1850 = vpop.f32.mrf.mxu0
  %v1851 = vadd.f32 0.0, %v1850
  %1852 = vdwg.mxu0
  %1853 = vmatpush.msra.mxu0 0.0
  %1854 = vmatpush.msra.mxu0 0.0
  %1855 = vmatpush.msra.mxu0 0.0
  %1856 = vmatpush.msra.mxu0 0.0
  %1857 = vmatpush.msra.mxu0 0.0
  %1858 = vmatpush.msra.mxu0 0.0
  %1859 = vmatpush.msra.mxu0 0.0
  %1860 = vmatpush.msra.mxu0 0.0
  %1861 = vmatpush.msra.mxu0 0.0
  %1862 = vmatpush.msra.mxu0 0.0
  %1863 = vmatpush.msra.mxu0 0.0
  %1864 = vmatpush.msra.mxu0 %v1828
  %1865 = vmatpush.msra.mxu0 %v222
  %1866 = vmatpush.msra.mxu0 %v220
  %1867 = vmatpush.msra.mxu0 %v218
  %1868 = vmatpush.msra.mxu0 %v216
  %1869 = vmatmul.f32.gmra.mxu0 %v1825
  %v1870 = vpop.f32.mrf.mxu0
  %v1871 = vadd.f32 %v1851, %v1870
  %1872 = vdwg.mxu0
  %1873 = vmatpush.msra.mxu0 %v215
  %1874 = vmatpush.msra.mxu0 %v213
  %1875 = vmatpush.msra.mxu0 %v211
  %1876 = vmatpush.msra.mxu0 %v209
  %1877 = vmatpush.msra.mxu0 %v207
  %1878 = vmatpush.msra.mxu0 %v205
  %1879 = vmatpush.msra.mxu0 %v203
  %1880 = vmatpush.msra.mxu0 %v201
  %1881 = vmatpush.msra.mxu0 %v199
  %1882 = vmatpush.msra.mxu0 %v197
  %1883 = vmatpush.msra.mxu0 %v195
  %1884 = vmatpush.msra.mxu0 %v193
  %1885 = vmatpush.msra.mxu0 %v191
  %1886 = vmatpush.msra.mxu0 %v189
  %1887 = vmatpush.msra.mxu0 %v187
  %1888 = vmatpush.msra.mxu0 %v185
  %1889 = vmatmul.f32.gmra.mxu0 %v1802
  %v1890 = vpop.f32.mrf.mxu0
  %v1891 = vadd.f32 0.0, %v1890
  %1892 = vdwg.mxu0
  %1893 = vmatpush.msra.mxu0 0.0
  %1894 = vmatpush.msra.mxu0 0.0
  %1895 = vmatpush.msra.mxu0 0.0
  %1896 = vmatpush.msra.mxu0 0.0
  %1897 = vmatpush.msra.mxu0 0.0
  %1898 = vmatpush.msra.mxu0 0.0
  %1899 = vmatpush.msra.mxu0 0.0
  %1900 = vmatpush.msra.mxu0 0.0
  %1901 = vmatpush.msra.mxu0 0.0
  %1902 = vmatpush.msra.mxu0 0.0
  %1903 = vmatpush.msra.mxu0 0.0
  %1904 = vmatpush.msra.mxu0 %v1831
  %1905 = vmatpush.msra.mxu0 %v223
  %1906 = vmatpush.msra.mxu0 %v221
  %1907 = vmatpush.msra.mxu0 %v219
  %1908 = vmatpush.msra.mxu0 %v217
  %1909 = vmatmul.f32.gmra.mxu0 %v1825
  %v1910 = vpop.f32.mrf.mxu0
  %v1911 = vadd.f32 %v1891, %v1910
  %1912 = vdwg.mxu0
  %v1914 = vsel %vm1330, %v1779, 0
  %v1917 = vsel %vm1382, %v181, 0
  %v1920 = vsel %vm1382, %v182, 0
  %1922 = vmatpush.msra.mxu0 %v171
  %1923 = vmatpush.msra.mxu0 %v169
  %1924 = vmatpush.msra.mxu0 %v167
  %1925 = vmatpush.msra.mxu0 %v165
  %1926 = vmatpush.msra.mxu0 %v163
  %1927 = vmatpush.msra.mxu0 %v161
  %1928 = vmatpush.msra.mxu0 %v159
  %1929 = vmatpush.msra.mxu0 %v157
  %1930 = vmatpush.msra.mxu0 %v155
  %1931 = vmatpush.msra.mxu0 %v153
  %1932 = vmatpush.msra.mxu0 %v151
  %1933 = vmatpush.msra.mxu0 %v149
  %1934 = vmatpush.msra.mxu0 %v147
  %1935 = vmatpush.msra.mxu0 %v145
  %1936 = vmatpush.msra.mxu0 %v143
  %1937 = vmatpush.msra.mxu0 %v141
  %1938 = vmatmul.f32.gmra.mxu0 %v1759
  %v1939 = vpop.f32.mrf.mxu0
  %v1940 = vadd.f32 %v1871, %v1939
  %1941 = vdwg.mxu0
  %1942 = vmatpush.msra.mxu0 0.0
  %1943 = vmatpush.msra.mxu0 0.0
  %1944 = vmatpush.msra.mxu0 0.0
  %1945 = vmatpush.msra.mxu0 0.0
  %1946 = vmatpush.msra.mxu0 0.0
  %1947 = vmatpush.msra.mxu0 0.0
  %1948 = vmatpush.msra.mxu0 0.0
  %1949 = vmatpush.msra.mxu0 0.0
  %1950 = vmatpush.msra.mxu0 0.0
  %1951 = vmatpush.msra.mxu0 0.0
  %1952 = vmatpush.msra.mxu0 0.0
  %1953 = vmatpush.msra.mxu0 %v1917
  %1954 = vmatpush.msra.mxu0 %v179
  %1955 = vmatpush.msra.mxu0 %v177
  %1956 = vmatpush.msra.mxu0 %v175
  %1957 = vmatpush.msra.mxu0 %v173
  %1958 = vmatmul.f32.gmra.mxu0 %v1914
  %v1959 = vpop.f32.mrf.mxu0
  %v1960 = vadd.f32 %v1940, %v1959
  %1961 = vdwg.mxu0
  %1962 = vmatpush.msra.mxu0 %v172
  %1963 = vmatpush.msra.mxu0 %v170
  %1964 = vmatpush.msra.mxu0 %v168
  %1965 = vmatpush.msra.mxu0 %v166
  %1966 = vmatpush.msra.mxu0 %v164
  %1967 = vmatpush.msra.mxu0 %v162
  %1968 = vmatpush.msra.mxu0 %v160
  %1969 = vmatpush.msra.mxu0 %v158
  %1970 = vmatpush.msra.mxu0 %v156
  %1971 = vmatpush.msra.mxu0 %v154
  %1972 = vmatpush.msra.mxu0 %v152
  %1973 = vmatpush.msra.mxu0 %v150
  %1974 = vmatpush.msra.mxu0 %v148
  %1975 = vmatpush.msra.mxu0 %v146
  %1976 = vmatpush.msra.mxu0 %v144
  %1977 = vmatpush.msra.mxu0 %v142
  %1978 = vmatmul.f32.gmra.mxu0 %v1759
  %v1979 = vpop.f32.mrf.mxu0
  %v1980 = vadd.f32 %v1911, %v1979
  %1981 = vdwg.mxu0
  %1982 = vmatpush.msra.mxu0 0.0
  %1983 = vmatpush.msra.mxu0 0.0
  %1984 = vmatpush.msra.mxu0 0.0
  %1985 = vmatpush.msra.mxu0 0.0
  %1986 = vmatpush.msra.mxu0 0.0
  %1987 = vmatpush.msra.mxu0 0.0
  %1988 = vmatpush.msra.mxu0 0.0
  %1989 = vmatpush.msra.mxu0 0.0
  %1990 = vmatpush.msra.mxu0 0.0
  %1991 = vmatpush.msra.mxu0 0.0
  %1992 = vmatpush.msra.mxu0 0.0
  %1993 = vmatpush.msra.mxu0 %v1920
  %1994 = vmatpush.msra.mxu0 %v180
  %1995 = vmatpush.msra.mxu0 %v178
  %1996 = vmatpush.msra.mxu0 %v176
  %1997 = vmatpush.msra.mxu0 %v174
  %1998 = vmatmul.f32.gmra.mxu0 %v1914
  %v1999 = vpop.f32.mrf.mxu0
  %v2000 = vadd.f32 %v1980, %v1999
  %2001 = vdwg.mxu0
  %v2003 = vsel %vm1731, %v138, 0
  %2005 = vmatpush.msra.mxu0 0.0
  %2006 = vmatpush.msra.mxu0 0.0
  %2007 = vmatpush.msra.mxu0 0.0
  %2008 = vmatpush.msra.mxu0 0.0
  %2009 = vmatpush.msra.mxu0 0.0
  %2010 = vmatpush.msra.mxu0 0.0
  %2011 = vmatpush.msra.mxu0 0.0
  %2012 = vmatpush.msra.mxu0 0.0
  %2013 = vmatpush.msra.mxu0 0.0
  %2014 = vmatpush.msra.mxu0 0.0
  %2015 = vmatpush.msra.mxu0 0.0
  %2016 = vmatpush.msra.mxu0 0.0
  %2017 = vmatpush.msra.mxu0 0.0
  %2018 = vmatpush.msra.mxu0 0.0
  %2019 = vmatpush.msra.mxu0 %v1736
  %2020 = vmatpush.msra.mxu0 %v1707
  %2021 = vmatmul.f32.gmra.mxu0 %v2003
  %v2022 = vpop.f32.mrf.mxu0
  %v2023 = vadd.f32 0.0, %v2022
  %2024 = vdwg.mxu0
  %2025 = vmatpush.msra.mxu0 0.0
  %2026 = vmatpush.msra.mxu0 0.0
  %2027 = vmatpush.msra.mxu0 0.0
  %2028 = vmatpush.msra.mxu0 0.0
  %2029 = vmatpush.msra.mxu0 0.0
  %2030 = vmatpush.msra.mxu0 0.0
  %2031 = vmatpush.msra.mxu0 0.0
  %2032 = vmatpush.msra.mxu0 0.0
  %2033 = vmatpush.msra.mxu0 0.0
  %2034 = vmatpush.msra.mxu0 0.0
  %2035 = vmatpush.msra.mxu0 0.0
  %2036 = vmatpush.msra.mxu0 0.0
  %2037 = vmatpush.msra.mxu0 0.0
  %2038 = vmatpush.msra.mxu0 0.0
  %2039 = vmatpush.msra.mxu0 %v1739
  %2040 = vmatpush.msra.mxu0 %v1708
  %2041 = vmatmul.f32.gmra.mxu0 %v2003
  %v2042 = vpop.f32.mrf.mxu0
  %v2043 = vadd.f32 0.0, %v2042
  %2044 = vdwg.mxu0
  %v2046 = vsel %vm1330, %v2043, 0
  %v2049 = vsel %vm1382, %v267, 0
  %v2052 = vsel %vm1382, %v268, 0
  %2054 = vmatpush.msra.mxu0 %v257
  %2055 = vmatpush.msra.mxu0 %v255
  %2056 = vmatpush.msra.mxu0 %v253
  %2057 = vmatpush.msra.mxu0 %v251
  %2058 = vmatpush.msra.mxu0 %v249
  %2059 = vmatpush.msra.mxu0 %v247
  %2060 = vmatpush.msra.mxu0 %v245
  %2061 = vmatpush.msra.mxu0 %v243
  %2062 = vmatpush.msra.mxu0 %v241
  %2063 = vmatpush.msra.mxu0 %v239
  %2064 = vmatpush.msra.mxu0 %v237
  %2065 = vmatpush.msra.mxu0 %v235
  %2066 = vmatpush.msra.mxu0 %v233
  %2067 = vmatpush.msra.mxu0 %v231
  %2068 = vmatpush.msra.mxu0 %v229
  %2069 = vmatpush.msra.mxu0 %v227
  %2070 = vmatmul.f32.gmra.mxu0 %v2023
  %v2071 = vpop.f32.mrf.mxu0
  %v2072 = vadd.f32 0.0, %v2071
  %2073 = vdwg.mxu0
  %2074 = vmatpush.msra.mxu0 0.0
  %2075 = vmatpush.msra.mxu0 0.0
  %2076 = vmatpush.msra.mxu0 0.0
  %2077 = vmatpush.msra.mxu0 0.0
  %2078 = vmatpush.msra.mxu0 0.0
  %2079 = vmatpush.msra.mxu0 0.0
  %2080 = vmatpush.msra.mxu0 0.0
  %2081 = vmatpush.msra.mxu0 0.0
  %2082 = vmatpush.msra.mxu0 0.0
  %2083 = vmatpush.msra.mxu0 0.0
  %2084 = vmatpush.msra.mxu0 0.0
  %2085 = vmatpush.msra.mxu0 %v2049
  %2086 = vmatpush.msra.mxu0 %v265
  %2087 = vmatpush.msra.mxu0 %v263
  %2088 = vmatpush.msra.mxu0 %v261
  %2089 = vmatpush.msra.mxu0 %v259
  %2090 = vmatmul.f32.gmra.mxu0 %v2046
  %v2091 = vpop.f32.mrf.mxu0
  %v2092 = vadd.f32 %v2072, %v2091
  %2093 = vdwg.mxu0
  %2094 = vmatpush.msra.mxu0 %v258
  %2095 = vmatpush.msra.mxu0 %v256
  %2096 = vmatpush.msra.mxu0 %v254
  %2097 = vmatpush.msra.mxu0 %v252
  %2098 = vmatpush.msra.mxu0 %v250
  %2099 = vmatpush.msra.mxu0 %v248
  %2100 = vmatpush.msra.mxu0 %v246
  %2101 = vmatpush.msra.mxu0 %v244
  %2102 = vmatpush.msra.mxu0 %v242
  %2103 = vmatpush.msra.mxu0 %v240
  %2104 = vmatpush.msra.mxu0 %v238
  %2105 = vmatpush.msra.mxu0 %v236
  %2106 = vmatpush.msra.mxu0 %v234
  %2107 = vmatpush.msra.mxu0 %v232
  %2108 = vmatpush.msra.mxu0 %v230
  %2109 = vmatpush.msra.mxu0 %v228
  %2110 = vmatmul.f32.gmra.mxu0 %v2023
  %v2111 = vpop.f32.mrf.mxu0
  %v2112 = vadd.f32 0.0, %v2111
  %2113 = vdwg.mxu0
  %2114 = vmatpush.msra.mxu0 0.0
  %2115 = vmatpush.msra.mxu0 0.0
  %2116 = vmatpush.msra.mxu0 0.0
  %2117 = vmatpush.msra.mxu0 0.0
  %2118 = vmatpush.msra.mxu0 0.0
  %2119 = vmatpush.msra.mxu0 0.0
  %2120 = vmatpush.msra.mxu0 0.0
  %2121 = vmatpush.msra.mxu0 0.0
  %2122 = vmatpush.msra.mxu0 0.0
  %2123 = vmatpush.msra.mxu0 0.0
  %2124 = vmatpush.msra.mxu0 0.0
  %2125 = vmatpush.msra.mxu0 %v2052
  %2126 = vmatpush.msra.mxu0 %v266
  %2127 = vmatpush.msra.mxu0 %v264
  %2128 = vmatpush.msra.mxu0 %v262
  %2129 = vmatpush.msra.mxu0 %v260
  %2130 = vmatmul.f32.gmra.mxu0 %v2046
  %v2131 = vpop.f32.mrf.mxu0
  %v2132 = vadd.f32 %v2112, %v2131
  %2133 = vdwg.mxu0
  %v2134 = vadd.f32 %v1960, %v2092
  %v2135 = vadd.f32 %v2000, %v2132
  %v2137 = vsel %vm1731, %v140, 0
  %2139 = vmatpush.msra.mxu0 0.0
  %2140 = vmatpush.msra.mxu0 0.0
  %2141 = vmatpush.msra.mxu0 0.0
  %2142 = vmatpush.msra.mxu0 0.0
  %2143 = vmatpush.msra.mxu0 0.0
  %2144 = vmatpush.msra.mxu0 0.0
  %2145 = vmatpush.msra.mxu0 0.0
  %2146 = vmatpush.msra.mxu0 0.0
  %2147 = vmatpush.msra.mxu0 0.0
  %2148 = vmatpush.msra.mxu0 0.0
  %2149 = vmatpush.msra.mxu0 0.0
  %2150 = vmatpush.msra.mxu0 0.0
  %2151 = vmatpush.msra.mxu0 0.0
  %2152 = vmatpush.msra.mxu0 0.0
  %2153 = vmatpush.msra.mxu0 %v1736
  %2154 = vmatpush.msra.mxu0 %v1707
  %2155 = vmatmul.f32.gmra.mxu0 %v2137
  %v2156 = vpop.f32.mrf.mxu0
  %v2157 = vadd.f32 0.0, %v2156
  %2158 = vdwg.mxu0
  %2159 = vmatpush.msra.mxu0 0.0
  %2160 = vmatpush.msra.mxu0 0.0
  %2161 = vmatpush.msra.mxu0 0.0
  %2162 = vmatpush.msra.mxu0 0.0
  %2163 = vmatpush.msra.mxu0 0.0
  %2164 = vmatpush.msra.mxu0 0.0
  %2165 = vmatpush.msra.mxu0 0.0
  %2166 = vmatpush.msra.mxu0 0.0
  %2167 = vmatpush.msra.mxu0 0.0
  %2168 = vmatpush.msra.mxu0 0.0
  %2169 = vmatpush.msra.mxu0 0.0
  %2170 = vmatpush.msra.mxu0 0.0
  %2171 = vmatpush.msra.mxu0 0.0
  %2172 = vmatpush.msra.mxu0 0.0
  %2173 = vmatpush.msra.mxu0 %v1739
  %2174 = vmatpush.msra.mxu0 %v1708
  %2175 = vmatmul.f32.gmra.mxu0 %v2137
  %v2176 = vpop.f32.mrf.mxu0
  %v2177 = vadd.f32 0.0, %v2176
  %2178 = vdwg.mxu0
  %v2180 = vsel %vm1330, %v2177, 0
  %v2183 = vsel %vm1382, %v310, 0
  %v2186 = vsel %vm1382, %v311, 0
  %2188 = vmatpush.msra.mxu0 %v300
  %2189 = vmatpush.msra.mxu0 %v298
  %2190 = vmatpush.msra.mxu0 %v296
  %2191 = vmatpush.msra.mxu0 %v294
  %2192 = vmatpush.msra.mxu0 %v292
  %2193 = vmatpush.msra.mxu0 %v290
  %2194 = vmatpush.msra.mxu0 %v288
  %2195 = vmatpush.msra.mxu0 %v286
  %2196 = vmatpush.msra.mxu0 %v284
  %2197 = vmatpush.msra.mxu0 %v282
  %2198 = vmatpush.msra.mxu0 %v280
  %2199 = vmatpush.msra.mxu0 %v278
  %2200 = vmatpush.msra.mxu0 %v276
  %2201 = vmatpush.msra.mxu0 %v274
  %2202 = vmatpush.msra.mxu0 %v272
  %2203 = vmatpush.msra.mxu0 %v270
  %2204 = vmatmul.f32.gmra.mxu0 %v2157
  %v2205 = vpop.f32.mrf.mxu0
  %v2206 = vadd.f32 0.0, %v2205
  %2207 = vdwg.mxu0
  %2208 = vmatpush.msra.mxu0 0.0
  %2209 = vmatpush.msra.mxu0 0.0
  %2210 = vmatpush.msra.mxu0 0.0
  %2211 = vmatpush.msra.mxu0 0.0
  %2212 = vmatpush.msra.mxu0 0.0
  %2213 = vmatpush.msra.mxu0 0.0
  %2214 = vmatpush.msra.mxu0 0.0
  %2215 = vmatpush.msra.mxu0 0.0
  %2216 = vmatpush.msra.mxu0 0.0
  %2217 = vmatpush.msra.mxu0 0.0
  %2218 = vmatpush.msra.mxu0 0.0
  %2219 = vmatpush.msra.mxu0 %v2183
  %2220 = vmatpush.msra.mxu0 %v308
  %2221 = vmatpush.msra.mxu0 %v306
  %2222 = vmatpush.msra.mxu0 %v304
  %2223 = vmatpush.msra.mxu0 %v302
  %2224 = vmatmul.f32.gmra.mxu0 %v2180
  %v2225 = vpop.f32.mrf.mxu0
  %v2226 = vadd.f32 %v2206, %v2225
  %2227 = vdwg.mxu0
  %2228 = vmatpush.msra.mxu0 %v301
  %2229 = vmatpush.msra.mxu0 %v299
  %2230 = vmatpush.msra.mxu0 %v297
  %2231 = vmatpush.msra.mxu0 %v295
  %2232 = vmatpush.msra.mxu0 %v293
  %2233 = vmatpush.msra.mxu0 %v291
  %2234 = vmatpush.msra.mxu0 %v289
  %2235 = vmatpush.msra.mxu0 %v287
  %2236 = vmatpush.msra.mxu0 %v285
  %2237 = vmatpush.msra.mxu0 %v283
  %2238 = vmatpush.msra.mxu0 %v281
  %2239 = vmatpush.msra.mxu0 %v279
  %2240 = vmatpush.msra.mxu0 %v277
  %2241 = vmatpush.msra.mxu0 %v275
  %2242 = vmatpush.msra.mxu0 %v273
  %2243 = vmatpush.msra.mxu0 %v271
  %2244 = vmatmul.f32.gmra.mxu0 %v2157
  %v2245 = vpop.f32.mrf.mxu0
  %v2246 = vadd.f32 0.0, %v2245
  %2247 = vdwg.mxu0
  %2248 = vmatpush.msra.mxu0 0.0
  %2249 = vmatpush.msra.mxu0 0.0
  %2250 = vmatpush.msra.mxu0 0.0
  %2251 = vmatpush.msra.mxu0 0.0
  %2252 = vmatpush.msra.mxu0 0.0
  %2253 = vmatpush.msra.mxu0 0.0
  %2254 = vmatpush.msra.mxu0 0.0
  %2255 = vmatpush.msra.mxu0 0.0
  %2256 = vmatpush.msra.mxu0 0.0
  %2257 = vmatpush.msra.mxu0 0.0
  %2258 = vmatpush.msra.mxu0 0.0
  %2259 = vmatpush.msra.mxu0 %v2186
  %2260 = vmatpush.msra.mxu0 %v309
  %2261 = vmatpush.msra.mxu0 %v307
  %2262 = vmatpush.msra.mxu0 %v305
  %2263 = vmatpush.msra.mxu0 %v303
  %2264 = vmatmul.f32.gmra.mxu0 %v2180
  %v2265 = vpop.f32.mrf.mxu0
  %v2266 = vadd.f32 %v2246, %v2265
  %2267 = vdwg.mxu0
  %v2268 = vadd.f32 %v2134, %v2226
  %v2269 = vadd.f32 %v2135, %v2266
  %v2271 = vsel %vm1321, %v1729, 0
  %v2274 = vsel %vm1321, %v1730, 0
  %2276 = vmatpush.msra.mxu0 0.0
  %2277 = vmatpush.msra.mxu0 0.0
  %2278 = vmatpush.msra.mxu0 0.0
  %2279 = vmatpush.msra.mxu0 0.0
  %2280 = vmatpush.msra.mxu0 0.0
  %2281 = vmatpush.msra.mxu0 0.0
  %2282 = vmatpush.msra.mxu0 0.0
  %2283 = vmatpush.msra.mxu0 0.0
  %2284 = vmatpush.msra.mxu0 0.0
  %2285 = vmatpush.msra.mxu0 0.0
  %2286 = vmatpush.msra.mxu0 0.0
  %2287 = vmatpush.msra.mxu0 0.0
  %2288 = vmatpush.msra.mxu0 0.0
  %2289 = vmatpush.msra.mxu0 0.0
  %2290 = vmatpush.msra.mxu0 %v2271
  %2291 = vmatpush.msra.mxu0 %v1727
  %2292 = vmatmul.f32.gmra.mxu0 %v1733
  %v2293 = vpop.f32.mrf.mxu0
  %v2294 = vadd.f32 0.0, %v2293
  %2295 = vdwg.mxu0
  %2296 = vmatpush.msra.mxu0 0.0
  %2297 = vmatpush.msra.mxu0 0.0
  %2298 = vmatpush.msra.mxu0 0.0
  %2299 = vmatpush.msra.mxu0 0.0
  %2300 = vmatpush.msra.mxu0 0.0
  %2301 = vmatpush.msra.mxu0 0.0
  %2302 = vmatpush.msra.mxu0 0.0
  %2303 = vmatpush.msra.mxu0 0.0
  %2304 = vmatpush.msra.mxu0 0.0
  %2305 = vmatpush.msra.mxu0 0.0
  %2306 = vmatpush.msra.mxu0 0.0
  %2307 = vmatpush.msra.mxu0 0.0
  %2308 = vmatpush.msra.mxu0 0.0
  %2309 = vmatpush.msra.mxu0 0.0
  %2310 = vmatpush.msra.mxu0 %v2274
  %2311 = vmatpush.msra.mxu0 %v1728
  %2312 = vmatmul.f32.gmra.mxu0 %v1733
  %v2313 = vpop.f32.mrf.mxu0
  %v2314 = vadd.f32 0.0, %v2313
  %2315 = vdwg.mxu0
  %2316 = vmatpush.msra.mxu0 0.0
  %2317 = vmatpush.msra.mxu0 0.0
  %2318 = vmatpush.msra.mxu0 0.0
  %2319 = vmatpush.msra.mxu0 0.0
  %2320 = vmatpush.msra.mxu0 0.0
  %2321 = vmatpush.msra.mxu0 0.0
  %2322 = vmatpush.msra.mxu0 0.0
  %2323 = vmatpush.msra.mxu0 0.0
  %2324 = vmatpush.msra.mxu0 0.0
  %2325 = vmatpush.msra.mxu0 0.0
  %2326 = vmatpush.msra.mxu0 0.0
  %2327 = vmatpush.msra.mxu0 0.0
  %2328 = vmatpush.msra.mxu0 0.0
  %2329 = vmatpush.msra.mxu0 0.0
  %2330 = vmatpush.msra.mxu0 %v2271
  %2331 = vmatpush.msra.mxu0 %v1727
  %2332 = vmatmul.f32.gmra.mxu0 %v1782
  %v2333 = vpop.f32.mrf.mxu0
  %v2334 = vadd.f32 0.0, %v2333
  %2335 = vdwg.mxu0
  %2336 = vmatpush.msra.mxu0 0.0
  %2337 = vmatpush.msra.mxu0 0.0
  %2338 = vmatpush.msra.mxu0 0.0
  %2339 = vmatpush.msra.mxu0 0.0
  %2340 = vmatpush.msra.mxu0 0.0
  %2341 = vmatpush.msra.mxu0 0.0
  %2342 = vmatpush.msra.mxu0 0.0
  %2343 = vmatpush.msra.mxu0 0.0
  %2344 = vmatpush.msra.mxu0 0.0
  %2345 = vmatpush.msra.mxu0 0.0
  %2346 = vmatpush.msra.mxu0 0.0
  %2347 = vmatpush.msra.mxu0 0.0
  %2348 = vmatpush.msra.mxu0 0.0
  %2349 = vmatpush.msra.mxu0 0.0
  %2350 = vmatpush.msra.mxu0 %v2274
  %2351 = vmatpush.msra.mxu0 %v1728
  %2352 = vmatmul.f32.gmra.mxu0 %v1782
  %v2353 = vpop.f32.mrf.mxu0
  %v2354 = vadd.f32 0.0, %v2353
  %2355 = vdwg.mxu0
  %v2357 = vsel %vm1330, %v2354, 0
  %2359 = vmatpush.msra.mxu0 %v214
  %2360 = vmatpush.msra.mxu0 %v212
  %2361 = vmatpush.msra.mxu0 %v210
  %2362 = vmatpush.msra.mxu0 %v208
  %2363 = vmatpush.msra.mxu0 %v206
  %2364 = vmatpush.msra.mxu0 %v204
  %2365 = vmatpush.msra.mxu0 %v202
  %2366 = vmatpush.msra.mxu0 %v200
  %2367 = vmatpush.msra.mxu0 %v198
  %2368 = vmatpush.msra.mxu0 %v196
  %2369 = vmatpush.msra.mxu0 %v194
  %2370 = vmatpush.msra.mxu0 %v192
  %2371 = vmatpush.msra.mxu0 %v190
  %2372 = vmatpush.msra.mxu0 %v188
  %2373 = vmatpush.msra.mxu0 %v186
  %2374 = vmatpush.msra.mxu0 %v184
  %2375 = vmatmul.f32.gmra.mxu0 %v2334
  %v2376 = vpop.f32.mrf.mxu0
  %v2377 = vadd.f32 0.0, %v2376
  %2378 = vdwg.mxu0
  %2379 = vmatpush.msra.mxu0 0.0
  %2380 = vmatpush.msra.mxu0 0.0
  %2381 = vmatpush.msra.mxu0 0.0
  %2382 = vmatpush.msra.mxu0 0.0
  %2383 = vmatpush.msra.mxu0 0.0
  %2384 = vmatpush.msra.mxu0 0.0
  %2385 = vmatpush.msra.mxu0 0.0
  %2386 = vmatpush.msra.mxu0 0.0
  %2387 = vmatpush.msra.mxu0 0.0
  %2388 = vmatpush.msra.mxu0 0.0
  %2389 = vmatpush.msra.mxu0 0.0
  %2390 = vmatpush.msra.mxu0 %v1828
  %2391 = vmatpush.msra.mxu0 %v222
  %2392 = vmatpush.msra.mxu0 %v220
  %2393 = vmatpush.msra.mxu0 %v218
  %2394 = vmatpush.msra.mxu0 %v216
  %2395 = vmatmul.f32.gmra.mxu0 %v2357
  %v2396 = vpop.f32.mrf.mxu0
  %v2397 = vadd.f32 %v2377, %v2396
  %2398 = vdwg.mxu0
  %2399 = vmatpush.msra.mxu0 %v215
  %2400 = vmatpush.msra.mxu0 %v213
  %2401 = vmatpush.msra.mxu0 %v211
  %2402 = vmatpush.msra.mxu0 %v209
  %2403 = vmatpush.msra.mxu0 %v207
  %2404 = vmatpush.msra.mxu0 %v205
  %2405 = vmatpush.msra.mxu0 %v203
  %2406 = vmatpush.msra.mxu0 %v201
  %2407 = vmatpush.msra.mxu0 %v199
  %2408 = vmatpush.msra.mxu0 %v197
  %2409 = vmatpush.msra.mxu0 %v195
  %2410 = vmatpush.msra.mxu0 %v193
  %2411 = vmatpush.msra.mxu0 %v191
  %2412 = vmatpush.msra.mxu0 %v189
  %2413 = vmatpush.msra.mxu0 %v187
  %2414 = vmatpush.msra.mxu0 %v185
  %2415 = vmatmul.f32.gmra.mxu0 %v2334
  %v2416 = vpop.f32.mrf.mxu0
  %v2417 = vadd.f32 0.0, %v2416
  %2418 = vdwg.mxu0
  %2419 = vmatpush.msra.mxu0 0.0
  %2420 = vmatpush.msra.mxu0 0.0
  %2421 = vmatpush.msra.mxu0 0.0
  %2422 = vmatpush.msra.mxu0 0.0
  %2423 = vmatpush.msra.mxu0 0.0
  %2424 = vmatpush.msra.mxu0 0.0
  %2425 = vmatpush.msra.mxu0 0.0
  %2426 = vmatpush.msra.mxu0 0.0
  %2427 = vmatpush.msra.mxu0 0.0
  %2428 = vmatpush.msra.mxu0 0.0
  %2429 = vmatpush.msra.mxu0 0.0
  %2430 = vmatpush.msra.mxu0 %v1831
  %2431 = vmatpush.msra.mxu0 %v223
  %2432 = vmatpush.msra.mxu0 %v221
  %2433 = vmatpush.msra.mxu0 %v219
  %2434 = vmatpush.msra.mxu0 %v217
  %2435 = vmatmul.f32.gmra.mxu0 %v2357
  %v2436 = vpop.f32.mrf.mxu0
  %v2437 = vadd.f32 %v2417, %v2436
  %2438 = vdwg.mxu0
  %v2440 = vsel %vm1330, %v2314, 0
  %2442 = vmatpush.msra.mxu0 %v171
  %2443 = vmatpush.msra.mxu0 %v169
  %2444 = vmatpush.msra.mxu0 %v167
  %2445 = vmatpush.msra.mxu0 %v165
  %2446 = vmatpush.msra.mxu0 %v163
  %2447 = vmatpush.msra.mxu0 %v161
  %2448 = vmatpush.msra.mxu0 %v159
  %2449 = vmatpush.msra.mxu0 %v157
  %2450 = vmatpush.msra.mxu0 %v155
  %2451 = vmatpush.msra.mxu0 %v153
  %2452 = vmatpush.msra.mxu0 %v151
  %2453 = vmatpush.msra.mxu0 %v149
  %2454 = vmatpush.msra.mxu0 %v147
  %2455 = vmatpush.msra.mxu0 %v145
  %2456 = vmatpush.msra.mxu0 %v143
  %2457 = vmatpush.msra.mxu0 %v141
  %2458 = vmatmul.f32.gmra.mxu0 %v2294
  %v2459 = vpop.f32.mrf.mxu0
  %v2460 = vadd.f32 %v2397, %v2459
  %2461 = vdwg.mxu0
  %2462 = vmatpush.msra.mxu0 0.0
  %2463 = vmatpush.msra.mxu0 0.0
  %2464 = vmatpush.msra.mxu0 0.0
  %2465 = vmatpush.msra.mxu0 0.0
  %2466 = vmatpush.msra.mxu0 0.0
  %2467 = vmatpush.msra.mxu0 0.0
  %2468 = vmatpush.msra.mxu0 0.0
  %2469 = vmatpush.msra.mxu0 0.0
  %2470 = vmatpush.msra.mxu0 0.0
  %2471 = vmatpush.msra.mxu0 0.0
  %2472 = vmatpush.msra.mxu0 0.0
  %2473 = vmatpush.msra.mxu0 %v1917
  %2474 = vmatpush.msra.mxu0 %v179
  %2475 = vmatpush.msra.mxu0 %v177
  %2476 = vmatpush.msra.mxu0 %v175
  %2477 = vmatpush.msra.mxu0 %v173
  %2478 = vmatmul.f32.gmra.mxu0 %v2440
  %v2479 = vpop.f32.mrf.mxu0
  %v2480 = vadd.f32 %v2460, %v2479
  %2481 = vdwg.mxu0
  %2482 = vmatpush.msra.mxu0 %v172
  %2483 = vmatpush.msra.mxu0 %v170
  %2484 = vmatpush.msra.mxu0 %v168
  %2485 = vmatpush.msra.mxu0 %v166
  %2486 = vmatpush.msra.mxu0 %v164
  %2487 = vmatpush.msra.mxu0 %v162
  %2488 = vmatpush.msra.mxu0 %v160
  %2489 = vmatpush.msra.mxu0 %v158
  %2490 = vmatpush.msra.mxu0 %v156
  %2491 = vmatpush.msra.mxu0 %v154
  %2492 = vmatpush.msra.mxu0 %v152
  %2493 = vmatpush.msra.mxu0 %v150
  %2494 = vmatpush.msra.mxu0 %v148
  %2495 = vmatpush.msra.mxu0 %v146
  %2496 = vmatpush.msra.mxu0 %v144
  %2497 = vmatpush.msra.mxu0 %v142
  %2498 = vmatmul.f32.gmra.mxu0 %v2294
  %v2499 = vpop.f32.mrf.mxu0
  %v2500 = vadd.f32 %v2437, %v2499
  %2501 = vdwg.mxu0
  %2502 = vmatpush.msra.mxu0 0.0
  %2503 = vmatpush.msra.mxu0 0.0
  %2504 = vmatpush.msra.mxu0 0.0
  %2505 = vmatpush.msra.mxu0 0.0
  %2506 = vmatpush.msra.mxu0 0.0
  %2507 = vmatpush.msra.mxu0 0.0
  %2508 = vmatpush.msra.mxu0 0.0
  %2509 = vmatpush.msra.mxu0 0.0
  %2510 = vmatpush.msra.mxu0 0.0
  %2511 = vmatpush.msra.mxu0 0.0
  %2512 = vmatpush.msra.mxu0 0.0
  %2513 = vmatpush.msra.mxu0 %v1920
  %2514 = vmatpush.msra.mxu0 %v180
  %2515 = vmatpush.msra.mxu0 %v178
  %2516 = vmatpush.msra.mxu0 %v176
  %2517 = vmatpush.msra.mxu0 %v174
  %2518 = vmatmul.f32.gmra.mxu0 %v2440
  %v2519 = vpop.f32.mrf.mxu0
  %v2520 = vadd.f32 %v2500, %v2519
  %2521 = vdwg.mxu0
  %2522 = vmatpush.msra.mxu0 0.0
  %2523 = vmatpush.msra.mxu0 0.0
  %2524 = vmatpush.msra.mxu0 0.0
  %2525 = vmatpush.msra.mxu0 0.0
  %2526 = vmatpush.msra.mxu0 0.0
  %2527 = vmatpush.msra.mxu0 0.0
  %2528 = vmatpush.msra.mxu0 0.0
  %2529 = vmatpush.msra.mxu0 0.0
  %2530 = vmatpush.msra.mxu0 0.0
  %2531 = vmatpush.msra.mxu0 0.0
  %2532 = vmatpush.msra.mxu0 0.0
  %2533 = vmatpush.msra.mxu0 0.0
  %2534 = vmatpush.msra.mxu0 0.0
  %2535 = vmatpush.msra.mxu0 0.0
  %2536 = vmatpush.msra.mxu0 %v2271
  %2537 = vmatpush.msra.mxu0 %v1727
  %2538 = vmatmul.f32.gmra.mxu0 %v2003
  %v2539 = vpop.f32.mrf.mxu0
  %v2540 = vadd.f32 0.0, %v2539
  %2541 = vdwg.mxu0
  %2542 = vmatpush.msra.mxu0 0.0
  %2543 = vmatpush.msra.mxu0 0.0
  %2544 = vmatpush.msra.mxu0 0.0
  %2545 = vmatpush.msra.mxu0 0.0
  %2546 = vmatpush.msra.mxu0 0.0
  %2547 = vmatpush.msra.mxu0 0.0
  %2548 = vmatpush.msra.mxu0 0.0
  %2549 = vmatpush.msra.mxu0 0.0
  %2550 = vmatpush.msra.mxu0 0.0
  %2551 = vmatpush.msra.mxu0 0.0
  %2552 = vmatpush.msra.mxu0 0.0
  %2553 = vmatpush.msra.mxu0 0.0
  %2554 = vmatpush.msra.mxu0 0.0
  %2555 = vmatpush.msra.mxu0 0.0
  %2556 = vmatpush.msra.mxu0 %v2274
  %2557 = vmatpush.msra.mxu0 %v1728
  %2558 = vmatmul.f32.gmra.mxu0 %v2003
  %v2559 = vpop.f32.mrf.mxu0
  %v2560 = vadd.f32 0.0, %v2559
  %2561 = vdwg.mxu0
  %v2563 = vsel %vm1330, %v2560, 0
  %2565 = vmatpush.msra.mxu0 %v257
  %2566 = vmatpush.msra.mxu0 %v255
  %2567 = vmatpush.msra.mxu0 %v253
  %2568 = vmatpush.msra.mxu0 %v251
  %2569 = vmatpush.msra.mxu0 %v249
  %2570 = vmatpush.msra.mxu0 %v247
  %2571 = vmatpush.msra.mxu0 %v245
  %2572 = vmatpush.msra.mxu0 %v243
  %2573 = vmatpush.msra.mxu0 %v241
  %2574 = vmatpush.msra.mxu0 %v239
  %2575 = vmatpush.msra.mxu0 %v237
  %2576 = vmatpush.msra.mxu0 %v235
  %2577 = vmatpush.msra.mxu0 %v233
  %2578 = vmatpush.msra.mxu0 %v231
  %2579 = vmatpush.msra.mxu0 %v229
  %2580 = vmatpush.msra.mxu0 %v227
  %2581 = vmatmul.f32.gmra.mxu0 %v2540
  %v2582 = vpop.f32.mrf.mxu0
  %v2583 = vadd.f32 0.0, %v2582
  %2584 = vdwg.mxu0
  %2585 = vmatpush.msra.mxu0 0.0
  %2586 = vmatpush.msra.mxu0 0.0
  %2587 = vmatpush.msra.mxu0 0.0
  %2588 = vmatpush.msra.mxu0 0.0
  %2589 = vmatpush.msra.mxu0 0.0
  %2590 = vmatpush.msra.mxu0 0.0
  %2591 = vmatpush.msra.mxu0 0.0
  %2592 = vmatpush.msra.mxu0 0.0
  %2593 = vmatpush.msra.mxu0 0.0
  %2594 = vmatpush.msra.mxu0 0.0
  %2595 = vmatpush.msra.mxu0 0.0
  %2596 = vmatpush.msra.mxu0 %v2049
  %2597 = vmatpush.msra.mxu0 %v265
  %2598 = vmatpush.msra.mxu0 %v263
  %2599 = vmatpush.msra.mxu0 %v261
  %2600 = vmatpush.msra.mxu0 %v259
  %2601 = vmatmul.f32.gmra.mxu0 %v2563
  %v2602 = vpop.f32.mrf.mxu0
  %v2603 = vadd.f32 %v2583, %v2602
  %2604 = vdwg.mxu0
  %2605 = vmatpush.msra.mxu0 %v258
  %2606 = vmatpush.msra.mxu0 %v256
  %2607 = vmatpush.msra.mxu0 %v254
  %2608 = vmatpush.msra.mxu0 %v252
  %2609 = vmatpush.msra.mxu0 %v250
  %2610 = vmatpush.msra.mxu0 %v248
  %2611 = vmatpush.msra.mxu0 %v246
  %2612 = vmatpush.msra.mxu0 %v244
  %2613 = vmatpush.msra.mxu0 %v242
  %2614 = vmatpush.msra.mxu0 %v240
  %2615 = vmatpush.msra.mxu0 %v238
  %2616 = vmatpush.msra.mxu0 %v236
  %2617 = vmatpush.msra.mxu0 %v234
  %2618 = vmatpush.msra.mxu0 %v232
  %2619 = vmatpush.msra.mxu0 %v230
  %2620 = vmatpush.msra.mxu0 %v228
  %2621 = vmatmul.f32.gmra.mxu0 %v2540
  %v2622 = vpop.f32.mrf.mxu0
  %v2623 = vadd.f32 0.0, %v2622
  %2624 = vdwg.mxu0
  %2625 = vmatpush.msra.mxu0 0.0
  %2626 = vmatpush.msra.mxu0 0.0
  %2627 = vmatpush.msra.mxu0 0.0
  %2628 = vmatpush.msra.mxu0 0.0
  %2629 = vmatpush.msra.mxu0 0.0
  %2630 = vmatpush.msra.mxu0 0.0
  %2631 = vmatpush.msra.mxu0 0.0
  %2632 = vmatpush.msra.mxu0 0.0
  %2633 = vmatpush.msra.mxu0 0.0
  %2634 = vmatpush.msra.mxu0 0.0
  %2635 = vmatpush.msra.mxu0 0.0
  %2636 = vmatpush.msra.mxu0 %v2052
  %2637 = vmatpush.msra.mxu0 %v266
  %2638 = vmatpush.msra.mxu0 %v264
  %2639 = vmatpush.msra.mxu0 %v262
  %2640 = vmatpush.msra.mxu0 %v260
  %2641 = vmatmul.f32.gmra.mxu0 %v2563
  %v2642 = vpop.f32.mrf.mxu0
  %v2643 = vadd.f32 %v2623, %v2642
  %2644 = vdwg.mxu0
  %v2645 = vadd.f32 %v2480, %v2603
  %v2646 = vadd.f32 %v2520, %v2643
  %2647 = vmatpush.msra.mxu0 0.0
  %2648 = vmatpush.msra.mxu0 0.0
  %2649 = vmatpush.msra.mxu0 0.0
  %2650 = vmatpush.msra.mxu0 0.0
  %2651 = vmatpush.msra.mxu0 0.0
  %2652 = vmatpush.msra.mxu0 0.0
  %2653 = vmatpush.msra.mxu0 0.0
  %2654 = vmatpush.msra.mxu0 0.0
  %2655 = vmatpush.msra.mxu0 0.0
  %2656 = vmatpush.msra.mxu0 0.0
  %2657 = vmatpush.msra.mxu0 0.0
  %2658 = vmatpush.msra.mxu0 0.0
  %2659 = vmatpush.msra.mxu0 0.0
  %2660 = vmatpush.msra.mxu0 0.0
  %2661 = vmatpush.msra.mxu0 %v2271
  %2662 = vmatpush.msra.mxu0 %v1727
  %2663 = vmatmul.f32.gmra.mxu0 %v2137
  %v2664 = vpop.f32.mrf.mxu0
  %v2665 = vadd.f32 0.0, %v2664
  %2666 = vdwg.mxu0
  %2667 = vmatpush.msra.mxu0 0.0
  %2668 = vmatpush.msra.mxu0 0.0
  %2669 = vmatpush.msra.mxu0 0.0
  %2670 = vmatpush.msra.mxu0 0.0
  %2671 = vmatpush.msra.mxu0 0.0
  %2672 = vmatpush.msra.mxu0 0.0
  %2673 = vmatpush.msra.mxu0 0.0
  %2674 = vmatpush.msra.mxu0 0.0
  %2675 = vmatpush.msra.mxu0 0.0
  %2676 = vmatpush.msra.mxu0 0.0
  %2677 = vmatpush.msra.mxu0 0.0
  %2678 = vmatpush.msra.mxu0 0.0
  %2679 = vmatpush.msra.mxu0 0.0
  %2680 = vmatpush.msra.mxu0 0.0
  %2681 = vmatpush.msra.mxu0 %v2274
  %2682 = vmatpush.msra.mxu0 %v1728
  %2683 = vmatmul.f32.gmra.mxu0 %v2137
  %v2684 = vpop.f32.mrf.mxu0
  %v2685 = vadd.f32 0.0, %v2684
  %2686 = vdwg.mxu0
  %v2688 = vsel %vm1330, %v2685, 0
  %2690 = vmatpush.msra.mxu0 %v300
  %2691 = vmatpush.msra.mxu0 %v298
  %2692 = vmatpush.msra.mxu0 %v296
  %2693 = vmatpush.msra.mxu0 %v294
  %2694 = vmatpush.msra.mxu0 %v292
  %2695 = vmatpush.msra.mxu0 %v290
  %2696 = vmatpush.msra.mxu0 %v288
  %2697 = vmatpush.msra.mxu0 %v286
  %2698 = vmatpush.msra.mxu0 %v284
  %2699 = vmatpush.msra.mxu0 %v282
  %2700 = vmatpush.msra.mxu0 %v280
  %2701 = vmatpush.msra.mxu0 %v278
  %2702 = vmatpush.msra.mxu0 %v276
  %2703 = vmatpush.msra.mxu0 %v274
  %2704 = vmatpush.msra.mxu0 %v272
  %2705 = vmatpush.msra.mxu0 %v270
  %2706 = vmatmul.f32.gmra.mxu0 %v2665
  %v2707 = vpop.f32.mrf.mxu0
  %v2708 = vadd.f32 0.0, %v2707
  %2709 = vdwg.mxu0
  %2710 = vmatpush.msra.mxu0 0.0
  %2711 = vmatpush.msra.mxu0 0.0
  %2712 = vmatpush.msra.mxu0 0.0
  %2713 = vmatpush.msra.mxu0 0.0
  %2714 = vmatpush.msra.mxu0 0.0
  %2715 = vmatpush.msra.mxu0 0.0
  %2716 = vmatpush.msra.mxu0 0.0
  %2717 = vmatpush.msra.mxu0 0.0
  %2718 = vmatpush.msra.mxu0 0.0
  %2719 = vmatpush.msra.mxu0 0.0
  %2720 = vmatpush.msra.mxu0 0.0
  %2721 = vmatpush.msra.mxu0 %v2183
  %2722 = vmatpush.msra.mxu0 %v308
  %2723 = vmatpush.msra.mxu0 %v306
  %2724 = vmatpush.msra.mxu0 %v304
  %2725 = vmatpush.msra.mxu0 %v302
  %2726 = vmatmul.f32.gmra.mxu0 %v2688
  %v2727 = vpop.f32.mrf.mxu0
  %v2728 = vadd.f32 %v2708, %v2727
  %2729 = vdwg.mxu0
  %2730 = vmatpush.msra.mxu0 %v301
  %2731 = vmatpush.msra.mxu0 %v299
  %2732 = vmatpush.msra.mxu0 %v297
  %2733 = vmatpush.msra.mxu0 %v295
  %2734 = vmatpush.msra.mxu0 %v293
  %2735 = vmatpush.msra.mxu0 %v291
  %2736 = vmatpush.msra.mxu0 %v289
  %2737 = vmatpush.msra.mxu0 %v287
  %2738 = vmatpush.msra.mxu0 %v285
  %2739 = vmatpush.msra.mxu0 %v283
  %2740 = vmatpush.msra.mxu0 %v281
  %2741 = vmatpush.msra.mxu0 %v279
  %2742 = vmatpush.msra.mxu0 %v277
  %2743 = vmatpush.msra.mxu0 %v275
  %2744 = vmatpush.msra.mxu0 %v273
  %2745 = vmatpush.msra.mxu0 %v271
  %2746 = vmatmul.f32.gmra.mxu0 %v2665
  %v2747 = vpop.f32.mrf.mxu0
  %v2748 = vadd.f32 0.0, %v2747
  %2749 = vdwg.mxu0
  %2750 = vmatpush.msra.mxu0 0.0
  %2751 = vmatpush.msra.mxu0 0.0
  %2752 = vmatpush.msra.mxu0 0.0
  %2753 = vmatpush.msra.mxu0 0.0
  %2754 = vmatpush.msra.mxu0 0.0
  %2755 = vmatpush.msra.mxu0 0.0
  %2756 = vmatpush.msra.mxu0 0.0
  %2757 = vmatpush.msra.mxu0 0.0
  %2758 = vmatpush.msra.mxu0 0.0
  %2759 = vmatpush.msra.mxu0 0.0
  %2760 = vmatpush.msra.mxu0 0.0
  %2761 = vmatpush.msra.mxu0 %v2186
  %2762 = vmatpush.msra.mxu0 %v309
  %2763 = vmatpush.msra.mxu0 %v307
  %2764 = vmatpush.msra.mxu0 %v305
  %2765 = vmatpush.msra.mxu0 %v303
  %2766 = vmatmul.f32.gmra.mxu0 %v2688
  %v2767 = vpop.f32.mrf.mxu0
  %v2768 = vadd.f32 %v2748, %v2767
  %2769 = vdwg.mxu0
  %v2770 = vadd.f32 %v2645, %v2728
  %v2771 = vadd.f32 %v2646, %v2768
  %vm2772 = vcmask 1044480
  %v2773 = vsel %vm2772, %v2268, 0.0
  %v2774 = vrot.slane %v2773, 4
  %v2775 = vadd.f32 %v2773, %v2774
  %v2776 = vrot.slane %v2775, 2
  %v2777 = vadd.f32 %v2775, %v2776
  %v2778 = vrot.slane %v2777, 1
  %v2779 = vadd.f32 %v2777, %v2778
  %vm2780 = vcmask 421888
  %v2781 = vsel %vm2780, %v2269, 0.0
  %v2782 = vrot.slane %v2781, 4
  %v2783 = vadd.f32 %v2781, %v2782
  %v2784 = vrot.slane %v2783, 2
  %v2785 = vadd.f32 %v2783, %v2784
  %v2786 = vrot.slane %v2785, 1
  %v2787 = vadd.f32 %v2785, %v2786
  %v2788 = vmul.f32 %v2268, %v2268
  %v2789 = vmul.f32 %v2269, %v2269
  %v2790 = vsel %vm2772, %v2788, 0.0
  %v2791 = vrot.slane %v2790, 4
  %v2792 = vadd.f32 %v2790, %v2791
  %v2793 = vrot.slane %v2792, 2
  %v2794 = vadd.f32 %v2792, %v2793
  %v2795 = vrot.slane %v2794, 1
  %v2796 = vadd.f32 %v2794, %v2795
  %v2797 = vsel %vm2780, %v2789, 0.0
  %v2798 = vrot.slane %v2797, 4
  %v2799 = vadd.f32 %v2797, %v2798
  %v2800 = vrot.slane %v2799, 2
  %v2801 = vadd.f32 %v2799, %v2800
  %v2802 = vrot.slane %v2801, 1
  %v2803 = vadd.f32 %v2801, %v2802
  %v2804 = vsel %vm2772, %v2770, 0.0
  %v2805 = vrot.slane %v2804, 4
  %v2806 = vadd.f32 %v2804, %v2805
  %v2807 = vrot.slane %v2806, 2
  %v2808 = vadd.f32 %v2806, %v2807
  %v2809 = vrot.slane %v2808, 1
  %v2810 = vadd.f32 %v2808, %v2809
  %v2811 = vsel %vm2780, %v2771, 0.0
  %v2812 = vrot.slane %v2811, 4
  %v2813 = vadd.f32 %v2811, %v2812
  %v2814 = vrot.slane %v2813, 2
  %v2815 = vadd.f32 %v2813, %v2814
  %v2816 = vrot.slane %v2815, 1
  %v2817 = vadd.f32 %v2815, %v2816
  %vm2818 = vcmask 424960
  %v2820 = vsel %vm2818, %v2817, 0
  %vm2822 = vcmask 1043456
  %v2824 = vsel %vm2822, %v657, 0
  %2826 = vmatpush.msra.mxu0 %v650
  %2827 = vmatpush.msra.mxu0 %v649
  %2828 = vmatpush.msra.mxu0 %v648
  %2829 = vmatpush.msra.mxu0 %v647
  %2830 = vmatpush.msra.mxu0 %v646
  %2831 = vmatpush.msra.mxu0 %v645
  %2832 = vmatpush.msra.mxu0 %v644
  %2833 = vmatpush.msra.mxu0 %v643
  %2834 = vmatpush.msra.mxu0 %v642
  %2835 = vmatpush.msra.mxu0 %v641
  %2836 = vmatpush.msra.mxu0 %v640
  %2837 = vmatpush.msra.mxu0 %v639
  %2838 = vmatpush.msra.mxu0 %v638
  %2839 = vmatpush.msra.mxu0 %v637
  %2840 = vmatpush.msra.mxu0 %v636
  %2841 = vmatpush.msra.mxu0 %v635
  %2842 = vmatmul.f32.gmra.mxu0 %v2810
  %v2843 = vpop.f32.mrf.mxu0
  %v2844 = vadd.f32 0.0, %v2843
  %2845 = vdwg.mxu0
  %2846 = vmatpush.msra.mxu0 0.0
  %2847 = vmatpush.msra.mxu0 0.0
  %2848 = vmatpush.msra.mxu0 0.0
  %2849 = vmatpush.msra.mxu0 0.0
  %2850 = vmatpush.msra.mxu0 0.0
  %2851 = vmatpush.msra.mxu0 0.0
  %2852 = vmatpush.msra.mxu0 0.0
  %2853 = vmatpush.msra.mxu0 0.0
  %2854 = vmatpush.msra.mxu0 0.0
  %2855 = vmatpush.msra.mxu0 %v2824
  %2856 = vmatpush.msra.mxu0 %v656
  %2857 = vmatpush.msra.mxu0 %v655
  %2858 = vmatpush.msra.mxu0 %v654
  %2859 = vmatpush.msra.mxu0 %v653
  %2860 = vmatpush.msra.mxu0 %v652
  %2861 = vmatpush.msra.mxu0 %v651
  %2862 = vmatmul.f32.gmra.mxu0 %v2820
  %v2863 = vpop.f32.mrf.mxu0
  %v2864 = vadd.f32 %v2844, %v2863
  %2865 = vdwg.mxu0
  %v2866 = vmul.f32 %v2770, %v2770
  %v2867 = vmul.f32 %v2771, %v2771
  %v2868 = vsel %vm2772, %v2866, 0.0
  %v2869 = vrot.slane %v2868, 4
  %v2870 = vadd.f32 %v2868, %v2869
  %v2871 = vrot.slane %v2870, 2
  %v2872 = vadd.f32 %v2870, %v2871
  %v2873 = vrot.slane %v2872, 1
  %v2874 = vadd.f32 %v2872, %v2873
  %v2875 = vsel %vm2780, %v2867, 0.0
  %v2876 = vrot.slane %v2875, 4
  %v2877 = vadd.f32 %v2875, %v2876
  %v2878 = vrot.slane %v2877, 2
  %v2879 = vadd.f32 %v2877, %v2878
  %v2880 = vrot.slane %v2879, 1
  %v2881 = vadd.f32 %v2879, %v2880
  %v2883 = vsel %vm2818, %v2881, 0
  %2885 = vmatpush.msra.mxu0 %v650
  %2886 = vmatpush.msra.mxu0 %v649
  %2887 = vmatpush.msra.mxu0 %v648
  %2888 = vmatpush.msra.mxu0 %v647
  %2889 = vmatpush.msra.mxu0 %v646
  %2890 = vmatpush.msra.mxu0 %v645
  %2891 = vmatpush.msra.mxu0 %v644
  %2892 = vmatpush.msra.mxu0 %v643
  %2893 = vmatpush.msra.mxu0 %v642
  %2894 = vmatpush.msra.mxu0 %v641
  %2895 = vmatpush.msra.mxu0 %v640
  %2896 = vmatpush.msra.mxu0 %v639
  %2897 = vmatpush.msra.mxu0 %v638
  %2898 = vmatpush.msra.mxu0 %v637
  %2899 = vmatpush.msra.mxu0 %v636
  %2900 = vmatpush.msra.mxu0 %v635
  %2901 = vmatmul.f32.gmra.mxu0 %v2874
  %v2902 = vpop.f32.mrf.mxu0
  %v2903 = vadd.f32 0.0, %v2902
  %2904 = vdwg.mxu0
  %2905 = vmatpush.msra.mxu0 0.0
  %2906 = vmatpush.msra.mxu0 0.0
  %2907 = vmatpush.msra.mxu0 0.0
  %2908 = vmatpush.msra.mxu0 0.0
  %2909 = vmatpush.msra.mxu0 0.0
  %2910 = vmatpush.msra.mxu0 0.0
  %2911 = vmatpush.msra.mxu0 0.0
  %2912 = vmatpush.msra.mxu0 0.0
  %2913 = vmatpush.msra.mxu0 0.0
  %2914 = vmatpush.msra.mxu0 %v2824
  %2915 = vmatpush.msra.mxu0 %v656
  %2916 = vmatpush.msra.mxu0 %v655
  %2917 = vmatpush.msra.mxu0 %v654
  %2918 = vmatpush.msra.mxu0 %v653
  %2919 = vmatpush.msra.mxu0 %v652
  %2920 = vmatpush.msra.mxu0 %v651
  %2921 = vmatmul.f32.gmra.mxu0 %v2883
  %v2922 = vpop.f32.mrf.mxu0
  %v2923 = vadd.f32 %v2903, %v2922
  %2924 = vdwg.mxu0
  %v2926 = vsel %vm2818, %v2787, 0
  %2928 = vmatpush.msra.mxu0 %v650
  %2929 = vmatpush.msra.mxu0 %v649
  %2930 = vmatpush.msra.mxu0 %v648
  %2931 = vmatpush.msra.mxu0 %v647
  %2932 = vmatpush.msra.mxu0 %v646
  %2933 = vmatpush.msra.mxu0 %v645
  %2934 = vmatpush.msra.mxu0 %v644
  %2935 = vmatpush.msra.mxu0 %v643
  %2936 = vmatpush.msra.mxu0 %v642
  %2937 = vmatpush.msra.mxu0 %v641
  %2938 = vmatpush.msra.mxu0 %v640
  %2939 = vmatpush.msra.mxu0 %v639
  %2940 = vmatpush.msra.mxu0 %v638
  %2941 = vmatpush.msra.mxu0 %v637
  %2942 = vmatpush.msra.mxu0 %v636
  %2943 = vmatpush.msra.mxu0 %v635
  %2944 = vmatmul.f32.gmra.mxu0 %v2779
  %v2945 = vpop.f32.mrf.mxu0
  %v2946 = vadd.f32 %v2864, %v2945
  %2947 = vdwg.mxu0
  %2948 = vmatpush.msra.mxu0 0.0
  %2949 = vmatpush.msra.mxu0 0.0
  %2950 = vmatpush.msra.mxu0 0.0
  %2951 = vmatpush.msra.mxu0 0.0
  %2952 = vmatpush.msra.mxu0 0.0
  %2953 = vmatpush.msra.mxu0 0.0
  %2954 = vmatpush.msra.mxu0 0.0
  %2955 = vmatpush.msra.mxu0 0.0
  %2956 = vmatpush.msra.mxu0 0.0
  %2957 = vmatpush.msra.mxu0 %v2824
  %2958 = vmatpush.msra.mxu0 %v656
  %2959 = vmatpush.msra.mxu0 %v655
  %2960 = vmatpush.msra.mxu0 %v654
  %2961 = vmatpush.msra.mxu0 %v653
  %2962 = vmatpush.msra.mxu0 %v652
  %2963 = vmatpush.msra.mxu0 %v651
  %2964 = vmatmul.f32.gmra.mxu0 %v2926
  %v2965 = vpop.f32.mrf.mxu0
  %v2966 = vadd.f32 %v2946, %v2965
  %2967 = vdwg.mxu0
  %v2969 = vsel %vm2818, %v2803, 0
  %2971 = vmatpush.msra.mxu0 %v650
  %2972 = vmatpush.msra.mxu0 %v649
  %2973 = vmatpush.msra.mxu0 %v648
  %2974 = vmatpush.msra.mxu0 %v647
  %2975 = vmatpush.msra.mxu0 %v646
  %2976 = vmatpush.msra.mxu0 %v645
  %2977 = vmatpush.msra.mxu0 %v644
  %2978 = vmatpush.msra.mxu0 %v643
  %2979 = vmatpush.msra.mxu0 %v642
  %2980 = vmatpush.msra.mxu0 %v641
  %2981 = vmatpush.msra.mxu0 %v640
  %2982 = vmatpush.msra.mxu0 %v639
  %2983 = vmatpush.msra.mxu0 %v638
  %2984 = vmatpush.msra.mxu0 %v637
  %2985 = vmatpush.msra.mxu0 %v636
  %2986 = vmatpush.msra.mxu0 %v635
  %2987 = vmatmul.f32.gmra.mxu0 %v2796
  %v2988 = vpop.f32.mrf.mxu0
  %v2989 = vadd.f32 %v2923, %v2988
  %2990 = vdwg.mxu0
  %2991 = vmatpush.msra.mxu0 0.0
  %2992 = vmatpush.msra.mxu0 0.0
  %2993 = vmatpush.msra.mxu0 0.0
  %2994 = vmatpush.msra.mxu0 0.0
  %2995 = vmatpush.msra.mxu0 0.0
  %2996 = vmatpush.msra.mxu0 0.0
  %2997 = vmatpush.msra.mxu0 0.0
  %2998 = vmatpush.msra.mxu0 0.0
  %2999 = vmatpush.msra.mxu0 0.0
  %3000 = vmatpush.msra.mxu0 %v2824
  %3001 = vmatpush.msra.mxu0 %v656
  %3002 = vmatpush.msra.mxu0 %v655
  %3003 = vmatpush.msra.mxu0 %v654
  %3004 = vmatpush.msra.mxu0 %v653
  %3005 = vmatpush.msra.mxu0 %v652
  %3006 = vmatpush.msra.mxu0 %v651
  %3007 = vmatmul.f32.gmra.mxu0 %v2969
  %v3008 = vpop.f32.mrf.mxu0
  %v3009 = vadd.f32 %v2989, %v3008
  %3010 = vdwg.mxu0
  %v3011 = vmul.f32 %v2966, 0.02
  %v3012 = vmul.f32 %v3009, 0.02
  %v3013 = vmul.f32 %v3011, %v3011
  %v3014 = vsub.f32 %v3012, %v3013
  %v3015 = vadd.f32 %v3014, 1e-05
  %v3016 = vrsqrt.pop %v3015
  %v3017 = vmul.f32 %v3016, %v3015
  %v3018 = vmul.f32 %v3017, %v3016
  %v3019 = vmul.f32 0.5, %v3018
  %v3020 = vsub.f32 1.5, %v3019
  %v3021 = vmul.f32 %v3016, %v3020
  %vm3022 = vweird.f32 %v3015
  %vm3023 = vweird.f32 %v3016
  %vm3024 = vmor %vm3022, %vm3023
  %v3025 = vsel %vm3024, %v3016, %v3021
  %v3026 = vmul.f32 %v668, %v3025
  %v3027 = vmul.f32 %v3011, %v3026
  %v3028 = vsub.f32 %v669, %v3027
  %vm3029 = vcmask 293888
  %v3031 = vsel %vm3029, %v3026, 0
  %v3034 = vsel %vm2822, %v666, 0
  %v3037 = vsel %vm2822, %v667, 0
  %3039 = vmatpush.msra.mxu0 0.0
  %3040 = vmatpush.msra.mxu0 0.0
  %3041 = vmatpush.msra.mxu0 0.0
  %3042 = vmatpush.msra.mxu0 0.0
  %3043 = vmatpush.msra.mxu0 0.0
  %3044 = vmatpush.msra.mxu0 0.0
  %3045 = vmatpush.msra.mxu0 0.0
  %3046 = vmatpush.msra.mxu0 0.0
  %3047 = vmatpush.msra.mxu0 0.0
  %3048 = vmatpush.msra.mxu0 0.0
  %3049 = vmatpush.msra.mxu0 0.0
  %3050 = vmatpush.msra.mxu0 %v3034
  %3051 = vmatpush.msra.mxu0 %v664
  %3052 = vmatpush.msra.mxu0 %v662
  %3053 = vmatpush.msra.mxu0 %v660
  %3054 = vmatpush.msra.mxu0 %v658
  %3055 = vmatmul.f32.gmra.mxu0 %v3031
  %v3056 = vpop.f32.mrf.mxu0
  %v3057 = vadd.f32 0.0, %v3056
  %3058 = vdwg.mxu0
  %3059 = vmatpush.msra.mxu0 0.0
  %3060 = vmatpush.msra.mxu0 0.0
  %3061 = vmatpush.msra.mxu0 0.0
  %3062 = vmatpush.msra.mxu0 0.0
  %3063 = vmatpush.msra.mxu0 0.0
  %3064 = vmatpush.msra.mxu0 0.0
  %3065 = vmatpush.msra.mxu0 0.0
  %3066 = vmatpush.msra.mxu0 0.0
  %3067 = vmatpush.msra.mxu0 0.0
  %3068 = vmatpush.msra.mxu0 0.0
  %3069 = vmatpush.msra.mxu0 0.0
  %3070 = vmatpush.msra.mxu0 %v3037
  %3071 = vmatpush.msra.mxu0 %v665
  %3072 = vmatpush.msra.mxu0 %v663
  %3073 = vmatpush.msra.mxu0 %v661
  %3074 = vmatpush.msra.mxu0 %v659
  %3075 = vmatmul.f32.gmra.mxu0 %v3031
  %v3076 = vpop.f32.mrf.mxu0
  %v3077 = vadd.f32 0.0, %v3076
  %3078 = vdwg.mxu0
  %v3080 = vsel %vm3029, %v3028, 0
  %3082 = vmatpush.msra.mxu0 0.0
  %3083 = vmatpush.msra.mxu0 0.0
  %3084 = vmatpush.msra.mxu0 0.0
  %3085 = vmatpush.msra.mxu0 0.0
  %3086 = vmatpush.msra.mxu0 0.0
  %3087 = vmatpush.msra.mxu0 0.0
  %3088 = vmatpush.msra.mxu0 0.0
  %3089 = vmatpush.msra.mxu0 0.0
  %3090 = vmatpush.msra.mxu0 0.0
  %3091 = vmatpush.msra.mxu0 0.0
  %3092 = vmatpush.msra.mxu0 0.0
  %3093 = vmatpush.msra.mxu0 %v3034
  %3094 = vmatpush.msra.mxu0 %v664
  %3095 = vmatpush.msra.mxu0 %v662
  %3096 = vmatpush.msra.mxu0 %v660
  %3097 = vmatpush.msra.mxu0 %v658
  %3098 = vmatmul.f32.gmra.mxu0 %v3080
  %v3099 = vpop.f32.mrf.mxu0
  %v3100 = vadd.f32 0.0, %v3099
  %3101 = vdwg.mxu0
  %3102 = vmatpush.msra.mxu0 0.0
  %3103 = vmatpush.msra.mxu0 0.0
  %3104 = vmatpush.msra.mxu0 0.0
  %3105 = vmatpush.msra.mxu0 0.0
  %3106 = vmatpush.msra.mxu0 0.0
  %3107 = vmatpush.msra.mxu0 0.0
  %3108 = vmatpush.msra.mxu0 0.0
  %3109 = vmatpush.msra.mxu0 0.0
  %3110 = vmatpush.msra.mxu0 0.0
  %3111 = vmatpush.msra.mxu0 0.0
  %3112 = vmatpush.msra.mxu0 0.0
  %3113 = vmatpush.msra.mxu0 %v3037
  %3114 = vmatpush.msra.mxu0 %v665
  %3115 = vmatpush.msra.mxu0 %v663
  %3116 = vmatpush.msra.mxu0 %v661
  %3117 = vmatpush.msra.mxu0 %v659
  %3118 = vmatmul.f32.gmra.mxu0 %v3080
  %v3119 = vpop.f32.mrf.mxu0
  %v3120 = vadd.f32 0.0, %v3119
  %3121 = vdwg.mxu0
  %v3122 = vperm.slane %v3057, 0
  %v3123 = vperm.slane %v3077, 0
  %v3124 = vmul.f32 %v2268, %v3122
  %v3125 = vmul.f32 %v2269, %v3123
  %v3126 = vperm.slane %v3100, 0
  %v3127 = vperm.slane %v3120, 0
  %v3128 = vadd.f32 %v3124, %v3126
  %v3129 = vadd.f32 %v3125, %v3127
  %vm3130 = vcmp.gt.f32.partialorder %v3128, 0.0
  %vm3131 = vcmp.gt.f32.partialorder %v3129, 0.0
  %v3132 = vmul.f32 %v3128, 0.01
  %v3133 = vmul.f32 %v3129, 0.01
  %v3134 = vsel %vm3130, %v3128, %v3132
  %v3135 = vsel %vm3131, %v3129, %v3133
  %v3136 = vmul.f32 %v2770, %v3122
  %v3137 = vmul.f32 %v2771, %v3123
  %v3138 = vadd.f32 %v3136, %v3126
  %v3139 = vadd.f32 %v3137, %v3127
  %vm3140 = vcmp.gt.f32.partialorder %v3138, 0.0
  %vm3141 = vcmp.gt.f32.partialorder %v3139, 0.0
  %v3142 = vmul.f32 %v3138, 0.01
  %v3143 = vmul.f32 %v3139, 0.01
  %v3144 = vsel %vm3140, %v3138, %v3142
  %v3145 = vsel %vm3141, %v3139, %v3143
  %3146 = vst [vmem:[%s17] sm:$0xff] 0.0
  %vm3147 = vcmask 39936
  %v3149 = vsel %vm3147, %v312, 0
  %v3152 = vsel %vm2772, %v3134, 0
  %v3155 = vsel %vm2772, %v3135, 0
  %3157 = vmatpush.msra.mxu0 0.0
  %3158 = vmatpush.msra.mxu0 0.0
  %3159 = vmatpush.msra.mxu0 0.0
  %3160 = vmatpush.msra.mxu0 0.0
  %3161 = vmatpush.msra.mxu0 0.0
  %3162 = vmatpush.msra.mxu0 0.0
  %3163 = vmatpush.msra.mxu0 0.0
  %3164 = vmatpush.msra.mxu0 0.0
  %3165 = vmatpush.msra.mxu0 0.0
  %3166 = vmatpush.msra.mxu0 0.0
  %3167 = vmatpush.msra.mxu0 0.0
  %3168 = vmatpush.msra.mxu0 0.0
  %3169 = vmatpush.msra.mxu0 0.0
  %3170 = vmatpush.msra.mxu0 0.0
  %3171 = vmatpush.msra.mxu0 0.0
  %3172 = vmatpush.msra.mxu0 %v3152
  %3173 = vmatmul.f32.gmra.mxu0 %v3149
  %v3174 = vpop.f32.mrf.mxu0
  %v3175 = vadd.f32 0.0, %v3174
  %3176 = vdwg.mxu0
  %3177 = vmatpush.msra.mxu0 0.0
  %3178 = vmatpush.msra.mxu0 0.0
  %3179 = vmatpush.msra.mxu0 0.0
  %3180 = vmatpush.msra.mxu0 0.0
  %3181 = vmatpush.msra.mxu0 0.0
  %3182 = vmatpush.msra.mxu0 0.0
  %3183 = vmatpush.msra.mxu0 0.0
  %3184 = vmatpush.msra.mxu0 0.0
  %3185 = vmatpush.msra.mxu0 0.0
  %3186 = vmatpush.msra.mxu0 0.0
  %3187 = vmatpush.msra.mxu0 0.0
  %3188 = vmatpush.msra.mxu0 0.0
  %3189 = vmatpush.msra.mxu0 0.0
  %3190 = vmatpush.msra.mxu0 0.0
  %3191 = vmatpush.msra.mxu0 0.0
  %3192 = vmatpush.msra.mxu0 %v3155
  %3193 = vmatmul.f32.gmra.mxu0 %v3149
  %v3194 = vpop.f32.mrf.mxu0
  %v3195 = vadd.f32 0.0, %v3194
  %3196 = vdwg.mxu0
  %v3198 = vsel %vm3147, %v314, 0
  %3200 = vmatpush.msra.mxu0 0.0
  %3201 = vmatpush.msra.mxu0 0.0
  %3202 = vmatpush.msra.mxu0 0.0
  %3203 = vmatpush.msra.mxu0 0.0
  %3204 = vmatpush.msra.mxu0 0.0
  %3205 = vmatpush.msra.mxu0 0.0
  %3206 = vmatpush.msra.mxu0 0.0
  %3207 = vmatpush.msra.mxu0 0.0
  %3208 = vmatpush.msra.mxu0 0.0
  %3209 = vmatpush.msra.mxu0 0.0
  %3210 = vmatpush.msra.mxu0 0.0
  %3211 = vmatpush.msra.mxu0 0.0
  %3212 = vmatpush.msra.mxu0 0.0
  %3213 = vmatpush.msra.mxu0 0.0
  %3214 = vmatpush.msra.mxu0 0.0
  %3215 = vmatpush.msra.mxu0 %v3152
  %3216 = vmatmul.f32.gmra.mxu0 %v3198
  %v3217 = vpop.f32.mrf.mxu0
  %v3218 = vadd.f32 0.0, %v3217
  %3219 = vdwg.mxu0
  %3220 = vmatpush.msra.mxu0 0.0
  %3221 = vmatpush.msra.mxu0 0.0
  %3222 = vmatpush.msra.mxu0 0.0
  %3223 = vmatpush.msra.mxu0 0.0
  %3224 = vmatpush.msra.mxu0 0.0
  %3225 = vmatpush.msra.mxu0 0.0
  %3226 = vmatpush.msra.mxu0 0.0
  %3227 = vmatpush.msra.mxu0 0.0
  %3228 = vmatpush.msra.mxu0 0.0
  %3229 = vmatpush.msra.mxu0 0.0
  %3230 = vmatpush.msra.mxu0 0.0
  %3231 = vmatpush.msra.mxu0 0.0
  %3232 = vmatpush.msra.mxu0 0.0
  %3233 = vmatpush.msra.mxu0 0.0
  %3234 = vmatpush.msra.mxu0 0.0
  %3235 = vmatpush.msra.mxu0 %v3155
  %3236 = vmatmul.f32.gmra.mxu0 %v3198
  %v3237 = vpop.f32.mrf.mxu0
  %v3238 = vadd.f32 0.0, %v3237
  %3239 = vdwg.mxu0
  %v3241 = vsel %vm3147, %v316, 0
  %3243 = vmatpush.msra.mxu0 0.0
  %3244 = vmatpush.msra.mxu0 0.0
  %3245 = vmatpush.msra.mxu0 0.0
  %3246 = vmatpush.msra.mxu0 0.0
  %3247 = vmatpush.msra.mxu0 0.0
  %3248 = vmatpush.msra.mxu0 0.0
  %3249 = vmatpush.msra.mxu0 0.0
  %3250 = vmatpush.msra.mxu0 0.0
  %3251 = vmatpush.msra.mxu0 0.0
  %3252 = vmatpush.msra.mxu0 0.0
  %3253 = vmatpush.msra.mxu0 0.0
  %3254 = vmatpush.msra.mxu0 0.0
  %3255 = vmatpush.msra.mxu0 0.0
  %3256 = vmatpush.msra.mxu0 0.0
  %3257 = vmatpush.msra.mxu0 0.0
  %3258 = vmatpush.msra.mxu0 %v3152
  %3259 = vmatmul.f32.gmra.mxu0 %v3241
  %v3260 = vpop.f32.mrf.mxu0
  %v3261 = vadd.f32 0.0, %v3260
  %3262 = vdwg.mxu0
  %3263 = vmatpush.msra.mxu0 0.0
  %3264 = vmatpush.msra.mxu0 0.0
  %3265 = vmatpush.msra.mxu0 0.0
  %3266 = vmatpush.msra.mxu0 0.0
  %3267 = vmatpush.msra.mxu0 0.0
  %3268 = vmatpush.msra.mxu0 0.0
  %3269 = vmatpush.msra.mxu0 0.0
  %3270 = vmatpush.msra.mxu0 0.0
  %3271 = vmatpush.msra.mxu0 0.0
  %3272 = vmatpush.msra.mxu0 0.0
  %3273 = vmatpush.msra.mxu0 0.0
  %3274 = vmatpush.msra.mxu0 0.0
  %3275 = vmatpush.msra.mxu0 0.0
  %3276 = vmatpush.msra.mxu0 0.0
  %3277 = vmatpush.msra.mxu0 0.0
  %3278 = vmatpush.msra.mxu0 %v3155
  %3279 = vmatmul.f32.gmra.mxu0 %v3241
  %v3280 = vpop.f32.mrf.mxu0
  %v3281 = vadd.f32 0.0, %v3280
  %3282 = vdwg.mxu0
  %v3284 = vsel %vm3147, %v318, 0
  %3286 = vmatpush.msra.mxu0 0.0
  %3287 = vmatpush.msra.mxu0 0.0
  %3288 = vmatpush.msra.mxu0 0.0
  %3289 = vmatpush.msra.mxu0 0.0
  %3290 = vmatpush.msra.mxu0 0.0
  %3291 = vmatpush.msra.mxu0 0.0
  %3292 = vmatpush.msra.mxu0 0.0
  %3293 = vmatpush.msra.mxu0 0.0
  %3294 = vmatpush.msra.mxu0 0.0
  %3295 = vmatpush.msra.mxu0 0.0
  %3296 = vmatpush.msra.mxu0 0.0
  %3297 = vmatpush.msra.mxu0 0.0
  %3298 = vmatpush.msra.mxu0 0.0
  %3299 = vmatpush.msra.mxu0 0.0
  %3300 = vmatpush.msra.mxu0 0.0
  %3301 = vmatpush.msra.mxu0 %v3152
  %3302 = vmatmul.f32.gmra.mxu0 %v3284
  %v3303 = vpop.f32.mrf.mxu0
  %v3304 = vadd.f32 0.0, %v3303
  %3305 = vdwg.mxu0
  %3306 = vmatpush.msra.mxu0 0.0
  %3307 = vmatpush.msra.mxu0 0.0
  %3308 = vmatpush.msra.mxu0 0.0
  %3309 = vmatpush.msra.mxu0 0.0
  %3310 = vmatpush.msra.mxu0 0.0
  %3311 = vmatpush.msra.mxu0 0.0
  %3312 = vmatpush.msra.mxu0 0.0
  %3313 = vmatpush.msra.mxu0 0.0
  %3314 = vmatpush.msra.mxu0 0.0
  %3315 = vmatpush.msra.mxu0 0.0
  %3316 = vmatpush.msra.mxu0 0.0
  %3317 = vmatpush.msra.mxu0 0.0
  %3318 = vmatpush.msra.mxu0 0.0
  %3319 = vmatpush.msra.mxu0 0.0
  %3320 = vmatpush.msra.mxu0 0.0
  %3321 = vmatpush.msra.mxu0 %v3155
  %3322 = vmatmul.f32.gmra.mxu0 %v3284
  %v3323 = vpop.f32.mrf.mxu0
  %v3324 = vadd.f32 0.0, %v3323
  %3325 = vdwg.mxu0
  %v3327 = vsel %vm2818, %v3238, 0
  %v3330 = vsel %vm2822, %v413, 0
  %3332 = vmatpush.msra.mxu0 %v406
  %3333 = vmatpush.msra.mxu0 %v405
  %3334 = vmatpush.msra.mxu0 %v404
  %3335 = vmatpush.msra.mxu0 %v403
  %3336 = vmatpush.msra.mxu0 %v402
  %3337 = vmatpush.msra.mxu0 %v401
  %3338 = vmatpush.msra.mxu0 %v400
  %3339 = vmatpush.msra.mxu0 %v399
  %3340 = vmatpush.msra.mxu0 %v398
  %3341 = vmatpush.msra.mxu0 %v397
  %3342 = vmatpush.msra.mxu0 %v396
  %3343 = vmatpush.msra.mxu0 %v395
  %3344 = vmatpush.msra.mxu0 %v394
  %3345 = vmatpush.msra.mxu0 %v393
  %3346 = vmatpush.msra.mxu0 %v392
  %3347 = vmatpush.msra.mxu0 %v391
  %3348 = vmatmul.f32.gmra.mxu0 %v3218
  %v3349 = vpop.f32.mrf.mxu0
  %v3350 = vadd.f32 0.0, %v3349
  %3351 = vdwg.mxu0
  %3352 = vmatpush.msra.mxu0 0.0
  %3353 = vmatpush.msra.mxu0 0.0
  %3354 = vmatpush.msra.mxu0 0.0
  %3355 = vmatpush.msra.mxu0 0.0
  %3356 = vmatpush.msra.mxu0 0.0
  %3357 = vmatpush.msra.mxu0 0.0
  %3358 = vmatpush.msra.mxu0 0.0
  %3359 = vmatpush.msra.mxu0 0.0
  %3360 = vmatpush.msra.mxu0 0.0
  %3361 = vmatpush.msra.mxu0 %v3330
  %3362 = vmatpush.msra.mxu0 %v412
  %3363 = vmatpush.msra.mxu0 %v411
  %3364 = vmatpush.msra.mxu0 %v410
  %3365 = vmatpush.msra.mxu0 %v409
  %3366 = vmatpush.msra.mxu0 %v408
  %3367 = vmatpush.msra.mxu0 %v407
  %3368 = vmatmul.f32.gmra.mxu0 %v3327
  %v3369 = vpop.f32.mrf.mxu0
  %v3370 = vadd.f32 %v3350, %v3369
  %3371 = vdwg.mxu0
  %v3373 = vsel %vm2818, %v3195, 0
  %v3376 = vsel %vm2822, %v341, 0
  %3378 = vmatpush.msra.mxu0 %v334
  %3379 = vmatpush.msra.mxu0 %v333
  %3380 = vmatpush.msra.mxu0 %v332
  %3381 = vmatpush.msra.mxu0 %v331
  %3382 = vmatpush.msra.mxu0 %v330
  %3383 = vmatpush.msra.mxu0 %v329
  %3384 = vmatpush.msra.mxu0 %v328
  %3385 = vmatpush.msra.mxu0 %v327
  %3386 = vmatpush.msra.mxu0 %v326
  %3387 = vmatpush.msra.mxu0 %v325
  %3388 = vmatpush.msra.mxu0 %v324
  %3389 = vmatpush.msra.mxu0 %v323
  %3390 = vmatpush.msra.mxu0 %v322
  %3391 = vmatpush.msra.mxu0 %v321
  %3392 = vmatpush.msra.mxu0 %v320
  %3393 = vmatpush.msra.mxu0 %v319
  %3394 = vmatmul.f32.gmra.mxu0 %v3175
  %v3395 = vpop.f32.mrf.mxu0
  %v3396 = vadd.f32 %v3370, %v3395
  %3397 = vdwg.mxu0
  %3398 = vmatpush.msra.mxu0 0.0
  %3399 = vmatpush.msra.mxu0 0.0
  %3400 = vmatpush.msra.mxu0 0.0
  %3401 = vmatpush.msra.mxu0 0.0
  %3402 = vmatpush.msra.mxu0 0.0
  %3403 = vmatpush.msra.mxu0 0.0
  %3404 = vmatpush.msra.mxu0 0.0
  %3405 = vmatpush.msra.mxu0 0.0
  %3406 = vmatpush.msra.mxu0 0.0
  %3407 = vmatpush.msra.mxu0 %v3376
  %3408 = vmatpush.msra.mxu0 %v340
  %3409 = vmatpush.msra.mxu0 %v339
  %3410 = vmatpush.msra.mxu0 %v338
  %3411 = vmatpush.msra.mxu0 %v337
  %3412 = vmatpush.msra.mxu0 %v336
  %3413 = vmatpush.msra.mxu0 %v335
  %3414 = vmatmul.f32.gmra.mxu0 %v3373
  %v3415 = vpop.f32.mrf.mxu0
  %v3416 = vadd.f32 %v3396, %v3415
  %3417 = vdwg.mxu0
  %v3419 = vsel %vm2818, %v3281, 0
  %v3422 = vsel %vm2822, %v485, 0
  %3424 = vmatpush.msra.mxu0 %v478
  %3425 = vmatpush.msra.mxu0 %v477
  %3426 = vmatpush.msra.mxu0 %v476
  %3427 = vmatpush.msra.mxu0 %v475
  %3428 = vmatpush.msra.mxu0 %v474
  %3429 = vmatpush.msra.mxu0 %v473
  %3430 = vmatpush.msra.mxu0 %v472
  %3431 = vmatpush.msra.mxu0 %v471
  %3432 = vmatpush.msra.mxu0 %v470
  %3433 = vmatpush.msra.mxu0 %v469
  %3434 = vmatpush.msra.mxu0 %v468
  %3435 = vmatpush.msra.mxu0 %v467
  %3436 = vmatpush.msra.mxu0 %v466
  %3437 = vmatpush.msra.mxu0 %v465
  %3438 = vmatpush.msra.mxu0 %v464
  %3439 = vmatpush.msra.mxu0 %v463
  %3440 = vmatmul.f32.gmra.mxu0 %v3261
  %v3441 = vpop.f32.mrf.mxu0
  %v3442 = vadd.f32 0.0, %v3441
  %3443 = vdwg.mxu0
  %3444 = vmatpush.msra.mxu0 0.0
  %3445 = vmatpush.msra.mxu0 0.0
  %3446 = vmatpush.msra.mxu0 0.0
  %3447 = vmatpush.msra.mxu0 0.0
  %3448 = vmatpush.msra.mxu0 0.0
  %3449 = vmatpush.msra.mxu0 0.0
  %3450 = vmatpush.msra.mxu0 0.0
  %3451 = vmatpush.msra.mxu0 0.0
  %3452 = vmatpush.msra.mxu0 0.0
  %3453 = vmatpush.msra.mxu0 %v3422
  %3454 = vmatpush.msra.mxu0 %v484
  %3455 = vmatpush.msra.mxu0 %v483
  %3456 = vmatpush.msra.mxu0 %v482
  %3457 = vmatpush.msra.mxu0 %v481
  %3458 = vmatpush.msra.mxu0 %v480
  %3459 = vmatpush.msra.mxu0 %v479
  %3460 = vmatmul.f32.gmra.mxu0 %v3419
  %v3461 = vpop.f32.mrf.mxu0
  %v3462 = vadd.f32 %v3442, %v3461
  %3463 = vdwg.mxu0
  %v3464 = vadd.f32 %v3416, %v3462
  %v3466 = vsel %vm2818, %v3324, 0
  %v3469 = vsel %vm2822, %v557, 0
  %3471 = vmatpush.msra.mxu0 %v550
  %3472 = vmatpush.msra.mxu0 %v549
  %3473 = vmatpush.msra.mxu0 %v548
  %3474 = vmatpush.msra.mxu0 %v547
  %3475 = vmatpush.msra.mxu0 %v546
  %3476 = vmatpush.msra.mxu0 %v545
  %3477 = vmatpush.msra.mxu0 %v544
  %3478 = vmatpush.msra.mxu0 %v543
  %3479 = vmatpush.msra.mxu0 %v542
  %3480 = vmatpush.msra.mxu0 %v541
  %3481 = vmatpush.msra.mxu0 %v540
  %3482 = vmatpush.msra.mxu0 %v539
  %3483 = vmatpush.msra.mxu0 %v538
  %3484 = vmatpush.msra.mxu0 %v537
  %3485 = vmatpush.msra.mxu0 %v536
  %3486 = vmatpush.msra.mxu0 %v535
  %3487 = vmatmul.f32.gmra.mxu0 %v3304
  %v3488 = vpop.f32.mrf.mxu0
  %v3489 = vadd.f32 0.0, %v3488
  %3490 = vdwg.mxu0
  %3491 = vmatpush.msra.mxu0 0.0
  %3492 = vmatpush.msra.mxu0 0.0
  %3493 = vmatpush.msra.mxu0 0.0
  %3494 = vmatpush.msra.mxu0 0.0
  %3495 = vmatpush.msra.mxu0 0.0
  %3496 = vmatpush.msra.mxu0 0.0
  %3497 = vmatpush.msra.mxu0 0.0
  %3498 = vmatpush.msra.mxu0 0.0
  %3499 = vmatpush.msra.mxu0 0.0
  %3500 = vmatpush.msra.mxu0 %v3469
  %3501 = vmatpush.msra.mxu0 %v556
  %3502 = vmatpush.msra.mxu0 %v555
  %3503 = vmatpush.msra.mxu0 %v554
  %3504 = vmatpush.msra.mxu0 %v553
  %3505 = vmatpush.msra.mxu0 %v552
  %3506 = vmatpush.msra.mxu0 %v551
  %3507 = vmatmul.f32.gmra.mxu0 %v3466
  %v3508 = vpop.f32.mrf.mxu0
  %v3509 = vadd.f32 %v3489, %v3508
  %3510 = vdwg.mxu0
  %v3511 = vadd.f32 %v3464, %v3509
  %v3513 = vsel %vm2822, %v437, 0
  %3515 = vmatpush.msra.mxu0 %v430
  %3516 = vmatpush.msra.mxu0 %v429
  %3517 = vmatpush.msra.mxu0 %v428
  %3518 = vmatpush.msra.mxu0 %v427
  %3519 = vmatpush.msra.mxu0 %v426
  %3520 = vmatpush.msra.mxu0 %v425
  %3521 = vmatpush.msra.mxu0 %v424
  %3522 = vmatpush.msra.mxu0 %v423
  %3523 = vmatpush.msra.mxu0 %v422
  %3524 = vmatpush.msra.mxu0 %v421
  %3525 = vmatpush.msra.mxu0 %v420
  %3526 = vmatpush.msra.mxu0 %v419
  %3527 = vmatpush.msra.mxu0 %v418
  %3528 = vmatpush.msra.mxu0 %v417
  %3529 = vmatpush.msra.mxu0 %v416
  %3530 = vmatpush.msra.mxu0 %v415
  %3531 = vmatmul.f32.gmra.mxu0 %v3218
  %v3532 = vpop.f32.mrf.mxu0
  %v3533 = vadd.f32 0.0, %v3532
  %3534 = vdwg.mxu0
  %3535 = vmatpush.msra.mxu0 0.0
  %3536 = vmatpush.msra.mxu0 0.0
  %3537 = vmatpush.msra.mxu0 0.0
  %3538 = vmatpush.msra.mxu0 0.0
  %3539 = vmatpush.msra.mxu0 0.0
  %3540 = vmatpush.msra.mxu0 0.0
  %3541 = vmatpush.msra.mxu0 0.0
  %3542 = vmatpush.msra.mxu0 0.0
  %3543 = vmatpush.msra.mxu0 0.0
  %3544 = vmatpush.msra.mxu0 %v3513
  %3545 = vmatpush.msra.mxu0 %v436
  %3546 = vmatpush.msra.mxu0 %v435
  %3547 = vmatpush.msra.mxu0 %v434
  %3548 = vmatpush.msra.mxu0 %v433
  %3549 = vmatpush.msra.mxu0 %v432
  %3550 = vmatpush.msra.mxu0 %v431
  %3551 = vmatmul.f32.gmra.mxu0 %v3327
  %v3552 = vpop.f32.mrf.mxu0
  %v3553 = vadd.f32 %v3533, %v3552
  %3554 = vdwg.mxu0
  %v3556 = vsel %vm2822, %v365, 0
  %3558 = vmatpush.msra.mxu0 %v358
  %3559 = vmatpush.msra.mxu0 %v357
  %3560 = vmatpush.msra.mxu0 %v356
  %3561 = vmatpush.msra.mxu0 %v355
  %3562 = vmatpush.msra.mxu0 %v354
  %3563 = vmatpush.msra.mxu0 %v353
  %3564 = vmatpush.msra.mxu0 %v352
  %3565 = vmatpush.msra.mxu0 %v351
  %3566 = vmatpush.msra.mxu0 %v350
  %3567 = vmatpush.msra.mxu0 %v349
  %3568 = vmatpush.msra.mxu0 %v348
  %3569 = vmatpush.msra.mxu0 %v347
  %3570 = vmatpush.msra.mxu0 %v346
  %3571 = vmatpush.msra.mxu0 %v345
  %3572 = vmatpush.msra.mxu0 %v344
  %3573 = vmatpush.msra.mxu0 %v343
  %3574 = vmatmul.f32.gmra.mxu0 %v3175
  %v3575 = vpop.f32.mrf.mxu0
  %v3576 = vadd.f32 %v3553, %v3575
  %3577 = vdwg.mxu0
  %3578 = vmatpush.msra.mxu0 0.0
  %3579 = vmatpush.msra.mxu0 0.0
  %3580 = vmatpush.msra.mxu0 0.0
  %3581 = vmatpush.msra.mxu0 0.0
  %3582 = vmatpush.msra.mxu0 0.0
  %3583 = vmatpush.msra.mxu0 0.0
  %3584 = vmatpush.msra.mxu0 0.0
  %3585 = vmatpush.msra.mxu0 0.0
  %3586 = vmatpush.msra.mxu0 0.0
  %3587 = vmatpush.msra.mxu0 %v3556
  %3588 = vmatpush.msra.mxu0 %v364
  %3589 = vmatpush.msra.mxu0 %v363
  %3590 = vmatpush.msra.mxu0 %v362
  %3591 = vmatpush.msra.mxu0 %v361
  %3592 = vmatpush.msra.mxu0 %v360
  %3593 = vmatpush.msra.mxu0 %v359
  %3594 = vmatmul.f32.gmra.mxu0 %v3373
  %v3595 = vpop.f32.mrf.mxu0
  %v3596 = vadd.f32 %v3576, %v3595
  %3597 = vdwg.mxu0
  %v3599 = vsel %vm2822, %v509, 0
  %3601 = vmatpush.msra.mxu0 %v502
  %3602 = vmatpush.msra.mxu0 %v501
  %3603 = vmatpush.msra.mxu0 %v500
  %3604 = vmatpush.msra.mxu0 %v499
  %3605 = vmatpush.msra.mxu0 %v498
  %3606 = vmatpush.msra.mxu0 %v497
  %3607 = vmatpush.msra.mxu0 %v496
  %3608 = vmatpush.msra.mxu0 %v495
  %3609 = vmatpush.msra.mxu0 %v494
  %3610 = vmatpush.msra.mxu0 %v493
  %3611 = vmatpush.msra.mxu0 %v492
  %3612 = vmatpush.msra.mxu0 %v491
  %3613 = vmatpush.msra.mxu0 %v490
  %3614 = vmatpush.msra.mxu0 %v489
  %3615 = vmatpush.msra.mxu0 %v488
  %3616 = vmatpush.msra.mxu0 %v487
  %3617 = vmatmul.f32.gmra.mxu0 %v3261
  %v3618 = vpop.f32.mrf.mxu0
  %v3619 = vadd.f32 0.0, %v3618
  %3620 = vdwg.mxu0
  %3621 = vmatpush.msra.mxu0 0.0
  %3622 = vmatpush.msra.mxu0 0.0
  %3623 = vmatpush.msra.mxu0 0.0
  %3624 = vmatpush.msra.mxu0 0.0
  %3625 = vmatpush.msra.mxu0 0.0
  %3626 = vmatpush.msra.mxu0 0.0
  %3627 = vmatpush.msra.mxu0 0.0
  %3628 = vmatpush.msra.mxu0 0.0
  %3629 = vmatpush.msra.mxu0 0.0
  %3630 = vmatpush.msra.mxu0 %v3599
  %3631 = vmatpush.msra.mxu0 %v508
  %3632 = vmatpush.msra.mxu0 %v507
  %3633 = vmatpush.msra.mxu0 %v506
  %3634 = vmatpush.msra.mxu0 %v505
  %3635 = vmatpush.msra.mxu0 %v504
  %3636 = vmatpush.msra.mxu0 %v503
  %3637 = vmatmul.f32.gmra.mxu0 %v3419
  %v3638 = vpop.f32.mrf.mxu0
  %v3639 = vadd.f32 %v3619, %v3638
  %3640 = vdwg.mxu0
  %v3641 = vadd.f32 %v3596, %v3639
  %v3643 = vsel %vm2822, %v581, 0
  %3645 = vmatpush.msra.mxu0 %v574
  %3646 = vmatpush.msra.mxu0 %v573
  %3647 = vmatpush.msra.mxu0 %v572
  %3648 = vmatpush.msra.mxu0 %v571
  %3649 = vmatpush.msra.mxu0 %v570
  %3650 = vmatpush.msra.mxu0 %v569
  %3651 = vmatpush.msra.mxu0 %v568
  %3652 = vmatpush.msra.mxu0 %v567
  %3653 = vmatpush.msra.mxu0 %v566
  %3654 = vmatpush.msra.mxu0 %v565
  %3655 = vmatpush.msra.mxu0 %v564
  %3656 = vmatpush.msra.mxu0 %v563
  %3657 = vmatpush.msra.mxu0 %v562
  %3658 = vmatpush.msra.mxu0 %v561
  %3659 = vmatpush.msra.mxu0 %v560
  %3660 = vmatpush.msra.mxu0 %v559
  %3661 = vmatmul.f32.gmra.mxu0 %v3304
  %v3662 = vpop.f32.mrf.mxu0
  %v3663 = vadd.f32 0.0, %v3662
  %3664 = vdwg.mxu0
  %3665 = vmatpush.msra.mxu0 0.0
  %3666 = vmatpush.msra.mxu0 0.0
  %3667 = vmatpush.msra.mxu0 0.0
  %3668 = vmatpush.msra.mxu0 0.0
  %3669 = vmatpush.msra.mxu0 0.0
  %3670 = vmatpush.msra.mxu0 0.0
  %3671 = vmatpush.msra.mxu0 0.0
  %3672 = vmatpush.msra.mxu0 0.0
  %3673 = vmatpush.msra.mxu0 0.0
  %3674 = vmatpush.msra.mxu0 %v3643
  %3675 = vmatpush.msra.mxu0 %v580
  %3676 = vmatpush.msra.mxu0 %v579
  %3677 = vmatpush.msra.mxu0 %v578
  %3678 = vmatpush.msra.mxu0 %v577
  %3679 = vmatpush.msra.mxu0 %v576
  %3680 = vmatpush.msra.mxu0 %v575
  %3681 = vmatmul.f32.gmra.mxu0 %v3466
  %v3682 = vpop.f32.mrf.mxu0
  %v3683 = vadd.f32 %v3663, %v3682
  %3684 = vdwg.mxu0
  %v3685 = vadd.f32 %v3641, %v3683
  %v3686 = vmax.f32 %v3511, %v3685
  %v3688 = vsel %vm2822, %v461, 0
  %3690 = vmatpush.msra.mxu0 %v454
  %3691 = vmatpush.msra.mxu0 %v453
  %3692 = vmatpush.msra.mxu0 %v452
  %3693 = vmatpush.msra.mxu0 %v451
  %3694 = vmatpush.msra.mxu0 %v450
  %3695 = vmatpush.msra.mxu0 %v449
  %3696 = vmatpush.msra.mxu0 %v448
  %3697 = vmatpush.msra.mxu0 %v447
  %3698 = vmatpush.msra.mxu0 %v446
  %3699 = vmatpush.msra.mxu0 %v445
  %3700 = vmatpush.msra.mxu0 %v444
  %3701 = vmatpush.msra.mxu0 %v443
  %3702 = vmatpush.msra.mxu0 %v442
  %3703 = vmatpush.msra.mxu0 %v441
  %3704 = vmatpush.msra.mxu0 %v440
  %3705 = vmatpush.msra.mxu0 %v439
  %3706 = vmatmul.f32.gmra.mxu0 %v3218
  %v3707 = vpop.f32.mrf.mxu0
  %v3708 = vadd.f32 0.0, %v3707
  %3709 = vdwg.mxu0
  %3710 = vmatpush.msra.mxu0 0.0
  %3711 = vmatpush.msra.mxu0 0.0
  %3712 = vmatpush.msra.mxu0 0.0
  %3713 = vmatpush.msra.mxu0 0.0
  %3714 = vmatpush.msra.mxu0 0.0
  %3715 = vmatpush.msra.mxu0 0.0
  %3716 = vmatpush.msra.mxu0 0.0
  %3717 = vmatpush.msra.mxu0 0.0
  %3718 = vmatpush.msra.mxu0 0.0
  %3719 = vmatpush.msra.mxu0 %v3688
  %3720 = vmatpush.msra.mxu0 %v460
  %3721 = vmatpush.msra.mxu0 %v459
  %3722 = vmatpush.msra.mxu0 %v458
  %3723 = vmatpush.msra.mxu0 %v457
  %3724 = vmatpush.msra.mxu0 %v456
  %3725 = vmatpush.msra.mxu0 %v455
  %3726 = vmatmul.f32.gmra.mxu0 %v3327
  %v3727 = vpop.f32.mrf.mxu0
  %v3728 = vadd.f32 %v3708, %v3727
  %3729 = vdwg.mxu0
  %v3731 = vsel %vm2822, %v389, 0
  %3733 = vmatpush.msra.mxu0 %v382
  %3734 = vmatpush.msra.mxu0 %v381
  %3735 = vmatpush.msra.mxu0 %v380
  %3736 = vmatpush.msra.mxu0 %v379
  %3737 = vmatpush.msra.mxu0 %v378
  %3738 = vmatpush.msra.mxu0 %v377
  %3739 = vmatpush.msra.mxu0 %v376
  %3740 = vmatpush.msra.mxu0 %v375
  %3741 = vmatpush.msra.mxu0 %v374
  %3742 = vmatpush.msra.mxu0 %v373
  %3743 = vmatpush.msra.mxu0 %v372
  %3744 = vmatpush.msra.mxu0 %v371
  %3745 = vmatpush.msra.mxu0 %v370
  %3746 = vmatpush.msra.mxu0 %v369
  %3747 = vmatpush.msra.mxu0 %v368
  %3748 = vmatpush.msra.mxu0 %v367
  %3749 = vmatmul.f32.gmra.mxu0 %v3175
  %v3750 = vpop.f32.mrf.mxu0
  %v3751 = vadd.f32 %v3728, %v3750
  %3752 = vdwg.mxu0
  %3753 = vmatpush.msra.mxu0 0.0
  %3754 = vmatpush.msra.mxu0 0.0
  %3755 = vmatpush.msra.mxu0 0.0
  %3756 = vmatpush.msra.mxu0 0.0
  %3757 = vmatpush.msra.mxu0 0.0
  %3758 = vmatpush.msra.mxu0 0.0
  %3759 = vmatpush.msra.mxu0 0.0
  %3760 = vmatpush.msra.mxu0 0.0
  %3761 = vmatpush.msra.mxu0 0.0
  %3762 = vmatpush.msra.mxu0 %v3731
  %3763 = vmatpush.msra.mxu0 %v388
  %3764 = vmatpush.msra.mxu0 %v387
  %3765 = vmatpush.msra.mxu0 %v386
  %3766 = vmatpush.msra.mxu0 %v385
  %3767 = vmatpush.msra.mxu0 %v384
  %3768 = vmatpush.msra.mxu0 %v383
  %3769 = vmatmul.f32.gmra.mxu0 %v3373
  %v3770 = vpop.f32.mrf.mxu0
  %v3771 = vadd.f32 %v3751, %v3770
  %3772 = vdwg.mxu0
  %v3774 = vsel %vm2822, %v533, 0
  %3776 = vmatpush.msra.mxu0 %v526
  %3777 = vmatpush.msra.mxu0 %v525
  %3778 = vmatpush.msra.mxu0 %v524
  %3779 = vmatpush.msra.mxu0 %v523
  %3780 = vmatpush.msra.mxu0 %v522
  %3781 = vmatpush.msra.mxu0 %v521
  %3782 = vmatpush.msra.mxu0 %v520
  %3783 = vmatpush.msra.mxu0 %v519
  %3784 = vmatpush.msra.mxu0 %v518
  %3785 = vmatpush.msra.mxu0 %v517
  %3786 = vmatpush.msra.mxu0 %v516
  %3787 = vmatpush.msra.mxu0 %v515
  %3788 = vmatpush.msra.mxu0 %v514
  %3789 = vmatpush.msra.mxu0 %v513
  %3790 = vmatpush.msra.mxu0 %v512
  %3791 = vmatpush.msra.mxu0 %v511
  %3792 = vmatmul.f32.gmra.mxu0 %v3261
  %v3793 = vpop.f32.mrf.mxu0
  %v3794 = vadd.f32 0.0, %v3793
  %3795 = vdwg.mxu0
  %3796 = vmatpush.msra.mxu0 0.0
  %3797 = vmatpush.msra.mxu0 0.0
  %3798 = vmatpush.msra.mxu0 0.0
  %3799 = vmatpush.msra.mxu0 0.0
  %3800 = vmatpush.msra.mxu0 0.0
  %3801 = vmatpush.msra.mxu0 0.0
  %3802 = vmatpush.msra.mxu0 0.0
  %3803 = vmatpush.msra.mxu0 0.0
  %3804 = vmatpush.msra.mxu0 0.0
  %3805 = vmatpush.msra.mxu0 %v3774
  %3806 = vmatpush.msra.mxu0 %v532
  %3807 = vmatpush.msra.mxu0 %v531
  %3808 = vmatpush.msra.mxu0 %v530
  %3809 = vmatpush.msra.mxu0 %v529
  %3810 = vmatpush.msra.mxu0 %v528
  %3811 = vmatpush.msra.mxu0 %v527
  %3812 = vmatmul.f32.gmra.mxu0 %v3419
  %v3813 = vpop.f32.mrf.mxu0
  %v3814 = vadd.f32 %v3794, %v3813
  %3815 = vdwg.mxu0
  %v3816 = vadd.f32 %v3771, %v3814
  %v3818 = vsel %vm2822, %v605, 0
  %3820 = vmatpush.msra.mxu0 %v598
  %3821 = vmatpush.msra.mxu0 %v597
  %3822 = vmatpush.msra.mxu0 %v596
  %3823 = vmatpush.msra.mxu0 %v595
  %3824 = vmatpush.msra.mxu0 %v594
  %3825 = vmatpush.msra.mxu0 %v593
  %3826 = vmatpush.msra.mxu0 %v592
  %3827 = vmatpush.msra.mxu0 %v591
  %3828 = vmatpush.msra.mxu0 %v590
  %3829 = vmatpush.msra.mxu0 %v589
  %3830 = vmatpush.msra.mxu0 %v588
  %3831 = vmatpush.msra.mxu0 %v587
  %3832 = vmatpush.msra.mxu0 %v586
  %3833 = vmatpush.msra.mxu0 %v585
  %3834 = vmatpush.msra.mxu0 %v584
  %3835 = vmatpush.msra.mxu0 %v583
  %3836 = vmatmul.f32.gmra.mxu0 %v3304
  %v3837 = vpop.f32.mrf.mxu0
  %v3838 = vadd.f32 0.0, %v3837
  %3839 = vdwg.mxu0
  %3840 = vmatpush.msra.mxu0 0.0
  %3841 = vmatpush.msra.mxu0 0.0
  %3842 = vmatpush.msra.mxu0 0.0
  %3843 = vmatpush.msra.mxu0 0.0
  %3844 = vmatpush.msra.mxu0 0.0
  %3845 = vmatpush.msra.mxu0 0.0
  %3846 = vmatpush.msra.mxu0 0.0
  %3847 = vmatpush.msra.mxu0 0.0
  %3848 = vmatpush.msra.mxu0 0.0
  %3849 = vmatpush.msra.mxu0 %v3818
  %3850 = vmatpush.msra.mxu0 %v604
  %3851 = vmatpush.msra.mxu0 %v603
  %3852 = vmatpush.msra.mxu0 %v602
  %3853 = vmatpush.msra.mxu0 %v601
  %3854 = vmatpush.msra.mxu0 %v600
  %3855 = vmatpush.msra.mxu0 %v599
  %3856 = vmatmul.f32.gmra.mxu0 %v3466
  %v3857 = vpop.f32.mrf.mxu0
  %v3858 = vadd.f32 %v3838, %v3857
  %3859 = vdwg.mxu0
  %v3860 = vadd.f32 %v3816, %v3858
  %v3861 = vmax.f32 %v3686, %v3860
  %vm3862 = vcmask 141312
  %v3863 = vsel %vm3862, %v3861, -inf
  %v3864 = vrot.slane %v3863, 4
  %v3865 = vmax.f32 %v3863, %v3864
  %v3866 = vrot.slane %v3865, 2
  %v3867 = vmax.f32 %v3865, %v3866
  %v3868 = vrot.slane %v3867, 1
  %v3869 = vmax.f32 %v3867, %v3868
  %v3871 = vsel %vm1594, %v3869, 0
  %v3874 = vsel %vm1382, %v672, 0
  %3876 = vmatpush.msra.mxu0 0.0
  %3877 = vmatpush.msra.mxu0 0.0
  %3878 = vmatpush.msra.mxu0 0.0
  %3879 = vmatpush.msra.mxu0 0.0
  %3880 = vmatpush.msra.mxu0 0.0
  %3881 = vmatpush.msra.mxu0 0.0
  %3882 = vmatpush.msra.mxu0 0.0
  %3883 = vmatpush.msra.mxu0 0.0
  %3884 = vmatpush.msra.mxu0 0.0
  %3885 = vmatpush.msra.mxu0 0.0
  %3886 = vmatpush.msra.mxu0 0.0
  %3887 = vmatpush.msra.mxu0 0.0
  %3888 = vmatpush.msra.mxu0 0.0
  %3889 = vmatpush.msra.mxu0 %v3874
  %3890 = vmatpush.msra.mxu0 %v671
  %3891 = vmatpush.msra.mxu0 %v670
  %3892 = vmatmul.f32.gmra.mxu0 %v3871
  %v3893 = vpop.f32.mrf.mxu0
  %v3894 = vadd.f32 %v673, %v3893
  %3895 = vdwg.mxu0
  %3896 = vst [vmem:[%s17] sm:$0x1] %v3894
  %v3898 = vsel %vm2772, %v3144, 0
  %v3901 = vsel %vm2772, %v3145, 0
  %3903 = vmatpush.msra.mxu0 0.0
  %3904 = vmatpush.msra.mxu0 0.0
  %3905 = vmatpush.msra.mxu0 0.0
  %3906 = vmatpush.msra.mxu0 0.0
  %3907 = vmatpush.msra.mxu0 0.0
  %3908 = vmatpush.msra.mxu0 0.0
  %3909 = vmatpush.msra.mxu0 0.0
  %3910 = vmatpush.msra.mxu0 0.0
  %3911 = vmatpush.msra.mxu0 0.0
  %3912 = vmatpush.msra.mxu0 0.0
  %3913 = vmatpush.msra.mxu0 0.0
  %3914 = vmatpush.msra.mxu0 0.0
  %3915 = vmatpush.msra.mxu0 0.0
  %3916 = vmatpush.msra.mxu0 0.0
  %3917 = vmatpush.msra.mxu0 0.0
  %3918 = vmatpush.msra.mxu0 %v3898
  %3919 = vmatmul.f32.gmra.mxu0 %v3149
  %v3920 = vpop.f32.mrf.mxu0
  %v3921 = vadd.f32 0.0, %v3920
  %3922 = vdwg.mxu0
  %3923 = vmatpush.msra.mxu0 0.0
  %3924 = vmatpush.msra.mxu0 0.0
  %3925 = vmatpush.msra.mxu0 0.0
  %3926 = vmatpush.msra.mxu0 0.0
  %3927 = vmatpush.msra.mxu0 0.0
  %3928 = vmatpush.msra.mxu0 0.0
  %3929 = vmatpush.msra.mxu0 0.0
  %3930 = vmatpush.msra.mxu0 0.0
  %3931 = vmatpush.msra.mxu0 0.0
  %3932 = vmatpush.msra.mxu0 0.0
  %3933 = vmatpush.msra.mxu0 0.0
  %3934 = vmatpush.msra.mxu0 0.0
  %3935 = vmatpush.msra.mxu0 0.0
  %3936 = vmatpush.msra.mxu0 0.0
  %3937 = vmatpush.msra.mxu0 0.0
  %3938 = vmatpush.msra.mxu0 %v3901
  %3939 = vmatmul.f32.gmra.mxu0 %v3149
  %v3940 = vpop.f32.mrf.mxu0
  %v3941 = vadd.f32 0.0, %v3940
  %3942 = vdwg.mxu0
  %3943 = vmatpush.msra.mxu0 0.0
  %3944 = vmatpush.msra.mxu0 0.0
  %3945 = vmatpush.msra.mxu0 0.0
  %3946 = vmatpush.msra.mxu0 0.0
  %3947 = vmatpush.msra.mxu0 0.0
  %3948 = vmatpush.msra.mxu0 0.0
  %3949 = vmatpush.msra.mxu0 0.0
  %3950 = vmatpush.msra.mxu0 0.0
  %3951 = vmatpush.msra.mxu0 0.0
  %3952 = vmatpush.msra.mxu0 0.0
  %3953 = vmatpush.msra.mxu0 0.0
  %3954 = vmatpush.msra.mxu0 0.0
  %3955 = vmatpush.msra.mxu0 0.0
  %3956 = vmatpush.msra.mxu0 0.0
  %3957 = vmatpush.msra.mxu0 0.0
  %3958 = vmatpush.msra.mxu0 %v3898
  %3959 = vmatmul.f32.gmra.mxu0 %v3198
  %v3960 = vpop.f32.mrf.mxu0
  %v3961 = vadd.f32 0.0, %v3960
  %3962 = vdwg.mxu0
  %3963 = vmatpush.msra.mxu0 0.0
  %3964 = vmatpush.msra.mxu0 0.0
  %3965 = vmatpush.msra.mxu0 0.0
  %3966 = vmatpush.msra.mxu0 0.0
  %3967 = vmatpush.msra.mxu0 0.0
  %3968 = vmatpush.msra.mxu0 0.0
  %3969 = vmatpush.msra.mxu0 0.0
  %3970 = vmatpush.msra.mxu0 0.0
  %3971 = vmatpush.msra.mxu0 0.0
  %3972 = vmatpush.msra.mxu0 0.0
  %3973 = vmatpush.msra.mxu0 0.0
  %3974 = vmatpush.msra.mxu0 0.0
  %3975 = vmatpush.msra.mxu0 0.0
  %3976 = vmatpush.msra.mxu0 0.0
  %3977 = vmatpush.msra.mxu0 0.0
  %3978 = vmatpush.msra.mxu0 %v3901
  %3979 = vmatmul.f32.gmra.mxu0 %v3198
  %v3980 = vpop.f32.mrf.mxu0
  %v3981 = vadd.f32 0.0, %v3980
  %3982 = vdwg.mxu0
  %3983 = vmatpush.msra.mxu0 0.0
  %3984 = vmatpush.msra.mxu0 0.0
  %3985 = vmatpush.msra.mxu0 0.0
  %3986 = vmatpush.msra.mxu0 0.0
  %3987 = vmatpush.msra.mxu0 0.0
  %3988 = vmatpush.msra.mxu0 0.0
  %3989 = vmatpush.msra.mxu0 0.0
  %3990 = vmatpush.msra.mxu0 0.0
  %3991 = vmatpush.msra.mxu0 0.0
  %3992 = vmatpush.msra.mxu0 0.0
  %3993 = vmatpush.msra.mxu0 0.0
  %3994 = vmatpush.msra.mxu0 0.0
  %3995 = vmatpush.msra.mxu0 0.0
  %3996 = vmatpush.msra.mxu0 0.0
  %3997 = vmatpush.msra.mxu0 0.0
  %3998 = vmatpush.msra.mxu0 %v3898
  %3999 = vmatmul.f32.gmra.mxu0 %v3241
  %v4000 = vpop.f32.mrf.mxu0
  %v4001 = vadd.f32 0.0, %v4000
  %4002 = vdwg.mxu0
  %4003 = vmatpush.msra.mxu0 0.0
  %4004 = vmatpush.msra.mxu0 0.0
  %4005 = vmatpush.msra.mxu0 0.0
  %4006 = vmatpush.msra.mxu0 0.0
  %4007 = vmatpush.msra.mxu0 0.0
  %4008 = vmatpush.msra.mxu0 0.0
  %4009 = vmatpush.msra.mxu0 0.0
  %4010 = vmatpush.msra.mxu0 0.0
  %4011 = vmatpush.msra.mxu0 0.0
  %4012 = vmatpush.msra.mxu0 0.0
  %4013 = vmatpush.msra.mxu0 0.0
  %4014 = vmatpush.msra.mxu0 0.0
  %4015 = vmatpush.msra.mxu0 0.0
  %4016 = vmatpush.msra.mxu0 0.0
  %4017 = vmatpush.msra.mxu0 0.0
  %4018 = vmatpush.msra.mxu0 %v3901
  %4019 = vmatmul.f32.gmra.mxu0 %v3241
  %v4020 = vpop.f32.mrf.mxu0
  %v4021 = vadd.f32 0.0, %v4020
  %4022 = vdwg.mxu0
  %4023 = vmatpush.msra.mxu0 0.0
  %4024 = vmatpush.msra.mxu0 0.0
  %4025 = vmatpush.msra.mxu0 0.0
  %4026 = vmatpush.msra.mxu0 0.0
  %4027 = vmatpush.msra.mxu0 0.0
  %4028 = vmatpush.msra.mxu0 0.0
  %4029 = vmatpush.msra.mxu0 0.0
  %4030 = vmatpush.msra.mxu0 0.0
  %4031 = vmatpush.msra.mxu0 0.0
  %4032 = vmatpush.msra.mxu0 0.0
  %4033 = vmatpush.msra.mxu0 0.0
  %4034 = vmatpush.msra.mxu0 0.0
  %4035 = vmatpush.msra.mxu0 0.0
  %4036 = vmatpush.msra.mxu0 0.0
  %4037 = vmatpush.msra.mxu0 0.0
  %4038 = vmatpush.msra.mxu0 %v3898
  %4039 = vmatmul.f32.gmra.mxu0 %v3284
  %v4040 = vpop.f32.mrf.mxu0
  %v4041 = vadd.f32 0.0, %v4040
  %4042 = vdwg.mxu0
  %4043 = vmatpush.msra.mxu0 0.0
  %4044 = vmatpush.msra.mxu0 0.0
  %4045 = vmatpush.msra.mxu0 0.0
  %4046 = vmatpush.msra.mxu0 0.0
  %4047 = vmatpush.msra.mxu0 0.0
  %4048 = vmatpush.msra.mxu0 0.0
  %4049 = vmatpush.msra.mxu0 0.0
  %4050 = vmatpush.msra.mxu0 0.0
  %4051 = vmatpush.msra.mxu0 0.0
  %4052 = vmatpush.msra.mxu0 0.0
  %4053 = vmatpush.msra.mxu0 0.0
  %4054 = vmatpush.msra.mxu0 0.0
  %4055 = vmatpush.msra.mxu0 0.0
  %4056 = vmatpush.msra.mxu0 0.0
  %4057 = vmatpush.msra.mxu0 0.0
  %4058 = vmatpush.msra.mxu0 %v3901
  %4059 = vmatmul.f32.gmra.mxu0 %v3284
  %v4060 = vpop.f32.mrf.mxu0
  %v4061 = vadd.f32 0.0, %v4060
  %4062 = vdwg.mxu0
  %v4064 = vsel %vm2818, %v3981, 0
  %4066 = vmatpush.msra.mxu0 %v406
  %4067 = vmatpush.msra.mxu0 %v405
  %4068 = vmatpush.msra.mxu0 %v404
  %4069 = vmatpush.msra.mxu0 %v403
  %4070 = vmatpush.msra.mxu0 %v402
  %4071 = vmatpush.msra.mxu0 %v401
  %4072 = vmatpush.msra.mxu0 %v400
  %4073 = vmatpush.msra.mxu0 %v399
  %4074 = vmatpush.msra.mxu0 %v398
  %4075 = vmatpush.msra.mxu0 %v397
  %4076 = vmatpush.msra.mxu0 %v396
  %4077 = vmatpush.msra.mxu0 %v395
  %4078 = vmatpush.msra.mxu0 %v394
  %4079 = vmatpush.msra.mxu0 %v393
  %4080 = vmatpush.msra.mxu0 %v392
  %4081 = vmatpush.msra.mxu0 %v391
  %4082 = vmatmul.f32.gmra.mxu0 %v3961
  %v4083 = vpop.f32.mrf.mxu0
  %v4084 = vadd.f32 0.0, %v4083
  %4085 = vdwg.mxu0
  %4086 = vmatpush.msra.mxu0 0.0
  %4087 = vmatpush.msra.mxu0 0.0
  %4088 = vmatpush.msra.mxu0 0.0
  %4089 = vmatpush.msra.mxu0 0.0
  %4090 = vmatpush.msra.mxu0 0.0
  %4091 = vmatpush.msra.mxu0 0.0
  %4092 = vmatpush.msra.mxu0 0.0
  %4093 = vmatpush.msra.mxu0 0.0
  %4094 = vmatpush.msra.mxu0 0.0
  %4095 = vmatpush.msra.mxu0 %v3330
  %4096 = vmatpush.msra.mxu0 %v412
  %4097 = vmatpush.msra.mxu0 %v411
  %4098 = vmatpush.msra.mxu0 %v410
  %4099 = vmatpush.msra.mxu0 %v409
  %4100 = vmatpush.msra.mxu0 %v408
  %4101 = vmatpush.msra.mxu0 %v407
  %4102 = vmatmul.f32.gmra.mxu0 %v4064
  %v4103 = vpop.f32.mrf.mxu0
  %v4104 = vadd.f32 %v4084, %v4103
  %4105 = vdwg.mxu0
  %v4107 = vsel %vm2818, %v3941, 0
  %4109 = vmatpush.msra.mxu0 %v334
  %4110 = vmatpush.msra.mxu0 %v333
  %4111 = vmatpush.msra.mxu0 %v332
  %4112 = vmatpush.msra.mxu0 %v331
  %4113 = vmatpush.msra.mxu0 %v330
  %4114 = vmatpush.msra.mxu0 %v329
  %4115 = vmatpush.msra.mxu0 %v328
  %4116 = vmatpush.msra.mxu0 %v327
  %4117 = vmatpush.msra.mxu0 %v326
  %4118 = vmatpush.msra.mxu0 %v325
  %4119 = vmatpush.msra.mxu0 %v324
  %4120 = vmatpush.msra.mxu0 %v323
  %4121 = vmatpush.msra.mxu0 %v322
  %4122 = vmatpush.msra.mxu0 %v321
  %4123 = vmatpush.msra.mxu0 %v320
  %4124 = vmatpush.msra.mxu0 %v319
  %4125 = vmatmul.f32.gmra.mxu0 %v3921
  %v4126 = vpop.f32.mrf.mxu0
  %v4127 = vadd.f32 %v4104, %v4126
  %4128 = vdwg.mxu0
  %4129 = vmatpush.msra.mxu0 0.0
  %4130 = vmatpush.msra.mxu0 0.0
  %4131 = vmatpush.msra.mxu0 0.0
  %4132 = vmatpush.msra.mxu0 0.0
  %4133 = vmatpush.msra.mxu0 0.0
  %4134 = vmatpush.msra.mxu0 0.0
  %4135 = vmatpush.msra.mxu0 0.0
  %4136 = vmatpush.msra.mxu0 0.0
  %4137 = vmatpush.msra.mxu0 0.0
  %4138 = vmatpush.msra.mxu0 %v3376
  %4139 = vmatpush.msra.mxu0 %v340
  %4140 = vmatpush.msra.mxu0 %v339
  %4141 = vmatpush.msra.mxu0 %v338
  %4142 = vmatpush.msra.mxu0 %v337
  %4143 = vmatpush.msra.mxu0 %v336
  %4144 = vmatpush.msra.mxu0 %v335
  %4145 = vmatmul.f32.gmra.mxu0 %v4107
  %v4146 = vpop.f32.mrf.mxu0
  %v4147 = vadd.f32 %v4127, %v4146
  %4148 = vdwg.mxu0
  %v4150 = vsel %vm2818, %v4021, 0
  %4152 = vmatpush.msra.mxu0 %v478
  %4153 = vmatpush.msra.mxu0 %v477
  %4154 = vmatpush.msra.mxu0 %v476
  %4155 = vmatpush.msra.mxu0 %v475
  %4156 = vmatpush.msra.mxu0 %v474
  %4157 = vmatpush.msra.mxu0 %v473
  %4158 = vmatpush.msra.mxu0 %v472
  %4159 = vmatpush.msra.mxu0 %v471
  %4160 = vmatpush.msra.mxu0 %v470
  %4161 = vmatpush.msra.mxu0 %v469
  %4162 = vmatpush.msra.mxu0 %v468
  %4163 = vmatpush.msra.mxu0 %v467
  %4164 = vmatpush.msra.mxu0 %v466
  %4165 = vmatpush.msra.mxu0 %v465
  %4166 = vmatpush.msra.mxu0 %v464
  %4167 = vmatpush.msra.mxu0 %v463
  %4168 = vmatmul.f32.gmra.mxu0 %v4001
  %v4169 = vpop.f32.mrf.mxu0
  %v4170 = vadd.f32 0.0, %v4169
  %4171 = vdwg.mxu0
  %4172 = vmatpush.msra.mxu0 0.0
  %4173 = vmatpush.msra.mxu0 0.0
  %4174 = vmatpush.msra.mxu0 0.0
  %4175 = vmatpush.msra.mxu0 0.0
  %4176 = vmatpush.msra.mxu0 0.0
  %4177 = vmatpush.msra.mxu0 0.0
  %4178 = vmatpush.msra.mxu0 0.0
  %4179 = vmatpush.msra.mxu0 0.0
  %4180 = vmatpush.msra.mxu0 0.0
  %4181 = vmatpush.msra.mxu0 %v3422
  %4182 = vmatpush.msra.mxu0 %v484
  %4183 = vmatpush.msra.mxu0 %v483
  %4184 = vmatpush.msra.mxu0 %v482
  %4185 = vmatpush.msra.mxu0 %v481
  %4186 = vmatpush.msra.mxu0 %v480
  %4187 = vmatpush.msra.mxu0 %v479
  %4188 = vmatmul.f32.gmra.mxu0 %v4150
  %v4189 = vpop.f32.mrf.mxu0
  %v4190 = vadd.f32 %v4170, %v4189
  %4191 = vdwg.mxu0
  %v4192 = vadd.f32 %v4147, %v4190
  %v4194 = vsel %vm2818, %v4061, 0
  %4196 = vmatpush.msra.mxu0 %v550
  %4197 = vmatpush.msra.mxu0 %v549
  %4198 = vmatpush.msra.mxu0 %v548
  %4199 = vmatpush.msra.mxu0 %v547
  %4200 = vmatpush.msra.mxu0 %v546
  %4201 = vmatpush.msra.mxu0 %v545
  %4202 = vmatpush.msra.mxu0 %v544
  %4203 = vmatpush.msra.mxu0 %v543
  %4204 = vmatpush.msra.mxu0 %v542
  %4205 = vmatpush.msra.mxu0 %v541
  %4206 = vmatpush.msra.mxu0 %v540
  %4207 = vmatpush.msra.mxu0 %v539
  %4208 = vmatpush.msra.mxu0 %v538
  %4209 = vmatpush.msra.mxu0 %v537
  %4210 = vmatpush.msra.mxu0 %v536
  %4211 = vmatpush.msra.mxu0 %v535
  %4212 = vmatmul.f32.gmra.mxu0 %v4041
  %v4213 = vpop.f32.mrf.mxu0
  %v4214 = vadd.f32 0.0, %v4213
  %4215 = vdwg.mxu0
  %4216 = vmatpush.msra.mxu0 0.0
  %4217 = vmatpush.msra.mxu0 0.0
  %4218 = vmatpush.msra.mxu0 0.0
  %4219 = vmatpush.msra.mxu0 0.0
  %4220 = vmatpush.msra.mxu0 0.0
  %4221 = vmatpush.msra.mxu0 0.0
  %4222 = vmatpush.msra.mxu0 0.0
  %4223 = vmatpush.msra.mxu0 0.0
  %4224 = vmatpush.msra.mxu0 0.0
  %4225 = vmatpush.msra.mxu0 %v3469
  %4226 = vmatpush.msra.mxu0 %v556
  %4227 = vmatpush.msra.mxu0 %v555
  %4228 = vmatpush.msra.mxu0 %v554
  %4229 = vmatpush.msra.mxu0 %v553
  %4230 = vmatpush.msra.mxu0 %v552
  %4231 = vmatpush.msra.mxu0 %v551
  %4232 = vmatmul.f32.gmra.mxu0 %v4194
  %v4233 = vpop.f32.mrf.mxu0
  %v4234 = vadd.f32 %v4214, %v4233
  %4235 = vdwg.mxu0
  %v4236 = vadd.f32 %v4192, %v4234
  %4237 = vmatpush.msra.mxu0 %v430
  %4238 = vmatpush.msra.mxu0 %v429
  %4239 = vmatpush.msra.mxu0 %v428
  %4240 = vmatpush.msra.mxu0 %v427
  %4241 = vmatpush.msra.mxu0 %v426
  %4242 = vmatpush.msra.mxu0 %v425
  %4243 = vmatpush.msra.mxu0 %v424
  %4244 = vmatpush.msra.mxu0 %v423
  %4245 = vmatpush.msra.mxu0 %v422
  %4246 = vmatpush.msra.mxu0 %v421
  %4247 = vmatpush.msra.mxu0 %v420
  %4248 = vmatpush.msra.mxu0 %v419
  %4249 = vmatpush.msra.mxu0 %v418
  %4250 = vmatpush.msra.mxu0 %v417
  %4251 = vmatpush.msra.mxu0 %v416
  %4252 = vmatpush.msra.mxu0 %v415
  %4253 = vmatmul.f32.gmra.mxu0 %v3961
  %v4254 = vpop.f32.mrf.mxu0
  %v4255 = vadd.f32 0.0, %v4254
  %4256 = vdwg.mxu0
  %4257 = vmatpush.msra.mxu0 0.0
  %4258 = vmatpush.msra.mxu0 0.0
  %4259 = vmatpush.msra.mxu0 0.0
  %4260 = vmatpush.msra.mxu0 0.0
  %4261 = vmatpush.msra.mxu0 0.0
  %4262 = vmatpush.msra.mxu0 0.0
  %4263 = vmatpush.msra.mxu0 0.0
  %4264 = vmatpush.msra.mxu0 0.0
  %4265 = vmatpush.msra.mxu0 0.0
  %4266 = vmatpush.msra.mxu0 %v3513
  %4267 = vmatpush.msra.mxu0 %v436
  %4268 = vmatpush.msra.mxu0 %v435
  %4269 = vmatpush.msra.mxu0 %v434
  %4270 = vmatpush.msra.mxu0 %v433
  %4271 = vmatpush.msra.mxu0 %v432
  %4272 = vmatpush.msra.mxu0 %v431
  %4273 = vmatmul.f32.gmra.mxu0 %v4064
  %v4274 = vpop.f32.mrf.mxu0
  %v4275 = vadd.f32 %v4255, %v4274
  %4276 = vdwg.mxu0
  %4277 = vmatpush.msra.mxu0 %v358
  %4278 = vmatpush.msra.mxu0 %v357
  %4279 = vmatpush.msra.mxu0 %v356
  %4280 = vmatpush.msra.mxu0 %v355
  %4281 = vmatpush.msra.mxu0 %v354
  %4282 = vmatpush.msra.mxu0 %v353
  %4283 = vmatpush.msra.mxu0 %v352
  %4284 = vmatpush.msra.mxu0 %v351
  %4285 = vmatpush.msra.mxu0 %v350
  %4286 = vmatpush.msra.mxu0 %v349
  %4287 = vmatpush.msra.mxu0 %v348
  %4288 = vmatpush.msra.mxu0 %v347
  %4289 = vmatpush.msra.mxu0 %v346
  %4290 = vmatpush.msra.mxu0 %v345
  %4291 = vmatpush.msra.mxu0 %v344
  %4292 = vmatpush.msra.mxu0 %v343
  %4293 = vmatmul.f32.gmra.mxu0 %v3921
  %v4294 = vpop.f32.mrf.mxu0
  %v4295 = vadd.f32 %v4275, %v4294
  %4296 = vdwg.mxu0
  %4297 = vmatpush.msra.mxu0 0.0
  %4298 = vmatpush.msra.mxu0 0.0
  %4299 = vmatpush.msra.mxu0 0.0
  %4300 = vmatpush.msra.mxu0 0.0
  %4301 = vmatpush.msra.mxu0 0.0
  %4302 = vmatpush.msra.mxu0 0.0
  %4303 = vmatpush.msra.mxu0 0.0
  %4304 = vmatpush.msra.mxu0 0.0
  %4305 = vmatpush.msra.mxu0 0.0
  %4306 = vmatpush.msra.mxu0 %v3556
  %4307 = vmatpush.msra.mxu0 %v364
  %4308 = vmatpush.msra.mxu0 %v363
  %4309 = vmatpush.msra.mxu0 %v362
  %4310 = vmatpush.msra.mxu0 %v361
  %4311 = vmatpush.msra.mxu0 %v360
  %4312 = vmatpush.msra.mxu0 %v359
  %4313 = vmatmul.f32.gmra.mxu0 %v4107
  %v4314 = vpop.f32.mrf.mxu0
  %v4315 = vadd.f32 %v4295, %v4314
  %4316 = vdwg.mxu0
  %4317 = vmatpush.msra.mxu0 %v502
  %4318 = vmatpush.msra.mxu0 %v501
  %4319 = vmatpush.msra.mxu0 %v500
  %4320 = vmatpush.msra.mxu0 %v499
  %4321 = vmatpush.msra.mxu0 %v498
  %4322 = vmatpush.msra.mxu0 %v497
  %4323 = vmatpush.msra.mxu0 %v496
  %4324 = vmatpush.msra.mxu0 %v495
  %4325 = vmatpush.msra.mxu0 %v494
  %4326 = vmatpush.msra.mxu0 %v493
  %4327 = vmatpush.msra.mxu0 %v492
  %4328 = vmatpush.msra.mxu0 %v491
  %4329 = vmatpush.msra.mxu0 %v490
  %4330 = vmatpush.msra.mxu0 %v489
  %4331 = vmatpush.msra.mxu0 %v488
  %4332 = vmatpush.msra.mxu0 %v487
  %4333 = vmatmul.f32.gmra.mxu0 %v4001
  %v4334 = vpop.f32.mrf.mxu0
  %v4335 = vadd.f32 0.0, %v4334
  %4336 = vdwg.mxu0
  %4337 = vmatpush.msra.mxu0 0.0
  %4338 = vmatpush.msra.mxu0 0.0
  %4339 = vmatpush.msra.mxu0 0.0
  %4340 = vmatpush.msra.mxu0 0.0
  %4341 = vmatpush.msra.mxu0 0.0
  %4342 = vmatpush.msra.mxu0 0.0
  %4343 = vmatpush.msra.mxu0 0.0
  %4344 = vmatpush.msra.mxu0 0.0
  %4345 = vmatpush.msra.mxu0 0.0
  %4346 = vmatpush.msra.mxu0 %v3599
  %4347 = vmatpush.msra.mxu0 %v508
  %4348 = vmatpush.msra.mxu0 %v507
  %4349 = vmatpush.msra.mxu0 %v506
  %4350 = vmatpush.msra.mxu0 %v505
  %4351 = vmatpush.msra.mxu0 %v504
  %4352 = vmatpush.msra.mxu0 %v503
  %4353 = vmatmul.f32.gmra.mxu0 %v4150
  %v4354 = vpop.f32.mrf.mxu0
  %v4355 = vadd.f32 %v4335, %v4354
  %4356 = vdwg.mxu0
  %v4357 = vadd.f32 %v4315, %v4355
  %4358 = vmatpush.msra.mxu0 %v574
  %4359 = vmatpush.msra.mxu0 %v573
  %4360 = vmatpush.msra.mxu0 %v572
  %4361 = vmatpush.msra.mxu0 %v571
  %4362 = vmatpush.msra.mxu0 %v570
  %4363 = vmatpush.msra.mxu0 %v569
  %4364 = vmatpush.msra.mxu0 %v568
  %4365 = vmatpush.msra.mxu0 %v567
  %4366 = vmatpush.msra.mxu0 %v566
  %4367 = vmatpush.msra.mxu0 %v565
  %4368 = vmatpush.msra.mxu0 %v564
  %4369 = vmatpush.msra.mxu0 %v563
  %4370 = vmatpush.msra.mxu0 %v562
  %4371 = vmatpush.msra.mxu0 %v561
  %4372 = vmatpush.msra.mxu0 %v560
  %4373 = vmatpush.msra.mxu0 %v559
  %4374 = vmatmul.f32.gmra.mxu0 %v4041
  %v4375 = vpop.f32.mrf.mxu0
  %v4376 = vadd.f32 0.0, %v4375
  %4377 = vdwg.mxu0
  %4378 = vmatpush.msra.mxu0 0.0
  %4379 = vmatpush.msra.mxu0 0.0
  %4380 = vmatpush.msra.mxu0 0.0
  %4381 = vmatpush.msra.mxu0 0.0
  %4382 = vmatpush.msra.mxu0 0.0
  %4383 = vmatpush.msra.mxu0 0.0
  %4384 = vmatpush.msra.mxu0 0.0
  %4385 = vmatpush.msra.mxu0 0.0
  %4386 = vmatpush.msra.mxu0 0.0
  %4387 = vmatpush.msra.mxu0 %v3643
  %4388 = vmatpush.msra.mxu0 %v580
  %4389 = vmatpush.msra.mxu0 %v579
  %4390 = vmatpush.msra.mxu0 %v578
  %4391 = vmatpush.msra.mxu0 %v577
  %4392 = vmatpush.msra.mxu0 %v576
  %4393 = vmatpush.msra.mxu0 %v575
  %4394 = vmatmul.f32.gmra.mxu0 %v4194
  %v4395 = vpop.f32.mrf.mxu0
  %v4396 = vadd.f32 %v4376, %v4395
  %4397 = vdwg.mxu0
  %v4398 = vadd.f32 %v4357, %v4396
  %v4399 = vmax.f32 %v4236, %v4398
  %4400 = vmatpush.msra.mxu0 %v454
  %4401 = vmatpush.msra.mxu0 %v453
  %4402 = vmatpush.msra.mxu0 %v452
  %4403 = vmatpush.msra.mxu0 %v451
  %4404 = vmatpush.msra.mxu0 %v450
  %4405 = vmatpush.msra.mxu0 %v449
  %4406 = vmatpush.msra.mxu0 %v448
  %4407 = vmatpush.msra.mxu0 %v447
  %4408 = vmatpush.msra.mxu0 %v446
  %4409 = vmatpush.msra.mxu0 %v445
  %4410 = vmatpush.msra.mxu0 %v444
  %4411 = vmatpush.msra.mxu0 %v443
  %4412 = vmatpush.msra.mxu0 %v442
  %4413 = vmatpush.msra.mxu0 %v441
  %4414 = vmatpush.msra.mxu0 %v440
  %4415 = vmatpush.msra.mxu0 %v439
  %4416 = vmatmul.f32.gmra.mxu0 %v3961
  %v4417 = vpop.f32.mrf.mxu0
  %v4418 = vadd.f32 0.0, %v4417
  %4419 = vdwg.mxu0
  %4420 = vmatpush.msra.mxu0 0.0
  %4421 = vmatpush.msra.mxu0 0.0
  %4422 = vmatpush.msra.mxu0 0.0
  %4423 = vmatpush.msra.mxu0 0.0
  %4424 = vmatpush.msra.mxu0 0.0
  %4425 = vmatpush.msra.mxu0 0.0
  %4426 = vmatpush.msra.mxu0 0.0
  %4427 = vmatpush.msra.mxu0 0.0
  %4428 = vmatpush.msra.mxu0 0.0
  %4429 = vmatpush.msra.mxu0 %v3688
  %4430 = vmatpush.msra.mxu0 %v460
  %4431 = vmatpush.msra.mxu0 %v459
  %4432 = vmatpush.msra.mxu0 %v458
  %4433 = vmatpush.msra.mxu0 %v457
  %4434 = vmatpush.msra.mxu0 %v456
  %4435 = vmatpush.msra.mxu0 %v455
  %4436 = vmatmul.f32.gmra.mxu0 %v4064
  %v4437 = vpop.f32.mrf.mxu0
  %v4438 = vadd.f32 %v4418, %v4437
  %4439 = vdwg.mxu0
  %4440 = vmatpush.msra.mxu0 %v382
  %4441 = vmatpush.msra.mxu0 %v381
  %4442 = vmatpush.msra.mxu0 %v380
  %4443 = vmatpush.msra.mxu0 %v379
  %4444 = vmatpush.msra.mxu0 %v378
  %4445 = vmatpush.msra.mxu0 %v377
  %4446 = vmatpush.msra.mxu0 %v376
  %4447 = vmatpush.msra.mxu0 %v375
  %4448 = vmatpush.msra.mxu0 %v374
  %4449 = vmatpush.msra.mxu0 %v373
  %4450 = vmatpush.msra.mxu0 %v372
  %4451 = vmatpush.msra.mxu0 %v371
  %4452 = vmatpush.msra.mxu0 %v370
  %4453 = vmatpush.msra.mxu0 %v369
  %4454 = vmatpush.msra.mxu0 %v368
  %4455 = vmatpush.msra.mxu0 %v367
  %4456 = vmatmul.f32.gmra.mxu0 %v3921
  %v4457 = vpop.f32.mrf.mxu0
  %v4458 = vadd.f32 %v4438, %v4457
  %4459 = vdwg.mxu0
  %4460 = vmatpush.msra.mxu0 0.0
  %4461 = vmatpush.msra.mxu0 0.0
  %4462 = vmatpush.msra.mxu0 0.0
  %4463 = vmatpush.msra.mxu0 0.0
  %4464 = vmatpush.msra.mxu0 0.0
  %4465 = vmatpush.msra.mxu0 0.0
  %4466 = vmatpush.msra.mxu0 0.0
  %4467 = vmatpush.msra.mxu0 0.0
  %4468 = vmatpush.msra.mxu0 0.0
  %4469 = vmatpush.msra.mxu0 %v3731
  %4470 = vmatpush.msra.mxu0 %v388
  %4471 = vmatpush.msra.mxu0 %v387
  %4472 = vmatpush.msra.mxu0 %v386
  %4473 = vmatpush.msra.mxu0 %v385
  %4474 = vmatpush.msra.mxu0 %v384
  %4475 = vmatpush.msra.mxu0 %v383
  %4476 = vmatmul.f32.gmra.mxu0 %v4107
  %v4477 = vpop.f32.mrf.mxu0
  %v4478 = vadd.f32 %v4458, %v4477
  %4479 = vdwg.mxu0
  %4480 = vmatpush.msra.mxu0 %v526
  %4481 = vmatpush.msra.mxu0 %v525
  %4482 = vmatpush.msra.mxu0 %v524
  %4483 = vmatpush.msra.mxu0 %v523
  %4484 = vmatpush.msra.mxu0 %v522
  %4485 = vmatpush.msra.mxu0 %v521
  %4486 = vmatpush.msra.mxu0 %v520
  %4487 = vmatpush.msra.mxu0 %v519
  %4488 = vmatpush.msra.mxu0 %v518
  %4489 = vmatpush.msra.mxu0 %v517
  %4490 = vmatpush.msra.mxu0 %v516
  %4491 = vmatpush.msra.mxu0 %v515
  %4492 = vmatpush.msra.mxu0 %v514
  %4493 = vmatpush.msra.mxu0 %v513
  %4494 = vmatpush.msra.mxu0 %v512
  %4495 = vmatpush.msra.mxu0 %v511
  %4496 = vmatmul.f32.gmra.mxu0 %v4001
  %v4497 = vpop.f32.mrf.mxu0
  %v4498 = vadd.f32 0.0, %v4497
  %4499 = vdwg.mxu0
  %4500 = vmatpush.msra.mxu0 0.0
  %4501 = vmatpush.msra.mxu0 0.0
  %4502 = vmatpush.msra.mxu0 0.0
  %4503 = vmatpush.msra.mxu0 0.0
  %4504 = vmatpush.msra.mxu0 0.0
  %4505 = vmatpush.msra.mxu0 0.0
  %4506 = vmatpush.msra.mxu0 0.0
  %4507 = vmatpush.msra.mxu0 0.0
  %4508 = vmatpush.msra.mxu0 0.0
  %4509 = vmatpush.msra.mxu0 %v3774
  %4510 = vmatpush.msra.mxu0 %v532
  %4511 = vmatpush.msra.mxu0 %v531
  %4512 = vmatpush.msra.mxu0 %v530
  %4513 = vmatpush.msra.mxu0 %v529
  %4514 = vmatpush.msra.mxu0 %v528
  %4515 = vmatpush.msra.mxu0 %v527
  %4516 = vmatmul.f32.gmra.mxu0 %v4150
  %v4517 = vpop.f32.mrf.mxu0
  %v4518 = vadd.f32 %v4498, %v4517
  %4519 = vdwg.mxu0
  %v4520 = vadd.f32 %v4478, %v4518
  %4521 = vmatpush.msra.mxu0 %v598
  %4522 = vmatpush.msra.mxu0 %v597
  %4523 = vmatpush.msra.mxu0 %v596
  %4524 = vmatpush.msra.mxu0 %v595
  %4525 = vmatpush.msra.mxu0 %v594
  %4526 = vmatpush.msra.mxu0 %v593
  %4527 = vmatpush.msra.mxu0 %v592
  %4528 = vmatpush.msra.mxu0 %v591
  %4529 = vmatpush.msra.mxu0 %v590
  %4530 = vmatpush.msra.mxu0 %v589
  %4531 = vmatpush.msra.mxu0 %v588
  %4532 = vmatpush.msra.mxu0 %v587
  %4533 = vmatpush.msra.mxu0 %v586
  %4534 = vmatpush.msra.mxu0 %v585
  %4535 = vmatpush.msra.mxu0 %v584
  %4536 = vmatpush.msra.mxu0 %v583
  %4537 = vmatmul.f32.gmra.mxu0 %v4041
  %v4538 = vpop.f32.mrf.mxu0
  %v4539 = vadd.f32 0.0, %v4538
  %4540 = vdwg.mxu0
  %4541 = vmatpush.msra.mxu0 0.0
  %4542 = vmatpush.msra.mxu0 0.0
  %4543 = vmatpush.msra.mxu0 0.0
  %4544 = vmatpush.msra.mxu0 0.0
  %4545 = vmatpush.msra.mxu0 0.0
  %4546 = vmatpush.msra.mxu0 0.0
  %4547 = vmatpush.msra.mxu0 0.0
  %4548 = vmatpush.msra.mxu0 0.0
  %4549 = vmatpush.msra.mxu0 0.0
  %4550 = vmatpush.msra.mxu0 %v3818
  %4551 = vmatpush.msra.mxu0 %v604
  %4552 = vmatpush.msra.mxu0 %v603
  %4553 = vmatpush.msra.mxu0 %v602
  %4554 = vmatpush.msra.mxu0 %v601
  %4555 = vmatpush.msra.mxu0 %v600
  %4556 = vmatpush.msra.mxu0 %v599
  %4557 = vmatmul.f32.gmra.mxu0 %v4194
  %v4558 = vpop.f32.mrf.mxu0
  %v4559 = vadd.f32 %v4539, %v4558
  %4560 = vdwg.mxu0
  %v4561 = vadd.f32 %v4520, %v4559
  %v4562 = vmax.f32 %v4399, %v4561
  %v4563 = vsel %vm3862, %v4562, -inf
  %v4564 = vrot.slane %v4563, 4
  %v4565 = vmax.f32 %v4563, %v4564
  %v4566 = vrot.slane %v4565, 2
  %v4567 = vmax.f32 %v4565, %v4566
  %v4568 = vrot.slane %v4567, 1
  %v4569 = vmax.f32 %v4567, %v4568
  %v4571 = vsel %vm1594, %v4569, 0
  %4573 = vmatpush.msra.mxu0 0.0
  %4574 = vmatpush.msra.mxu0 0.0
  %4575 = vmatpush.msra.mxu0 0.0
  %4576 = vmatpush.msra.mxu0 0.0
  %4577 = vmatpush.msra.mxu0 0.0
  %4578 = vmatpush.msra.mxu0 0.0
  %4579 = vmatpush.msra.mxu0 0.0
  %4580 = vmatpush.msra.mxu0 0.0
  %4581 = vmatpush.msra.mxu0 0.0
  %4582 = vmatpush.msra.mxu0 0.0
  %4583 = vmatpush.msra.mxu0 0.0
  %4584 = vmatpush.msra.mxu0 0.0
  %4585 = vmatpush.msra.mxu0 0.0
  %4586 = vmatpush.msra.mxu0 %v3874
  %4587 = vmatpush.msra.mxu0 %v671
  %4588 = vmatpush.msra.mxu0 %v670
  %4589 = vmatmul.f32.gmra.mxu0 %v4571
  %v4590 = vpop.f32.mrf.mxu0
  %v4591 = vadd.f32 %v673, %v4590
  %4592 = vdwg.mxu0
  %4593 = vst [vmem:[%s17 + $0x1] sm:$0x1] %v4591
  // Predicated region
  $region70: #{upps_net_forward.1} parent=0 // pred_check
    _
  $region71: #{upps_net_forward.1} parent=0 // pred_check_branch
    %4595 = sbr.rel (0) target = $region73
  $region72: #{upps_net_forward.1} parent=0 // pred_region
    _
  $region73: #{upps_net_forward.1} parent=0 // pred_fallthru
    _
  // Predicated region
  $region74: #{upps_net_forward.1} parent=0 // pred_check
    _
  $region75: #{upps_net_forward.1} parent=0 // pred_check_branch
    %4597 = sbr.rel (0) target = $region77
  $region76: #{upps_net_forward.1} parent=0 // pred_region
    _
  $region77: #{upps_net_forward.1} parent=0 // pred_fallthru
    _

</llo_original>
